<compile_context>
chip_gen: v6e
topology: v6e:2x2x1
jax: 0.10.0
libtpu: 0.0.40
codegen_flags: <defaults>
</compile_context>

<pallas_src>
from functools import partial

import jax
import jax.numpy as jnp
from jax import lax
from jax.experimental import pallas as pl
from jax.experimental.pallas import tpu as pltpu


def _gat_fused_kernel(adj_ref, x_ref, *refs, layer_dims):
    """Fused multi-layer GAT forward (single invocation, no grid).

    refs = (w0, wl_t0, wr0, b0, ..., out_ref, rst_scratch)
      w_l    : (F_in, H*F_out) bf16  per-head projections stacked along lanes
      wl_t_l : (H, F_in)       bf16  (W_h @ attn_l_h) stacked as rows (source)
      wr_l   : (F_in, H)       bf16  (W_h @ attn_r_h) stacked as lanes (dest)
      b_l    : (1, H*F_out)    f32   per-head bias stacked along lanes
    """
    rst_ref = refs[-1]          # (N, max_hidden) f32 VMEM scratch slab
    out_ref = refs[-2]
    param_refs = refs[:-2]

    N = adj_ref.shape[0]
    n_layers = len(layer_dims)

    # Additive edge mask, computed ONCE and kept in f32 (never cast to bf16):
    # 0.0 on edges, -1e30 off-edge.  exp(e - e_max) underflows to exactly 0.
    neg_bias = (adj_ref[...].astype(jnp.float32) - 1.0) * 1e30          # (N, N)
    ones_col = jnp.ones((N, 1), jnp.bfloat16)                           # MXU denom RHS

    h = x_ref[...].astype(jnp.bfloat16)                                  # (N, F_in)

    for l, (H, f_out) in enumerate(layer_dims):
        w_ref, wlt_ref, wr_ref, b_ref = param_refs[4 * l: 4 * l + 4]
        is_last = l == n_layers - 1

        # All-head projection in one MXU pass with a 128-lane RHS; kept bf16 for
        # the per-head aggregation matmuls.
        z = jnp.dot(h, w_ref[...],
                    preferred_element_type=jnp.float32).astype(jnp.bfloat16)   # (N, H*F_out)
        # Destination scores (N, H); source scores produced already transposed
        # (H, N) straight off the MXU (A @ B^T) -> no per-head XLU transpose.
        er_all = jnp.dot(h, wr_ref[...], preferred_element_type=jnp.float32)   # (N, H)
        el_t = lax.dot_general(wlt_ref[...], h, (((1,), (1,)), ((), ())),
                               preferred_element_type=jnp.float32)             # (H, N)

        acc = None
        for hh in range(H):
            z_h = z[:, hh * f_out:(hh + 1) * f_out]          # (N, F_out) bf16
            er = er_all[:, hh:hh + 1]                        # (N, 1)  dst score
            el_row = el_t[hh:hh + 1, :]                      # (1, N)  src score
            # e[v, u] = leaky_relu(er[v] + el[u], 0.2) + (-1e30 if no edge u->v)
            e = er + el_row                                  # (N, N) f32
            e = jnp.maximum(e, 0.2 * e) + neg_bias
            e_max = jnp.max(e, axis=1, keepdims=True)
            p = jnp.exp(e - e_max).astype(jnp.bfloat16)      # masked entries -> 0
            # Softmax denominator on the MXU; normalization deferred to the
            # (N, F_out) aggregation result instead of the (N, N) prob matrix.
            denom = jnp.dot(p, ones_col, preferred_element_type=jnp.float32)   # (N, 1)
            inv = pl.reciprocal(denom, approx=True)          # self-loops => denom >= ~1
            head_out = jnp.dot(p, z_h, preferred_element_type=jnp.float32) * inv

            if is_last:
                # last layer: mean over heads of (head_out + per-head bias)
                head_out = head_out + b_ref[:, hh * f_out:(hh + 1) * f_out]
                acc = head_out if acc is None else acc + head_out
            else:
                # write the head's lane slice of the rst slab (bounds live state)
                rst_ref[:, hh * f_out:(hh + 1) * f_out] = head_out

        if is_last:
            out_ref[...] = acc * (1.0 / H)
        else:
            # concat-heads is already lane-dense in the slab; + bias, ELU
            rst = rst_ref[:, :H * f_out] + b_ref[...]
            h = jnp.where(rst > 0.0, rst,
                          jnp.exp(jnp.minimum(rst, 0.0)) - 1.0).astype(jnp.bfloat16)


def prepare_gat_params(raw_params):
    """Fuse per-head weights into lane-dense bf16 kernel operands (runs once)."""
    flat = []
    layer_dims = []
    for p in raw_params:
        w = p["w"]                                   # (H, F_in, F_out)
        H, F_in, F_out = w.shape
        al = p["attn_l"][:, 0, :]                    # (H, F_out)
        ar = p["attn_r"][:, 0, :]                    # (H, F_out)
        b = p["bias"]                                # (H, 1, F_out)
        w_fused = jnp.transpose(w, (1, 0, 2)).reshape(F_in, H * F_out)
        wl_t = jnp.einsum("hif,hf->hi", w, al)       # (H, F_in)  W_h @ a_l_h
        wr = jnp.einsum("hif,hf->ih", w, ar)         # (F_in, H)  W_h @ a_r_h
        b_fused = b.reshape(1, H * F_out)
        flat += [w_fused.astype(jnp.bfloat16),
                 wl_t.astype(jnp.bfloat16),
                 wr.astype(jnp.bfloat16),
                 b_fused.astype(jnp.float32)]
        layer_dims.append((H, F_out))
    return flat, tuple(layer_dims)


def gat_forward(adj_bf16, x, flat, layer_dims):
    """Mirrors GAT.forward: flatten heads on all but the last layer, mean on last."""
    N = x.shape[0]
    out_size = layer_dims[-1][1]
    hidden_widths = [H * f for (H, f) in layer_dims[:-1]] or [out_size]
    max_hidden = max(hidden_widths)
    n_in = 2 + len(flat)
    kernel = partial(_gat_fused_kernel, layer_dims=layer_dims)

    return pl.pallas_call(
        kernel,
        out_shape=jax.ShapeDtypeStruct((N, out_size), jnp.float32),
        in_specs=[pl.BlockSpec(memory_space=pltpu.MemorySpace.VMEM)] * n_in,
        out_specs=pl.BlockSpec(memory_space=pltpu.MemorySpace.VMEM),
        scratch_shapes=[pltpu.VMEM((N, max_hidden), jnp.float32)],
    )(adj_bf16, x, *flat)


def init_gat_params(key, num_layers, in_size, hid_size, out_size, heads):
    params = []
    f_in = in_size
    for l in range(num_layers):
        H = heads[l]
        f_out = hid_size if l < num_layers - 1 else out_size
        key, k1, k2, k3, k4 = jax.random.split(key, 5)
        params.append(dict(
            w=jax.random.normal(k1, (H, f_in, f_out), jnp.float32) * 0.1,
            attn_l=jax.random.normal(k2, (H, 1, f_out), jnp.float32) * 0.1,
            attn_r=jax.random.normal(k3, (H, 1, f_out), jnp.float32) * 0.1,
            bias=jax.random.normal(k4, (H, 1, f_out), jnp.float32) * 0.1,
        ))
        f_in = f_out * H
    return params


if __name__ == "__main__":
    num_layers = 3
    in_size, hid_size, out_size = 16, 32, 8
    heads = [4, 4, 2]
    N = 32  # number of graph nodes

    key = jax.random.PRNGKey(0)
    key, kx, ka = jax.random.split(key, 3)
    x = jax.random.normal(kx, (N, in_size), jnp.float32)

    # deterministic random sparse graph + self-loops; adj[dst, src].
    # Stored persistently in bf16 (0/1 exact) so the forward never re-casts the
    # O(N^2) adjacency.
    adj = (jax.random.uniform(ka, (N, N)) < 0.2).astype(jnp.float32)
    adj = jnp.maximum(adj, jnp.eye(N, dtype=jnp.float32)).astype(jnp.bfloat16)

    raw_params = init_gat_params(key, num_layers, in_size, hid_size, out_size, heads)
    flat_params, layer_dims = prepare_gat_params(raw_params)   # runs once

    out = gat_forward(adj, x, flat_params, layer_dims)
    out = jax.block_until_ready(out)
    assert out.shape == (N, out_size), out.shape
    print("KERNEL_OK")
</pallas_src>

<mosaic_0001>
module attributes {stable_mosaic.version = 11 : i64} {
  func.func @_gat_fused_kernel(%arg0: memref<32x32xbf16, #tpu.memory_space<vmem>>, %arg1: memref<32x16xf32, #tpu.memory_space<vmem>>, %arg2: memref<16x128xbf16, #tpu.memory_space<vmem>>, %arg3: memref<4x16xbf16, #tpu.memory_space<vmem>>, %arg4: memref<16x4xbf16, #tpu.memory_space<vmem>>, %arg5: memref<1x128xf32, #tpu.memory_space<vmem>>, %arg6: memref<128x128xbf16, #tpu.memory_space<vmem>>, %arg7: memref<4x128xbf16, #tpu.memory_space<vmem>>, %arg8: memref<128x4xbf16, #tpu.memory_space<vmem>>, %arg9: memref<1x128xf32, #tpu.memory_space<vmem>>, %arg10: memref<128x16xbf16, #tpu.memory_space<vmem>>, %arg11: memref<2x128xbf16, #tpu.memory_space<vmem>>, %arg12: memref<128x2xbf16, #tpu.memory_space<vmem>>, %arg13: memref<1x16xf32, #tpu.memory_space<vmem>>, %arg14: memref<32x8xf32, #tpu.memory_space<vmem>>, %arg15: memref<32x128xf32, #tpu.memory_space<vmem>>) attributes {dimension_semantics = [], scalar_prefetch = 0 : i64, scratch_operands = 1 : i64, tpu.core_type = #tpu.core_type<tc>} {
    %c0 = arith.constant 0 : index
    %c0_0 = arith.constant 0 : index
    %0 = vector.load %arg0[%c0, %c0_0] : memref<32x32xbf16, #tpu.memory_space<vmem>>, vector<32x32xbf16>
    %1 = arith.extf %0 : vector<32x32xbf16> to vector<32x32xf32>
    %cst = arith.constant 1.000000e+00 : f32
    %2 = vector.broadcast %cst : f32 to vector<32x32xf32>
    %3 = arith.subf %1, %2 : vector<32x32xf32>
    %cst_1 = arith.constant 1.000000e+30 : f32
    %4 = vector.broadcast %cst_1 : f32 to vector<32x32xf32>
    %5 = arith.mulf %3, %4 : vector<32x32xf32>
    %cst_2 = arith.constant 1.000000e+00 : bf16
    %6 = vector.broadcast %cst_2 : bf16 to vector<32x1xbf16>
    %c0_3 = arith.constant 0 : index
    %c0_4 = arith.constant 0 : index
    %7 = vector.load %arg1[%c0_3, %c0_4] : memref<32x16xf32, #tpu.memory_space<vmem>>, vector<32x16xf32>
    %8 = arith.truncf %7 : vector<32x16xf32> to vector<32x16xbf16>
    %c0_5 = arith.constant 0 : index
    %c0_6 = arith.constant 0 : index
    %9 = vector.load %arg2[%c0_5, %c0_6] : memref<16x128xbf16, #tpu.memory_space<vmem>>, vector<16x128xbf16>
    %cst_7 = arith.constant dense<0.000000e+00> : vector<32x128xf32>
    %10 = tpu.matmul %8, %9, %cst_7 {dimension_numbers = #tpu.dot_dimension_numbers<[1], [0], [0], [1], [0, 0, 1, 1], [], []>} : vector<32x16xbf16>, vector<16x128xbf16>, vector<32x128xf32> -> vector<32x128xf32>
    %11 = arith.truncf %10 : vector<32x128xf32> to vector<32x128xbf16>
    %c0_8 = arith.constant 0 : index
    %c0_9 = arith.constant 0 : index
    %12 = vector.load %arg4[%c0_8, %c0_9] : memref<16x4xbf16, #tpu.memory_space<vmem>>, vector<16x4xbf16>
    %cst_10 = arith.constant dense<0.000000e+00> : vector<32x4xf32>
    %13 = tpu.matmul %8, %12, %cst_10 {dimension_numbers = #tpu.dot_dimension_numbers<[1], [0], [0], [1], [0, 0, 1, 1], [], []>} : vector<32x16xbf16>, vector<16x4xbf16>, vector<32x4xf32> -> vector<32x4xf32>
    %c0_11 = arith.constant 0 : index
    %c0_12 = arith.constant 0 : index
    %14 = vector.load %arg3[%c0_11, %c0_12] : memref<4x16xbf16, #tpu.memory_space<vmem>>, vector<4x16xbf16>
    %cst_13 = arith.constant dense<0.000000e+00> : vector<4x32xf32>
    %15 = tpu.matmul %14, %8, %cst_13 {dimension_numbers = #tpu.dot_dimension_numbers<[1], [1], [0], [0], [0, 0, 1, 0], [], []>} : vector<4x16xbf16>, vector<32x16xbf16>, vector<4x32xf32> -> vector<4x32xf32>
    %16 = vector.extract_strided_slice %11 {offsets = [0, 0], sizes = [32, 32], strides = [1, 1]} : vector<32x128xbf16> to vector<32x32xbf16>
    %17 = vector.extract_strided_slice %13 {offsets = [0, 0], sizes = [32, 1], strides = [1, 1]} : vector<32x4xf32> to vector<32x1xf32>
    %18 = vector.extract_strided_slice %15 {offsets = [0, 0], sizes = [1, 32], strides = [1, 1]} : vector<4x32xf32> to vector<1x32xf32>
    %19 = vector.broadcast %17 : vector<32x1xf32> to vector<32x32xf32>
    %20 = vector.broadcast %18 : vector<1x32xf32> to vector<32x32xf32>
    %21 = arith.addf %19, %20 : vector<32x32xf32>
    %cst_14 = arith.constant 2.000000e-01 : f32
    %22 = vector.broadcast %cst_14 : f32 to vector<32x32xf32>
    %23 = arith.mulf %22, %21 : vector<32x32xf32>
    %24 = arith.maximumf %21, %23 : vector<32x32xf32>
    %25 = arith.addf %24, %5 : vector<32x32xf32>
    %cst_15 = arith.constant dense<0xFF800000> : vector<32xf32>
    %26 = vector.multi_reduction <maximumf>, %25, %cst_15 [1] : vector<32x32xf32> to vector<32xf32>
    %27 = vector.shape_cast %26 : vector<32xf32> to vector<32x1xf32>
    %28 = vector.broadcast %27 : vector<32x1xf32> to vector<32x32xf32>
    %29 = arith.subf %25, %28 : vector<32x32xf32>
    %30 = math.exp %29 : vector<32x32xf32>
    %31 = arith.truncf %30 : vector<32x32xf32> to vector<32x32xbf16>
    %cst_16 = arith.constant dense<0.000000e+00> : vector<32x1xf32>
    %32 = tpu.matmul %31, %6, %cst_16 {dimension_numbers = #tpu.dot_dimension_numbers<[1], [0], [0], [1], [0, 0, 1, 1], [], []>} : vector<32x32xbf16>, vector<32x1xbf16>, vector<32x1xf32> -> vector<32x1xf32>
    %33 = tpu.reciprocal %32 {approx = true} : vector<32x1xf32> -> vector<32x1xf32>
    %cst_17 = arith.constant dense<0.000000e+00> : vector<32x32xf32>
    %34 = tpu.matmul %31, %16, %cst_17 {dimension_numbers = #tpu.dot_dimension_numbers<[1], [0], [0], [1], [0, 0, 1, 1], [], []>} : vector<32x32xbf16>, vector<32x32xbf16>, vector<32x32xf32> -> vector<32x32xf32>
    %35 = vector.broadcast %33 : vector<32x1xf32> to vector<32x32xf32>
    %36 = arith.mulf %34, %35 : vector<32x32xf32>
    %c0_18 = arith.constant 0 : index
    %c0_19 = arith.constant 0 : index
    %37 = vector.load %arg15[%c0_18, %c0_19] : memref<32x128xf32, #tpu.memory_space<vmem>>, vector<32x32xf32>
    tpu.vector_store %arg15[%c0_18, %c0_19], %36 {strides = array<i32>} : memref<32x128xf32, #tpu.memory_space<vmem>>, vector<32x32xf32>,
    %38 = vector.extract_strided_slice %11 {offsets = [0, 32], sizes = [32, 32], strides = [1, 1]} : vector<32x128xbf16> to vector<32x32xbf16>
    %39 = vector.extract_strided_slice %13 {offsets = [0, 1], sizes = [32, 1], strides = [1, 1]} : vector<32x4xf32> to vector<32x1xf32>
    %40 = vector.extract_strided_slice %15 {offsets = [1, 0], sizes = [1, 32], strides = [1, 1]} : vector<4x32xf32> to vector<1x32xf32>
    %41 = vector.broadcast %39 : vector<32x1xf32> to vector<32x32xf32>
    %42 = vector.broadcast %40 : vector<1x32xf32> to vector<32x32xf32>
    %43 = arith.addf %41, %42 : vector<32x32xf32>
    %cst_20 = arith.constant 2.000000e-01 : f32
    %44 = vector.broadcast %cst_20 : f32 to vector<32x32xf32>
    %45 = arith.mulf %44, %43 : vector<32x32xf32>
    %46 = arith.maximumf %43, %45 : vector<32x32xf32>
    %47 = arith.addf %46, %5 : vector<32x32xf32>
    %cst_21 = arith.constant dense<0xFF800000> : vector<32xf32>
    %48 = vector.multi_reduction <maximumf>, %47, %cst_21 [1] : vector<32x32xf32> to vector<32xf32>
    %49 = vector.shape_cast %48 : vector<32xf32> to vector<32x1xf32>
    %50 = vector.broadcast %49 : vector<32x1xf32> to vector<32x32xf32>
    %51 = arith.subf %47, %50 : vector<32x32xf32>
    %52 = math.exp %51 : vector<32x32xf32>
    %53 = arith.truncf %52 : vector<32x32xf32> to vector<32x32xbf16>
    %cst_22 = arith.constant dense<0.000000e+00> : vector<32x1xf32>
    %54 = tpu.matmul %53, %6, %cst_22 {dimension_numbers = #tpu.dot_dimension_numbers<[1], [0], [0], [1], [0, 0, 1, 1], [], []>} : vector<32x32xbf16>, vector<32x1xbf16>, vector<32x1xf32> -> vector<32x1xf32>
    %55 = tpu.reciprocal %54 {approx = true} : vector<32x1xf32> -> vector<32x1xf32>
    %cst_23 = arith.constant dense<0.000000e+00> : vector<32x32xf32>
    %56 = tpu.matmul %53, %38, %cst_23 {dimension_numbers = #tpu.dot_dimension_numbers<[1], [0], [0], [1], [0, 0, 1, 1], [], []>} : vector<32x32xbf16>, vector<32x32xbf16>, vector<32x32xf32> -> vector<32x32xf32>
    %57 = vector.broadcast %55 : vector<32x1xf32> to vector<32x32xf32>
    %58 = arith.mulf %56, %57 : vector<32x32xf32>
    %c0_24 = arith.constant 0 : index
    %c32 = arith.constant 32 : index
    %59 = vector.load %arg15[%c0_24, %c32] : memref<32x128xf32, #tpu.memory_space<vmem>>, vector<32x32xf32>
    tpu.vector_store %arg15[%c0_24, %c32], %58 {strides = array<i32>} : memref<32x128xf32, #tpu.memory_space<vmem>>, vector<32x32xf32>,
    %60 = vector.extract_strided_slice %11 {offsets = [0, 64], sizes = [32, 32], strides = [1, 1]} : vector<32x128xbf16> to vector<32x32xbf16>
    %61 = vector.extract_strided_slice %13 {offsets = [0, 2], sizes = [32, 1], strides = [1, 1]} : vector<32x4xf32> to vector<32x1xf32>
    %62 = vector.extract_strided_slice %15 {offsets = [2, 0], sizes = [1, 32], strides = [1, 1]} : vector<4x32xf32> to vector<1x32xf32>
    %63 = vector.broadcast %61 : vector<32x1xf32> to vector<32x32xf32>
    %64 = vector.broadcast %62 : vector<1x32xf32> to vector<32x32xf32>
    %65 = arith.addf %63, %64 : vector<32x32xf32>
    %cst_25 = arith.constant 2.000000e-01 : f32
    %66 = vector.broadcast %cst_25 : f32 to vector<32x32xf32>
    %67 = arith.mulf %66, %65 : vector<32x32xf32>
    %68 = arith.maximumf %65, %67 : vector<32x32xf32>
    %69 = arith.addf %68, %5 : vector<32x32xf32>
    %cst_26 = arith.constant dense<0xFF800000> : vector<32xf32>
    %70 = vector.multi_reduction <maximumf>, %69, %cst_26 [1] : vector<32x32xf32> to vector<32xf32>
    %71 = vector.shape_cast %70 : vector<32xf32> to vector<32x1xf32>
    %72 = vector.broadcast %71 : vector<32x1xf32> to vector<32x32xf32>
    %73 = arith.subf %69, %72 : vector<32x32xf32>
    %74 = math.exp %73 : vector<32x32xf32>
    %75 = arith.truncf %74 : vector<32x32xf32> to vector<32x32xbf16>
    %cst_27 = arith.constant dense<0.000000e+00> : vector<32x1xf32>
    %76 = tpu.matmul %75, %6, %cst_27 {dimension_numbers = #tpu.dot_dimension_numbers<[1], [0], [0], [1], [0, 0, 1, 1], [], []>} : vector<32x32xbf16>, vector<32x1xbf16>, vector<32x1xf32> -> vector<32x1xf32>
    %77 = tpu.reciprocal %76 {approx = true} : vector<32x1xf32> -> vector<32x1xf32>
    %cst_28 = arith.constant dense<0.000000e+00> : vector<32x32xf32>
    %78 = tpu.matmul %75, %60, %cst_28 {dimension_numbers = #tpu.dot_dimension_numbers<[1], [0], [0], [1], [0, 0, 1, 1], [], []>} : vector<32x32xbf16>, vector<32x32xbf16>, vector<32x32xf32> -> vector<32x32xf32>
    %79 = vector.broadcast %77 : vector<32x1xf32> to vector<32x32xf32>
    %80 = arith.mulf %78, %79 : vector<32x32xf32>
    %c0_29 = arith.constant 0 : index
    %c64 = arith.constant 64 : index
    %81 = vector.load %arg15[%c0_29, %c64] : memref<32x128xf32, #tpu.memory_space<vmem>>, vector<32x32xf32>
    tpu.vector_store %arg15[%c0_29, %c64], %80 {strides = array<i32>} : memref<32x128xf32, #tpu.memory_space<vmem>>, vector<32x32xf32>,
    %82 = vector.extract_strided_slice %11 {offsets = [0, 96], sizes = [32, 32], strides = [1, 1]} : vector<32x128xbf16> to vector<32x32xbf16>
    %83 = vector.extract_strided_slice %13 {offsets = [0, 3], sizes = [32, 1], strides = [1, 1]} : vector<32x4xf32> to vector<32x1xf32>
    %84 = vector.extract_strided_slice %15 {offsets = [3, 0], sizes = [1, 32], strides = [1, 1]} : vector<4x32xf32> to vector<1x32xf32>
    %85 = vector.broadcast %83 : vector<32x1xf32> to vector<32x32xf32>
    %86 = vector.broadcast %84 : vector<1x32xf32> to vector<32x32xf32>
    %87 = arith.addf %85, %86 : vector<32x32xf32>
    %cst_30 = arith.constant 2.000000e-01 : f32
    %88 = vector.broadcast %cst_30 : f32 to vector<32x32xf32>
    %89 = arith.mulf %88, %87 : vector<32x32xf32>
    %90 = arith.maximumf %87, %89 : vector<32x32xf32>
    %91 = arith.addf %90, %5 : vector<32x32xf32>
    %cst_31 = arith.constant dense<0xFF800000> : vector<32xf32>
    %92 = vector.multi_reduction <maximumf>, %91, %cst_31 [1] : vector<32x32xf32> to vector<32xf32>
    %93 = vector.shape_cast %92 : vector<32xf32> to vector<32x1xf32>
    %94 = vector.broadcast %93 : vector<32x1xf32> to vector<32x32xf32>
    %95 = arith.subf %91, %94 : vector<32x32xf32>
    %96 = math.exp %95 : vector<32x32xf32>
    %97 = arith.truncf %96 : vector<32x32xf32> to vector<32x32xbf16>
    %cst_32 = arith.constant dense<0.000000e+00> : vector<32x1xf32>
    %98 = tpu.matmul %97, %6, %cst_32 {dimension_numbers = #tpu.dot_dimension_numbers<[1], [0], [0], [1], [0, 0, 1, 1], [], []>} : vector<32x32xbf16>, vector<32x1xbf16>, vector<32x1xf32> -> vector<32x1xf32>
    %99 = tpu.reciprocal %98 {approx = true} : vector<32x1xf32> -> vector<32x1xf32>
    %cst_33 = arith.constant dense<0.000000e+00> : vector<32x32xf32>
    %100 = tpu.matmul %97, %82, %cst_33 {dimension_numbers = #tpu.dot_dimension_numbers<[1], [0], [0], [1], [0, 0, 1, 1], [], []>} : vector<32x32xbf16>, vector<32x32xbf16>, vector<32x32xf32> -> vector<32x32xf32>
    %101 = vector.broadcast %99 : vector<32x1xf32> to vector<32x32xf32>
    %102 = arith.mulf %100, %101 : vector<32x32xf32>
    %c0_34 = arith.constant 0 : index
    %c96 = arith.constant 96 : index
    %103 = vector.load %arg15[%c0_34, %c96] : memref<32x128xf32, #tpu.memory_space<vmem>>, vector<32x32xf32>
    tpu.vector_store %arg15[%c0_34, %c96], %102 {strides = array<i32>} : memref<32x128xf32, #tpu.memory_space<vmem>>, vector<32x32xf32>,
    %c0_35 = arith.constant 0 : index
    %c0_36 = arith.constant 0 : index
    %104 = vector.load %arg15[%c0_35, %c0_36] : memref<32x128xf32, #tpu.memory_space<vmem>>, vector<32x128xf32>
    %c0_37 = arith.constant 0 : index
    %c0_38 = arith.constant 0 : index
    %105 = vector.load %arg5[%c0_37, %c0_38] : memref<1x128xf32, #tpu.memory_space<vmem>>, vector<1x128xf32>
    %106 = vector.broadcast %105 : vector<1x128xf32> to vector<32x128xf32>
    %107 = arith.addf %104, %106 : vector<32x128xf32>
    %cst_39 = arith.constant 0.000000e+00 : f32
    %108 = vector.broadcast %cst_39 : f32 to vector<32x128xf32>
    %109 = arith.cmpf ogt, %107, %108 : vector<32x128xf32>
    %cst_40 = arith.constant 0.000000e+00 : f32
    %110 = vector.broadcast %cst_40 : f32 to vector<32x128xf32>
    %111 = arith.minimumf %107, %110 : vector<32x128xf32>
    %112 = math.exp %111 : vector<32x128xf32>
    %cst_41 = arith.constant 1.000000e+00 : f32
    %113 = vector.broadcast %cst_41 : f32 to vector<32x128xf32>
    %114 = arith.subf %112, %113 : vector<32x128xf32>
    %115 = arith.select %109, %107, %114 : vector<32x128xi1>, vector<32x128xf32>
    %116 = arith.truncf %115 : vector<32x128xf32> to vector<32x128xbf16>
    %c0_42 = arith.constant 0 : index
    %c0_43 = arith.constant 0 : index
    %117 = vector.load %arg6[%c0_42, %c0_43] : memref<128x128xbf16, #tpu.memory_space<vmem>>, vector<128x128xbf16>
    %cst_44 = arith.constant dense<0.000000e+00> : vector<32x128xf32>
    %118 = tpu.matmul %116, %117, %cst_44 {dimension_numbers = #tpu.dot_dimension_numbers<[1], [0], [0], [1], [0, 0, 1, 1], [], []>} : vector<32x128xbf16>, vector<128x128xbf16>, vector<32x128xf32> -> vector<32x128xf32>
    %119 = arith.truncf %118 : vector<32x128xf32> to vector<32x128xbf16>
    %c0_45 = arith.constant 0 : index
    %c0_46 = arith.constant 0 : index
    %120 = vector.load %arg8[%c0_45, %c0_46] : memref<128x4xbf16, #tpu.memory_space<vmem>>, vector<128x4xbf16>
    %cst_47 = arith.constant dense<0.000000e+00> : vector<32x4xf32>
    %121 = tpu.matmul %116, %120, %cst_47 {dimension_numbers = #tpu.dot_dimension_numbers<[1], [0], [0], [1], [0, 0, 1, 1], [], []>} : vector<32x128xbf16>, vector<128x4xbf16>, vector<32x4xf32> -> vector<32x4xf32>
    %c0_48 = arith.constant 0 : index
    %c0_49 = arith.constant 0 : index
    %122 = vector.load %arg7[%c0_48, %c0_49] : memref<4x128xbf16, #tpu.memory_space<vmem>>, vector<4x128xbf16>
    %cst_50 = arith.constant dense<0.000000e+00> : vector<4x32xf32>
    %123 = tpu.matmul %122, %116, %cst_50 {dimension_numbers = #tpu.dot_dimension_numbers<[1], [1], [0], [0], [0, 0, 1, 0], [], []>} : vector<4x128xbf16>, vector<32x128xbf16>, vector<4x32xf32> -> vector<4x32xf32>
    %124 = vector.extract_strided_slice %119 {offsets = [0, 0], sizes = [32, 32], strides = [1, 1]} : vector<32x128xbf16> to vector<32x32xbf16>
    %125 = vector.extract_strided_slice %121 {offsets = [0, 0], sizes = [32, 1], strides = [1, 1]} : vector<32x4xf32> to vector<32x1xf32>
    %126 = vector.extract_strided_slice %123 {offsets = [0, 0], sizes = [1, 32], strides = [1, 1]} : vector<4x32xf32> to vector<1x32xf32>
    %127 = vector.broadcast %125 : vector<32x1xf32> to vector<32x32xf32>
    %128 = vector.broadcast %126 : vector<1x32xf32> to vector<32x32xf32>
    %129 = arith.addf %127, %128 : vector<32x32xf32>
    %cst_51 = arith.constant 2.000000e-01 : f32
    %130 = vector.broadcast %cst_51 : f32 to vector<32x32xf32>
    %131 = arith.mulf %130, %129 : vector<32x32xf32>
    %132 = arith.maximumf %129, %131 : vector<32x32xf32>
    %133 = arith.addf %132, %5 : vector<32x32xf32>
    %cst_52 = arith.constant dense<0xFF800000> : vector<32xf32>
    %134 = vector.multi_reduction <maximumf>, %133, %cst_52 [1] : vector<32x32xf32> to vector<32xf32>
    %135 = vector.shape_cast %134 : vector<32xf32> to vector<32x1xf32>
    %136 = vector.broadcast %135 : vector<32x1xf32> to vector<32x32xf32>
    %137 = arith.subf %133, %136 : vector<32x32xf32>
    %138 = math.exp %137 : vector<32x32xf32>
    %139 = arith.truncf %138 : vector<32x32xf32> to vector<32x32xbf16>
    %cst_53 = arith.constant dense<0.000000e+00> : vector<32x1xf32>
    %140 = tpu.matmul %139, %6, %cst_53 {dimension_numbers = #tpu.dot_dimension_numbers<[1], [0], [0], [1], [0, 0, 1, 1], [], []>} : vector<32x32xbf16>, vector<32x1xbf16>, vector<32x1xf32> -> vector<32x1xf32>
    %141 = tpu.reciprocal %140 {approx = true} : vector<32x1xf32> -> vector<32x1xf32>
    %cst_54 = arith.constant dense<0.000000e+00> : vector<32x32xf32>
    %142 = tpu.matmul %139, %124, %cst_54 {dimension_numbers = #tpu.dot_dimension_numbers<[1], [0], [0], [1], [0, 0, 1, 1], [], []>} : vector<32x32xbf16>, vector<32x32xbf16>, vector<32x32xf32> -> vector<32x32xf32>
    %143 = vector.broadcast %141 : vector<32x1xf32> to vector<32x32xf32>
    %144 = arith.mulf %142, %143 : vector<32x32xf32>
    %c0_55 = arith.constant 0 : index
    %c0_56 = arith.constant 0 : index
    %145 = vector.load %arg15[%c0_55, %c0_56] : memref<32x128xf32, #tpu.memory_space<vmem>>, vector<32x32xf32>
    tpu.vector_store %arg15[%c0_55, %c0_56], %144 {strides = array<i32>} : memref<32x128xf32, #tpu.memory_space<vmem>>, vector<32x32xf32>,
    %146 = vector.extract_strided_slice %119 {offsets = [0, 32], sizes = [32, 32], strides = [1, 1]} : vector<32x128xbf16> to vector<32x32xbf16>
    %147 = vector.extract_strided_slice %121 {offsets = [0, 1], sizes = [32, 1], strides = [1, 1]} : vector<32x4xf32> to vector<32x1xf32>
    %148 = vector.extract_strided_slice %123 {offsets = [1, 0], sizes = [1, 32], strides = [1, 1]} : vector<4x32xf32> to vector<1x32xf32>
    %149 = vector.broadcast %147 : vector<32x1xf32> to vector<32x32xf32>
    %150 = vector.broadcast %148 : vector<1x32xf32> to vector<32x32xf32>
    %151 = arith.addf %149, %150 : vector<32x32xf32>
    %cst_57 = arith.constant 2.000000e-01 : f32
    %152 = vector.broadcast %cst_57 : f32 to vector<32x32xf32>
    %153 = arith.mulf %152, %151 : vector<32x32xf32>
    %154 = arith.maximumf %151, %153 : vector<32x32xf32>
    %155 = arith.addf %154, %5 : vector<32x32xf32>
    %cst_58 = arith.constant dense<0xFF800000> : vector<32xf32>
    %156 = vector.multi_reduction <maximumf>, %155, %cst_58 [1] : vector<32x32xf32> to vector<32xf32>
    %157 = vector.shape_cast %156 : vector<32xf32> to vector<32x1xf32>
    %158 = vector.broadcast %157 : vector<32x1xf32> to vector<32x32xf32>
    %159 = arith.subf %155, %158 : vector<32x32xf32>
    %160 = math.exp %159 : vector<32x32xf32>
    %161 = arith.truncf %160 : vector<32x32xf32> to vector<32x32xbf16>
    %cst_59 = arith.constant dense<0.000000e+00> : vector<32x1xf32>
    %162 = tpu.matmul %161, %6, %cst_59 {dimension_numbers = #tpu.dot_dimension_numbers<[1], [0], [0], [1], [0, 0, 1, 1], [], []>} : vector<32x32xbf16>, vector<32x1xbf16>, vector<32x1xf32> -> vector<32x1xf32>
    %163 = tpu.reciprocal %162 {approx = true} : vector<32x1xf32> -> vector<32x1xf32>
    %cst_60 = arith.constant dense<0.000000e+00> : vector<32x32xf32>
    %164 = tpu.matmul %161, %146, %cst_60 {dimension_numbers = #tpu.dot_dimension_numbers<[1], [0], [0], [1], [0, 0, 1, 1], [], []>} : vector<32x32xbf16>, vector<32x32xbf16>, vector<32x32xf32> -> vector<32x32xf32>
    %165 = vector.broadcast %163 : vector<32x1xf32> to vector<32x32xf32>
    %166 = arith.mulf %164, %165 : vector<32x32xf32>
    %c0_61 = arith.constant 0 : index
    %c32_62 = arith.constant 32 : index
    %167 = vector.load %arg15[%c0_61, %c32_62] : memref<32x128xf32, #tpu.memory_space<vmem>>, vector<32x32xf32>
    tpu.vector_store %arg15[%c0_61, %c32_62], %166 {strides = array<i32>} : memref<32x128xf32, #tpu.memory_space<vmem>>, vector<32x32xf32>,
    %168 = vector.extract_strided_slice %119 {offsets = [0, 64], sizes = [32, 32], strides = [1, 1]} : vector<32x128xbf16> to vector<32x32xbf16>
    %169 = vector.extract_strided_slice %121 {offsets = [0, 2], sizes = [32, 1], strides = [1, 1]} : vector<32x4xf32> to vector<32x1xf32>
    %170 = vector.extract_strided_slice %123 {offsets = [2, 0], sizes = [1, 32], strides = [1, 1]} : vector<4x32xf32> to vector<1x32xf32>
    %171 = vector.broadcast %169 : vector<32x1xf32> to vector<32x32xf32>
    %172 = vector.broadcast %170 : vector<1x32xf32> to vector<32x32xf32>
    %173 = arith.addf %171, %172 : vector<32x32xf32>
    %cst_63 = arith.constant 2.000000e-01 : f32
    %174 = vector.broadcast %cst_63 : f32 to vector<32x32xf32>
    %175 = arith.mulf %174, %173 : vector<32x32xf32>
    %176 = arith.maximumf %173, %175 : vector<32x32xf32>
    %177 = arith.addf %176, %5 : vector<32x32xf32>
    %cst_64 = arith.constant dense<0xFF800000> : vector<32xf32>
    %178 = vector.multi_reduction <maximumf>, %177, %cst_64 [1] : vector<32x32xf32> to vector<32xf32>
    %179 = vector.shape_cast %178 : vector<32xf32> to vector<32x1xf32>
    %180 = vector.broadcast %179 : vector<32x1xf32> to vector<32x32xf32>
    %181 = arith.subf %177, %180 : vector<32x32xf32>
    %182 = math.exp %181 : vector<32x32xf32>
    %183 = arith.truncf %182 : vector<32x32xf32> to vector<32x32xbf16>
    %cst_65 = arith.constant dense<0.000000e+00> : vector<32x1xf32>
    %184 = tpu.matmul %183, %6, %cst_65 {dimension_numbers = #tpu.dot_dimension_numbers<[1], [0], [0], [1], [0, 0, 1, 1], [], []>} : vector<32x32xbf16>, vector<32x1xbf16>, vector<32x1xf32> -> vector<32x1xf32>
    %185 = tpu.reciprocal %184 {approx = true} : vector<32x1xf32> -> vector<32x1xf32>
    %cst_66 = arith.constant dense<0.000000e+00> : vector<32x32xf32>
    %186 = tpu.matmul %183, %168, %cst_66 {dimension_numbers = #tpu.dot_dimension_numbers<[1], [0], [0], [1], [0, 0, 1, 1], [], []>} : vector<32x32xbf16>, vector<32x32xbf16>, vector<32x32xf32> -> vector<32x32xf32>
    %187 = vector.broadcast %185 : vector<32x1xf32> to vector<32x32xf32>
    %188 = arith.mulf %186, %187 : vector<32x32xf32>
    %c0_67 = arith.constant 0 : index
    %c64_68 = arith.constant 64 : index
    %189 = vector.load %arg15[%c0_67, %c64_68] : memref<32x128xf32, #tpu.memory_space<vmem>>, vector<32x32xf32>
    tpu.vector_store %arg15[%c0_67, %c64_68], %188 {strides = array<i32>} : memref<32x128xf32, #tpu.memory_space<vmem>>, vector<32x32xf32>,
    %190 = vector.extract_strided_slice %119 {offsets = [0, 96], sizes = [32, 32], strides = [1, 1]} : vector<32x128xbf16> to vector<32x32xbf16>
    %191 = vector.extract_strided_slice %121 {offsets = [0, 3], sizes = [32, 1], strides = [1, 1]} : vector<32x4xf32> to vector<32x1xf32>
    %192 = vector.extract_strided_slice %123 {offsets = [3, 0], sizes = [1, 32], strides = [1, 1]} : vector<4x32xf32> to vector<1x32xf32>
    %193 = vector.broadcast %191 : vector<32x1xf32> to vector<32x32xf32>
    %194 = vector.broadcast %192 : vector<1x32xf32> to vector<32x32xf32>
    %195 = arith.addf %193, %194 : vector<32x32xf32>
    %cst_69 = arith.constant 2.000000e-01 : f32
    %196 = vector.broadcast %cst_69 : f32 to vector<32x32xf32>
    %197 = arith.mulf %196, %195 : vector<32x32xf32>
    %198 = arith.maximumf %195, %197 : vector<32x32xf32>
    %199 = arith.addf %198, %5 : vector<32x32xf32>
    %cst_70 = arith.constant dense<0xFF800000> : vector<32xf32>
    %200 = vector.multi_reduction <maximumf>, %199, %cst_70 [1] : vector<32x32xf32> to vector<32xf32>
    %201 = vector.shape_cast %200 : vector<32xf32> to vector<32x1xf32>
    %202 = vector.broadcast %201 : vector<32x1xf32> to vector<32x32xf32>
    %203 = arith.subf %199, %202 : vector<32x32xf32>
    %204 = math.exp %203 : vector<32x32xf32>
    %205 = arith.truncf %204 : vector<32x32xf32> to vector<32x32xbf16>
    %cst_71 = arith.constant dense<0.000000e+00> : vector<32x1xf32>
    %206 = tpu.matmul %205, %6, %cst_71 {dimension_numbers = #tpu.dot_dimension_numbers<[1], [0], [0], [1], [0, 0, 1, 1], [], []>} : vector<32x32xbf16>, vector<32x1xbf16>, vector<32x1xf32> -> vector<32x1xf32>
    %207 = tpu.reciprocal %206 {approx = true} : vector<32x1xf32> -> vector<32x1xf32>
    %cst_72 = arith.constant dense<0.000000e+00> : vector<32x32xf32>
    %208 = tpu.matmul %205, %190, %cst_72 {dimension_numbers = #tpu.dot_dimension_numbers<[1], [0], [0], [1], [0, 0, 1, 1], [], []>} : vector<32x32xbf16>, vector<32x32xbf16>, vector<32x32xf32> -> vector<32x32xf32>
    %209 = vector.broadcast %207 : vector<32x1xf32> to vector<32x32xf32>
    %210 = arith.mulf %208, %209 : vector<32x32xf32>
    %c0_73 = arith.constant 0 : index
    %c96_74 = arith.constant 96 : index
    %211 = vector.load %arg15[%c0_73, %c96_74] : memref<32x128xf32, #tpu.memory_space<vmem>>, vector<32x32xf32>
    tpu.vector_store %arg15[%c0_73, %c96_74], %210 {strides = array<i32>} : memref<32x128xf32, #tpu.memory_space<vmem>>, vector<32x32xf32>,
    %c0_75 = arith.constant 0 : index
    %c0_76 = arith.constant 0 : index
    %212 = vector.load %arg15[%c0_75, %c0_76] : memref<32x128xf32, #tpu.memory_space<vmem>>, vector<32x128xf32>
    %c0_77 = arith.constant 0 : index
    %c0_78 = arith.constant 0 : index
    %213 = vector.load %arg9[%c0_77, %c0_78] : memref<1x128xf32, #tpu.memory_space<vmem>>, vector<1x128xf32>
    %214 = vector.broadcast %213 : vector<1x128xf32> to vector<32x128xf32>
    %215 = arith.addf %212, %214 : vector<32x128xf32>
    %cst_79 = arith.constant 0.000000e+00 : f32
    %216 = vector.broadcast %cst_79 : f32 to vector<32x128xf32>
    %217 = arith.cmpf ogt, %215, %216 : vector<32x128xf32>
    %cst_80 = arith.constant 0.000000e+00 : f32
    %218 = vector.broadcast %cst_80 : f32 to vector<32x128xf32>
    %219 = arith.minimumf %215, %218 : vector<32x128xf32>
    %220 = math.exp %219 : vector<32x128xf32>
    %cst_81 = arith.constant 1.000000e+00 : f32
    %221 = vector.broadcast %cst_81 : f32 to vector<32x128xf32>
    %222 = arith.subf %220, %221 : vector<32x128xf32>
    %223 = arith.select %217, %215, %222 : vector<32x128xi1>, vector<32x128xf32>
    %224 = arith.truncf %223 : vector<32x128xf32> to vector<32x128xbf16>
    %c0_82 = arith.constant 0 : index
    %c0_83 = arith.constant 0 : index
    %225 = vector.load %arg10[%c0_82, %c0_83] : memref<128x16xbf16, #tpu.memory_space<vmem>>, vector<128x16xbf16>
    %cst_84 = arith.constant dense<0.000000e+00> : vector<32x16xf32>
    %226 = tpu.matmul %224, %225, %cst_84 {dimension_numbers = #tpu.dot_dimension_numbers<[1], [0], [0], [1], [0, 0, 1, 1], [], []>} : vector<32x128xbf16>, vector<128x16xbf16>, vector<32x16xf32> -> vector<32x16xf32>
    %227 = arith.truncf %226 : vector<32x16xf32> to vector<32x16xbf16>
    %c0_85 = arith.constant 0 : index
    %c0_86 = arith.constant 0 : index
    %228 = vector.load %arg12[%c0_85, %c0_86] : memref<128x2xbf16, #tpu.memory_space<vmem>>, vector<128x2xbf16>
    %cst_87 = arith.constant dense<0.000000e+00> : vector<32x2xf32>
    %229 = tpu.matmul %224, %228, %cst_87 {dimension_numbers = #tpu.dot_dimension_numbers<[1], [0], [0], [1], [0, 0, 1, 1], [], []>} : vector<32x128xbf16>, vector<128x2xbf16>, vector<32x2xf32> -> vector<32x2xf32>
    %c0_88 = arith.constant 0 : index
    %c0_89 = arith.constant 0 : index
    %230 = vector.load %arg11[%c0_88, %c0_89] : memref<2x128xbf16, #tpu.memory_space<vmem>>, vector<2x128xbf16>
    %cst_90 = arith.constant dense<0.000000e+00> : vector<2x32xf32>
    %231 = tpu.matmul %230, %224, %cst_90 {dimension_numbers = #tpu.dot_dimension_numbers<[1], [1], [0], [0], [0, 0, 1, 0], [], []>} : vector<2x128xbf16>, vector<32x128xbf16>, vector<2x32xf32> -> vector<2x32xf32>
    %232 = vector.extract_strided_slice %227 {offsets = [0, 0], sizes = [32, 8], strides = [1, 1]} : vector<32x16xbf16> to vector<32x8xbf16>
    %233 = vector.extract_strided_slice %229 {offsets = [0, 0], sizes = [32, 1], strides = [1, 1]} : vector<32x2xf32> to vector<32x1xf32>
    %234 = vector.extract_strided_slice %231 {offsets = [0, 0], sizes = [1, 32], strides = [1, 1]} : vector<2x32xf32> to vector<1x32xf32>
    %235 = vector.broadcast %233 : vector<32x1xf32> to vector<32x32xf32>
    %236 = vector.broadcast %234 : vector<1x32xf32> to vector<32x32xf32>
    %237 = arith.addf %235, %236 : vector<32x32xf32>
    %cst_91 = arith.constant 2.000000e-01 : f32
    %238 = vector.broadcast %cst_91 : f32 to vector<32x32xf32>
    %239 = arith.mulf %238, %237 : vector<32x32xf32>
    %240 = arith.maximumf %237, %239 : vector<32x32xf32>
    %241 = arith.addf %240, %5 : vector<32x32xf32>
    %cst_92 = arith.constant dense<0xFF800000> : vector<32xf32>
    %242 = vector.multi_reduction <maximumf>, %241, %cst_92 [1] : vector<32x32xf32> to vector<32xf32>
    %243 = vector.shape_cast %242 : vector<32xf32> to vector<32x1xf32>
    %244 = vector.broadcast %243 : vector<32x1xf32> to vector<32x32xf32>
    %245 = arith.subf %241, %244 : vector<32x32xf32>
    %246 = math.exp %245 : vector<32x32xf32>
    %247 = arith.truncf %246 : vector<32x32xf32> to vector<32x32xbf16>
    %cst_93 = arith.constant dense<0.000000e+00> : vector<32x1xf32>
    %248 = tpu.matmul %247, %6, %cst_93 {dimension_numbers = #tpu.dot_dimension_numbers<[1], [0], [0], [1], [0, 0, 1, 1], [], []>} : vector<32x32xbf16>, vector<32x1xbf16>, vector<32x1xf32> -> vector<32x1xf32>
    %249 = tpu.reciprocal %248 {approx = true} : vector<32x1xf32> -> vector<32x1xf32>
    %cst_94 = arith.constant dense<0.000000e+00> : vector<32x8xf32>
    %250 = tpu.matmul %247, %232, %cst_94 {dimension_numbers = #tpu.dot_dimension_numbers<[1], [0], [0], [1], [0, 0, 1, 1], [], []>} : vector<32x32xbf16>, vector<32x8xbf16>, vector<32x8xf32> -> vector<32x8xf32>
    %251 = vector.broadcast %249 : vector<32x1xf32> to vector<32x8xf32>
    %252 = arith.mulf %250, %251 : vector<32x8xf32>
    %c0_95 = arith.constant 0 : index
    %c0_96 = arith.constant 0 : index
    %253 = vector.load %arg13[%c0_95, %c0_96] : memref<1x16xf32, #tpu.memory_space<vmem>>, vector<1x8xf32>
    %254 = vector.broadcast %253 : vector<1x8xf32> to vector<32x8xf32>
    %255 = arith.addf %252, %254 : vector<32x8xf32>
    %256 = vector.extract_strided_slice %227 {offsets = [0, 8], sizes = [32, 8], strides = [1, 1]} : vector<32x16xbf16> to vector<32x8xbf16>
    %257 = vector.extract_strided_slice %229 {offsets = [0, 1], sizes = [32, 1], strides = [1, 1]} : vector<32x2xf32> to vector<32x1xf32>
    %258 = vector.extract_strided_slice %231 {offsets = [1, 0], sizes = [1, 32], strides = [1, 1]} : vector<2x32xf32> to vector<1x32xf32>
    %259 = vector.broadcast %257 : vector<32x1xf32> to vector<32x32xf32>
    %260 = vector.broadcast %258 : vector<1x32xf32> to vector<32x32xf32>
    %261 = arith.addf %259, %260 : vector<32x32xf32>
    %cst_97 = arith.constant 2.000000e-01 : f32
    %262 = vector.broadcast %cst_97 : f32 to vector<32x32xf32>
    %263 = arith.mulf %262, %261 : vector<32x32xf32>
    %264 = arith.maximumf %261, %263 : vector<32x32xf32>
    %265 = arith.addf %264, %5 : vector<32x32xf32>
    %cst_98 = arith.constant dense<0xFF800000> : vector<32xf32>
    %266 = vector.multi_reduction <maximumf>, %265, %cst_98 [1] : vector<32x32xf32> to vector<32xf32>
    %267 = vector.shape_cast %266 : vector<32xf32> to vector<32x1xf32>
    %268 = vector.broadcast %267 : vector<32x1xf32> to vector<32x32xf32>
    %269 = arith.subf %265, %268 : vector<32x32xf32>
    %270 = math.exp %269 : vector<32x32xf32>
    %271 = arith.truncf %270 : vector<32x32xf32> to vector<32x32xbf16>
    %cst_99 = arith.constant dense<0.000000e+00> : vector<32x1xf32>
    %272 = tpu.matmul %271, %6, %cst_99 {dimension_numbers = #tpu.dot_dimension_numbers<[1], [0], [0], [1], [0, 0, 1, 1], [], []>} : vector<32x32xbf16>, vector<32x1xbf16>, vector<32x1xf32> -> vector<32x1xf32>
    %273 = tpu.reciprocal %272 {approx = true} : vector<32x1xf32> -> vector<32x1xf32>
    %cst_100 = arith.constant dense<0.000000e+00> : vector<32x8xf32>
    %274 = tpu.matmul %271, %256, %cst_100 {dimension_numbers = #tpu.dot_dimension_numbers<[1], [0], [0], [1], [0, 0, 1, 1], [], []>} : vector<32x32xbf16>, vector<32x8xbf16>, vector<32x8xf32> -> vector<32x8xf32>
    %275 = vector.broadcast %273 : vector<32x1xf32> to vector<32x8xf32>
    %276 = arith.mulf %274, %275 : vector<32x8xf32>
    %c0_101 = arith.constant 0 : index
    %c8 = arith.constant 8 : index
    %277 = vector.load %arg13[%c0_101, %c8] : memref<1x16xf32, #tpu.memory_space<vmem>>, vector<1x8xf32>
    %278 = vector.broadcast %277 : vector<1x8xf32> to vector<32x8xf32>
    %279 = arith.addf %276, %278 : vector<32x8xf32>
    %280 = arith.addf %255, %279 : vector<32x8xf32>
    %cst_102 = arith.constant 5.000000e-01 : f32
    %281 = vector.broadcast %cst_102 : f32 to vector<32x8xf32>
    %282 = arith.mulf %280, %281 : vector<32x8xf32>
    %c0_103 = arith.constant 0 : index
    %c0_104 = arith.constant 0 : index
    %283 = vector.load %arg14[%c0_103, %c0_104] : memref<32x8xf32, #tpu.memory_space<vmem>>, vector<32x8xf32>
    tpu.vector_store %arg14[%c0_103, %c0_104], %282 {strides = array<i32>} : memref<32x8xf32, #tpu.memory_space<vmem>>, vector<32x8xf32>,
    return
  }
}

</mosaic_0001>

<llo_original>
// kernel: tpu_custom_call.1
$region0: #{tpu_custom_call.1}
  #allocation0 [shape = 'u32[]', space=smem, size = 0x4, offset = 0x4, fixed_abs, tag = 'smem constant byte address 0x4 - core index']
  #allocation1 [shape = 'u32[144,128]{1,0:T(1,128)}', space=vmem, size = 0x12000, scoped, tag = 'internal scratch']
  #allocation2 [shape = 'f32[32,128]{1,0:T(8,128)}', space=vmem, size = 0x4000, scoped, tag = 'scratch operand']
  %s0 = inlined_call_operand.vmem [shape: bf16[32,32], index: 0, kind: input, shape index: {}]
  %s1 = inlined_call_operand.vmem [shape: f32[32,16], index: 1, kind: input, shape index: {}]
  %s2 = inlined_call_operand.vmem [shape: bf16[16,128], index: 2, kind: input, shape index: {}]
  %s3 = inlined_call_operand.vmem [shape: bf16[4,16], index: 3, kind: input, shape index: {}]
  %s4 = inlined_call_operand.vmem [shape: bf16[16,4], index: 4, kind: input, shape index: {}]
  %s5 = inlined_call_operand.vmem [shape: f32[1,128], index: 5, kind: input, shape index: {}]
  %s6 = inlined_call_operand.vmem [shape: bf16[128,128], index: 6, kind: input, shape index: {}]
  %s7 = inlined_call_operand.vmem [shape: bf16[4,128], index: 7, kind: input, shape index: {}]
  %s8 = inlined_call_operand.vmem [shape: bf16[128,4], index: 8, kind: input, shape index: {}]
  %s9 = inlined_call_operand.vmem [shape: f32[1,128], index: 9, kind: input, shape index: {}]
  %s10 = inlined_call_operand.vmem [shape: bf16[128,16], index: 10, kind: input, shape index: {}]
  %s11 = inlined_call_operand.vmem [shape: bf16[2,128], index: 11, kind: input, shape index: {}]
  %s12 = inlined_call_operand.vmem [shape: bf16[128,2], index: 12, kind: input, shape index: {}]
  %s13 = inlined_call_operand.vmem [shape: f32[1,16], index: 13, kind: input, shape index: {}]
  %s14 = inlined_call_operand.vmem [shape: f32[32,8], index: 14, kind: output, shape index: {}]
  %s15 = sld [smem:[#allocation0]]
  $region66: #{tpu_custom_call.1} parent=0
    _
  %s17 = ssub.s32 1, %s15
  %s18 = scalar_select 0, %s17, %s15
  // Predicated region
  $region2: #{tpu_custom_call.1} parent=0 // pred_check
    _
  $region3: #{tpu_custom_call.1} parent=0 // pred_check_branch
    %20 = sbr.rel (0) target = $region5
  $region4: #{tpu_custom_call.1} parent=0 // pred_region
    _
  $region5: #{tpu_custom_call.1} parent=0 // pred_fallthru
    _
  // Predicated region
  $region6: #{tpu_custom_call.1} parent=0 // pred_check
    _
  $region7: #{tpu_custom_call.1} parent=0 // pred_check_branch
    %22 = sbr.rel (0) target = $region9
  $region8: #{tpu_custom_call.1} parent=0 // pred_region
    _
  $region9: #{tpu_custom_call.1} parent=0 // pred_fallthru
    _
  // Predicated region
  $region10: #{tpu_custom_call.1} parent=0 // pred_check
    _
  $region11: #{tpu_custom_call.1} parent=0 // pred_check_branch
    %24 = sbr.rel (0) target = $region13
  $region12: #{tpu_custom_call.1} parent=0 // pred_region
    _
  $region13: #{tpu_custom_call.1} parent=0 // pred_fallthru
    _
  // Predicated region
  $region14: #{tpu_custom_call.1} parent=0 // pred_check
    _
  $region15: #{tpu_custom_call.1} parent=0 // pred_check_branch
    %26 = sbr.rel (0) target = $region17
  $region16: #{tpu_custom_call.1} parent=0 // pred_region
    _
  $region17: #{tpu_custom_call.1} parent=0 // pred_fallthru
    _
  // Predicated region
  $region18: #{tpu_custom_call.1} parent=0 // pred_check
    _
  $region19: #{tpu_custom_call.1} parent=0 // pred_check_branch
    %28 = sbr.rel (0) target = $region21
  $region20: #{tpu_custom_call.1} parent=0 // pred_region
    _
  $region21: #{tpu_custom_call.1} parent=0 // pred_fallthru
    _
  // Predicated region
  $region22: #{tpu_custom_call.1} parent=0 // pred_check
    _
  $region23: #{tpu_custom_call.1} parent=0 // pred_check_branch
    %30 = sbr.rel (0) target = $region25
  $region24: #{tpu_custom_call.1} parent=0 // pred_region
    _
  $region25: #{tpu_custom_call.1} parent=0 // pred_fallthru
    _
  // Predicated region
  $region26: #{tpu_custom_call.1} parent=0 // pred_check
    _
  $region27: #{tpu_custom_call.1} parent=0 // pred_check_branch
    %32 = sbr.rel (0) target = $region29
  $region28: #{tpu_custom_call.1} parent=0 // pred_region
    _
  $region29: #{tpu_custom_call.1} parent=0 // pred_fallthru
    _
  // Predicated region
  $region30: #{tpu_custom_call.1} parent=0 // pred_check
    _
  $region31: #{tpu_custom_call.1} parent=0 // pred_check_branch
    %34 = sbr.rel (0) target = $region33
  $region32: #{tpu_custom_call.1} parent=0 // pred_region
    _
  $region33: #{tpu_custom_call.1} parent=0 // pred_fallthru
    _
  // Predicated region
  $region34: #{tpu_custom_call.1} parent=0 // pred_check
    _
  $region35: #{tpu_custom_call.1} parent=0 // pred_check_branch
    %36 = sbr.rel (0) target = $region37
  $region36: #{tpu_custom_call.1} parent=0 // pred_region
    _
  $region37: #{tpu_custom_call.1} parent=0 // pred_fallthru
    _
  // Predicated region
  $region38: #{tpu_custom_call.1} parent=0 // pred_check
    _
  $region39: #{tpu_custom_call.1} parent=0 // pred_check_branch
    %38 = sbr.rel (0) target = $region41
  $region40: #{tpu_custom_call.1} parent=0 // pred_region
    _
  $region41: #{tpu_custom_call.1} parent=0 // pred_fallthru
    _
  // Predicated region
  $region42: #{tpu_custom_call.1} parent=0 // pred_check
    _
  $region43: #{tpu_custom_call.1} parent=0 // pred_check_branch
    %40 = sbr.rel (0) target = $region45
  $region44: #{tpu_custom_call.1} parent=0 // pred_region
    _
  $region45: #{tpu_custom_call.1} parent=0 // pred_fallthru
    _
  // Predicated region
  $region46: #{tpu_custom_call.1} parent=0 // pred_check
    _
  $region47: #{tpu_custom_call.1} parent=0 // pred_check_branch
    %42 = sbr.rel (0) target = $region49
  $region48: #{tpu_custom_call.1} parent=0 // pred_region
    _
  $region49: #{tpu_custom_call.1} parent=0 // pred_fallthru
    _
  // Predicated region
  $region50: #{tpu_custom_call.1} parent=0 // pred_check
    _
  $region51: #{tpu_custom_call.1} parent=0 // pred_check_branch
    %44 = sbr.rel (0) target = $region53
  $region52: #{tpu_custom_call.1} parent=0 // pred_region
    _
  $region53: #{tpu_custom_call.1} parent=0 // pred_fallthru
    _
  // Predicated region
  $region54: #{tpu_custom_call.1} parent=0 // pred_check
    _
  $region55: #{tpu_custom_call.1} parent=0 // pred_check_branch
    %46 = sbr.rel (0) target = $region57
  $region56: #{tpu_custom_call.1} parent=0 // pred_region
    _
  $region57: #{tpu_custom_call.1} parent=0 // pred_fallthru
    _
  %v49 = vld [vmem:[%s0] sm:$0xf]
  %v50 = vld [vmem:[%s0 + $0x4] sm:$0xf]
  %v51 = vld [vmem:[%s0 + $0x8] sm:$0xf]
  %v52 = vld [vmem:[%s0 + $0xc] sm:$0xf]
  %v53 = vunpack.c.l.bf16 %v49
  %v54 = vunpack.c.l.bf16 %v50
  %v55 = vunpack.c.l.bf16 %v51
  %v56 = vunpack.c.l.bf16 %v52
  %v57 = vsub.f32 %v53, 1.0
  %v58 = vsub.f32 %v54, 1.0
  %v59 = vsub.f32 %v55, 1.0
  %v60 = vsub.f32 %v56, 1.0
  %v61 = vmul.f32 %v57, 1e+30
  %v62 = vmul.f32 %v58, 1e+30
  %v63 = vmul.f32 %v59, 1e+30
  %v64 = vmul.f32 %v60, 1e+30
  %v65 = vld [vmem:[%s1] sm:$0xff]
  %v66 = vld [vmem:[%s1 + $0x8] sm:$0xff]
  %v67 = vld [vmem:[%s1 + $0x10] sm:$0xff]
  %v68 = vld [vmem:[%s1 + $0x18] sm:$0xff]
  %v69 = vpack.c.bf16 %v66, %v65
  %v70 = vpack.c.bf16 %v68, %v67
  %v71 = vld [vmem:[%s2] sm:$0xf]
  %v72 = vld [vmem:[%s2 + $0x4] sm:$0xf]
  %v75 = vunpack.c.l.b16 %v71
  %v76 = vunpack.c.l.b16 %v72
  %v77 = vpack.c.b16 %v76, %v75
  %vm79 = vcmask 130048
  %v81 = vsel %vm79, %v69, 0
  %v84 = vsel %vm79, %v70, 0
  %86 = vmatprep.subr.bf16.mxu0 0
  %87 = vmatpush1.bf16.msra.mxu0 0
  %88 = vmatprep.subr.bf16.mxu0 0
  %89 = vmatpush1.bf16.msra.mxu0 0
  %90 = vmatprep.subr.bf16.mxu0 0
  %91 = vmatpush1.bf16.msra.mxu0 0
  %92 = vmatprep.subr.bf16.mxu0 0
  %93 = vmatpush1.bf16.msra.mxu0 0
  %94 = vmatprep.subr.bf16.mxu0 0
  %95 = vmatpush1.bf16.msra.mxu0 0
  %96 = vmatprep.subr.bf16.mxu0 0
  %97 = vmatpush1.bf16.msra.mxu0 0
  %98 = vmatprep.subr.bf16.mxu0 0
  %99 = vmatpush1.bf16.msra.mxu0 0
  %100 = vmatprep.subr.bf16.mxu0 0
  %101 = vmatpush1.bf16.msra.mxu0 %v77
  %102 = vmatprep.subr.bf16.mxu0 0
  %103 = vmatpush2.bf16.msra.mxu0 0
  %104 = vmatprep.subr.bf16.mxu0 0
  %105 = vmatpush2.bf16.msra.mxu0 0
  %106 = vmatprep.subr.bf16.mxu0 0
  %107 = vmatpush2.bf16.msra.mxu0 0
  %108 = vmatprep.subr.bf16.mxu0 0
  %109 = vmatpush2.bf16.msra.mxu0 0
  %110 = vmatprep.subr.bf16.mxu0 0
  %111 = vmatpush2.bf16.msra.mxu0 0
  %112 = vmatprep.subr.bf16.mxu0 0
  %113 = vmatpush2.bf16.msra.mxu0 0
  %114 = vmatprep.subr.bf16.mxu0 0
  %115 = vmatpush2.bf16.msra.mxu0 0
  %116 = vmatprep.subr.bf16.mxu0 0
  %117 = vmatpush2.bf16.msra.mxu0 0
  %118 = vmatprep.mubr.bf16.mxu0 0
  %119 = vmatmul.mubr.bf16.gmra.mxu0 %v81
  %v120 = vpop.f32.mrf.mxu0
  %v121 = vadd.f32 0.0, %v120
  %v122 = vpop.f32.mrf.mxu0
  %v123 = vpop.f32.mrf.mxu0
  %v124 = vadd.f32 0.0, %v123
  %v125 = vpop.f32.mrf.mxu0
  %126 = vmatprep.mubr.bf16.mxu0 0
  %127 = vmatmul.mubr.bf16.gmra.mxu0 %v84
  %v128 = vpop.f32.mrf.mxu0
  %v129 = vadd.f32 0.0, %v128
  %v130 = vpop.f32.mrf.mxu0
  %v131 = vpop.f32.mrf.mxu0
  %v132 = vadd.f32 0.0, %v131
  %v133 = vpop.f32.mrf.mxu0
  %134 = vdwg.mxu0
  %v135 = vpack.c.bf16 %v124, %v121
  %v136 = vpack.c.bf16 %v132, %v129
  %v137 = vld [vmem:[%s4] sm:$0xf]
  %v138 = vld [vmem:[%s4 + $0x4] sm:$0xf]
  %v141 = vunpack.c.l.b16 %v137
  %v142 = vunpack.c.l.b16 %v138
  %v143 = vpack.c.b16 %v142, %v141
  %145 = vmatprep.subr.bf16.mxu0 0
  %146 = vmatpush1.bf16.msra.mxu0 0
  %147 = vmatprep.subr.bf16.mxu0 0
  %148 = vmatpush1.bf16.msra.mxu0 0
  %149 = vmatprep.subr.bf16.mxu0 0
  %150 = vmatpush1.bf16.msra.mxu0 0
  %151 = vmatprep.subr.bf16.mxu0 0
  %152 = vmatpush1.bf16.msra.mxu0 0
  %153 = vmatprep.subr.bf16.mxu0 0
  %154 = vmatpush1.bf16.msra.mxu0 0
  %155 = vmatprep.subr.bf16.mxu0 0
  %156 = vmatpush1.bf16.msra.mxu0 0
  %157 = vmatprep.subr.bf16.mxu0 0
  %158 = vmatpush1.bf16.msra.mxu0 0
  %159 = vmatprep.subr.bf16.mxu0 0
  %160 = vmatpush1.bf16.msra.mxu0 %v143
  %161 = vmatprep.subr.bf16.mxu0 0
  %162 = vmatpush2.bf16.msra.mxu0 0
  %163 = vmatprep.subr.bf16.mxu0 0
  %164 = vmatpush2.bf16.msra.mxu0 0
  %165 = vmatprep.subr.bf16.mxu0 0
  %166 = vmatpush2.bf16.msra.mxu0 0
  %167 = vmatprep.subr.bf16.mxu0 0
  %168 = vmatpush2.bf16.msra.mxu0 0
  %169 = vmatprep.subr.bf16.mxu0 0
  %170 = vmatpush2.bf16.msra.mxu0 0
  %171 = vmatprep.subr.bf16.mxu0 0
  %172 = vmatpush2.bf16.msra.mxu0 0
  %173 = vmatprep.subr.bf16.mxu0 0
  %174 = vmatpush2.bf16.msra.mxu0 0
  %175 = vmatprep.subr.bf16.mxu0 0
  %176 = vmatpush2.bf16.msra.mxu0 0
  %177 = vmatprep.mubr.bf16.mxu0 0
  %178 = vmatmul.mubr.bf16.gmra.mxu0 %v81
  %v179 = vpop.f32.mrf.mxu0
  %v180 = vadd.f32 0.0, %v179
  %v181 = vpop.f32.mrf.mxu0
  %v182 = vpop.f32.mrf.mxu0
  %v183 = vadd.f32 0.0, %v182
  %v184 = vpop.f32.mrf.mxu0
  %185 = vmatprep.mubr.bf16.mxu0 0
  %186 = vmatmul.mubr.bf16.gmra.mxu0 %v84
  %v187 = vpop.f32.mrf.mxu0
  %v188 = vadd.f32 0.0, %v187
  %v189 = vpop.f32.mrf.mxu0
  %v190 = vpop.f32.mrf.mxu0
  %v191 = vadd.f32 0.0, %v190
  %v192 = vpop.f32.mrf.mxu0
  %193 = vdwg.mxu0
  %v194 = vld [vmem:[%s3] sm:$0x3]
  %v196 = vsel %vm79, %v194, 0
  %198 = vmatprep.subr.bf16.mxu0 0
  %199 = vmatpush1.bf16.xpose.msra.mxu0 0
  %200 = vmatprep.subr.bf16.mxu0 0
  %201 = vmatpush1.bf16.xpose.msra.mxu0 0
  %202 = vmatprep.subr.bf16.mxu0 0
  %203 = vmatpush1.bf16.xpose.msra.mxu0 0
  %204 = vmatprep.subr.bf16.mxu0 0
  %205 = vmatpush1.bf16.xpose.msra.mxu0 0
  %206 = vmatprep.subr.bf16.mxu0 0
  %207 = vmatpush1.bf16.xpose.msra.mxu0 0
  %208 = vmatprep.subr.bf16.mxu0 0
  %209 = vmatpush1.bf16.xpose.msra.mxu0 0
  %210 = vmatprep.subr.bf16.mxu0 0
  %211 = vmatpush1.bf16.xpose.msra.mxu0 %v84
  %212 = vmatprep.subr.bf16.mxu0 0
  %213 = vmatpush1.bf16.xpose.msra.mxu0 %v81
  %214 = vmatprep.subr.bf16.mxu0 0
  %215 = vmatpush2.bf16.xpose.msra.mxu0 0
  %216 = vmatprep.subr.bf16.mxu0 0
  %217 = vmatpush2.bf16.xpose.msra.mxu0 0
  %218 = vmatprep.subr.bf16.mxu0 0
  %219 = vmatpush2.bf16.xpose.msra.mxu0 0
  %220 = vmatprep.subr.bf16.mxu0 0
  %221 = vmatpush2.bf16.xpose.msra.mxu0 0
  %222 = vmatprep.subr.bf16.mxu0 0
  %223 = vmatpush2.bf16.xpose.msra.mxu0 0
  %224 = vmatprep.subr.bf16.mxu0 0
  %225 = vmatpush2.bf16.xpose.msra.mxu0 0
  %226 = vmatprep.subr.bf16.mxu0 0
  %227 = vmatpush2.bf16.xpose.msra.mxu0 0
  %228 = vmatprep.subr.bf16.mxu0 0
  %229 = vmatpush2.bf16.xpose.msra.mxu0 0
  %230 = vmatprep.mubr.bf16.mxu0 0
  %231 = vmatmul.mubr.bf16.gmra.mxu0 %v196
  %v232 = vpop.f32.mrf.mxu0
  %v233 = vadd.f32 0.0, %v232
  %v234 = vpop.f32.mrf.mxu0
  %v235 = vpop.f32.mrf.mxu0
  %v236 = vpop.f32.mrf.mxu0
  %237 = vdwg.mxu0
  %239 = vset.pattern.permute.xlu0 0
  %240 = vperm.xlu0 %239, %v180
  %v241 = vpop.permute.xlu0 %240
  %244 = vset.pattern.permute.xlu0 0
  %245 = vperm.xlu0 %244, %v183
  %v246 = vpop.permute.xlu0 %245
  %249 = vset.pattern.permute.xlu0 0
  %250 = vperm.xlu0 %249, %v188
  %v251 = vpop.permute.xlu0 %250
  %254 = vset.pattern.permute.xlu0 0
  %255 = vperm.xlu0 %254, %v191
  %v256 = vpop.permute.xlu0 %255
  %v258 = vlaneseq
  %v259 = vshrl.u32 %v258, 7
  %v260 = vsub.s32 0, %v259
  %v261 = vrot.slane %v233, %v260
  %v262 = vadd.f32 %v241, %v261
  %v263 = vadd.f32 %v246, %v261
  %v264 = vadd.f32 %v251, %v261
  %v265 = vadd.f32 %v256, %v261
  %v266 = vmul.f32 %v262, 0.2
  %v267 = vmul.f32 %v263, 0.2
  %v268 = vmul.f32 %v264, 0.2
  %v269 = vmul.f32 %v265, 0.2
  %v270 = vmax.f32 %v262, %v266
  %v271 = vmax.f32 %v263, %v267
  %v272 = vmax.f32 %v264, %v268
  %v273 = vmax.f32 %v265, %v269
  %v274 = vadd.f32 %v270, %v61
  %v275 = vadd.f32 %v271, %v62
  %v276 = vadd.f32 %v272, %v63
  %v277 = vadd.f32 %v273, %v64
  %vm278 = vcmask 261120
  %v279 = vsel %vm278, %v274, -inf
  %280 = vmax.xlane.f32.xlu0 %v279
  %v281 = vpop.xlane.xlu0 %280
  %v282 = vsel %vm278, %v275, -inf
  %283 = vmax.xlane.f32.xlu0 %v282
  %v284 = vpop.xlane.xlu0 %283
  %v285 = vsel %vm278, %v276, -inf
  %286 = vmax.xlane.f32.xlu0 %v285
  %v287 = vpop.xlane.xlu0 %286
  %v288 = vsel %vm278, %v277, -inf
  %289 = vmax.xlane.f32.xlu0 %v288
  %v290 = vpop.xlane.xlu0 %289
  %v291 = vsub.f32 %v274, %v281
  %v292 = vsub.f32 %v275, %v284
  %v293 = vsub.f32 %v276, %v287
  %v294 = vsub.f32 %v277, %v290
  %v295 = vmul.f32 %v291, 1.442695
  %v296 = vpow.pop %v295
  %v297 = vmul.f32 %v292, 1.442695
  %v298 = vpow.pop %v297
  %v299 = vmul.f32 %v293, 1.442695
  %v300 = vpow.pop %v299
  %v301 = vmul.f32 %v294, 1.442695
  %v302 = vpow.pop %v301
  %v303 = vpack.c.bf16 %v298, %v296
  %v304 = vpack.c.bf16 %v302, %v300
  %v306 = vsel %vm278, %v303, 0
  %v309 = vsel %vm278, %v304, 0
  %311 = vmatprep.subr.bf16.mxu0 0
  %312 = vmatpush1.bf16.msra.mxu0 0
  %313 = vmatprep.subr.bf16.mxu0 0
  %314 = vmatpush1.bf16.msra.mxu0 0
  %315 = vmatprep.subr.bf16.mxu0 0
  %316 = vmatpush1.bf16.msra.mxu0 0
  %317 = vmatprep.subr.bf16.mxu0 0
  %318 = vmatpush1.bf16.msra.mxu0 0
  %319 = vmatprep.subr.bf16.mxu0 0
  %320 = vmatpush1.bf16.msra.mxu0 0
  %321 = vmatprep.subr.bf16.mxu0 0
  %322 = vmatpush1.bf16.msra.mxu0 0
  %323 = vmatprep.subr.bf16.mxu0 0
  %324 = vmatpush1.bf16.msra.mxu0 1065369472
  %325 = vmatprep.subr.bf16.mxu0 0
  %326 = vmatpush1.bf16.msra.mxu0 1065369472
  %327 = vmatprep.subr.bf16.mxu0 0
  %328 = vmatpush2.bf16.msra.mxu0 0
  %329 = vmatprep.subr.bf16.mxu0 0
  %330 = vmatpush2.bf16.msra.mxu0 0
  %331 = vmatprep.subr.bf16.mxu0 0
  %332 = vmatpush2.bf16.msra.mxu0 0
  %333 = vmatprep.subr.bf16.mxu0 0
  %334 = vmatpush2.bf16.msra.mxu0 0
  %335 = vmatprep.subr.bf16.mxu0 0
  %336 = vmatpush2.bf16.msra.mxu0 0
  %337 = vmatprep.subr.bf16.mxu0 0
  %338 = vmatpush2.bf16.msra.mxu0 0
  %339 = vmatprep.subr.bf16.mxu0 0
  %340 = vmatpush2.bf16.msra.mxu0 0
  %341 = vmatprep.subr.bf16.mxu0 0
  %342 = vmatpush2.bf16.msra.mxu0 0
  %343 = vmatprep.mubr.bf16.mxu0 0
  %344 = vmatmul.mubr.bf16.gmra.mxu0 %v306
  %v345 = vpop.f32.mrf.mxu0
  %v346 = vadd.f32 0.0, %v345
  %v347 = vpop.f32.mrf.mxu0
  %v348 = vpop.f32.mrf.mxu0
  %v349 = vadd.f32 0.0, %v348
  %v350 = vpop.f32.mrf.mxu0
  %351 = vmatprep.mubr.bf16.mxu0 0
  %352 = vmatmul.mubr.bf16.gmra.mxu0 %v309
  %v353 = vpop.f32.mrf.mxu0
  %v354 = vadd.f32 0.0, %v353
  %v355 = vpop.f32.mrf.mxu0
  %v356 = vpop.f32.mrf.mxu0
  %v357 = vadd.f32 0.0, %v356
  %v358 = vpop.f32.mrf.mxu0
  %359 = vdwg.mxu0
  %v360 = vrcp.pop %v346
  %v361 = vrcp.pop %v349
  %v362 = vrcp.pop %v354
  %v363 = vrcp.pop %v357
  %364 = vmatprep.subr.bf16.mxu0 0
  %365 = vmatpush1.bf16.msra.mxu0 0
  %366 = vmatprep.subr.bf16.mxu0 0
  %367 = vmatpush1.bf16.msra.mxu0 0
  %368 = vmatprep.subr.bf16.mxu0 0
  %369 = vmatpush1.bf16.msra.mxu0 0
  %370 = vmatprep.subr.bf16.mxu0 0
  %371 = vmatpush1.bf16.msra.mxu0 0
  %372 = vmatprep.subr.bf16.mxu0 0
  %373 = vmatpush1.bf16.msra.mxu0 0
  %374 = vmatprep.subr.bf16.mxu0 0
  %375 = vmatpush1.bf16.msra.mxu0 0
  %376 = vmatprep.subr.bf16.mxu0 0
  %377 = vmatpush1.bf16.msra.mxu0 %v136
  %378 = vmatprep.subr.bf16.mxu0 0
  %379 = vmatpush1.bf16.msra.mxu0 %v135
  %380 = vmatprep.subr.bf16.mxu0 0
  %381 = vmatpush2.bf16.msra.mxu0 0
  %382 = vmatprep.subr.bf16.mxu0 0
  %383 = vmatpush2.bf16.msra.mxu0 0
  %384 = vmatprep.subr.bf16.mxu0 0
  %385 = vmatpush2.bf16.msra.mxu0 0
  %386 = vmatprep.subr.bf16.mxu0 0
  %387 = vmatpush2.bf16.msra.mxu0 0
  %388 = vmatprep.subr.bf16.mxu0 0
  %389 = vmatpush2.bf16.msra.mxu0 0
  %390 = vmatprep.subr.bf16.mxu0 0
  %391 = vmatpush2.bf16.msra.mxu0 0
  %392 = vmatprep.subr.bf16.mxu0 0
  %393 = vmatpush2.bf16.msra.mxu0 0
  %394 = vmatprep.subr.bf16.mxu0 0
  %395 = vmatpush2.bf16.msra.mxu0 0
  %396 = vmatprep.mubr.bf16.mxu0 0
  %397 = vmatmul.mubr.bf16.gmra.mxu0 %v306
  %v398 = vpop.f32.mrf.mxu0
  %v399 = vadd.f32 0.0, %v398
  %v400 = vpop.f32.mrf.mxu0
  %v401 = vpop.f32.mrf.mxu0
  %v402 = vadd.f32 0.0, %v401
  %v403 = vpop.f32.mrf.mxu0
  %404 = vmatprep.mubr.bf16.mxu0 0
  %405 = vmatmul.mubr.bf16.gmra.mxu0 %v309
  %v406 = vpop.f32.mrf.mxu0
  %v407 = vadd.f32 0.0, %v406
  %v408 = vpop.f32.mrf.mxu0
  %v409 = vpop.f32.mrf.mxu0
  %v410 = vadd.f32 0.0, %v409
  %v411 = vpop.f32.mrf.mxu0
  %412 = vdwg.mxu0
  %414 = vset.pattern.permute.xlu0 0
  %415 = vperm.xlu0 %414, %v360
  %v416 = vpop.permute.xlu0 %415
  %419 = vset.pattern.permute.xlu0 0
  %420 = vperm.xlu0 %419, %v361
  %v421 = vpop.permute.xlu0 %420
  %424 = vset.pattern.permute.xlu0 0
  %425 = vperm.xlu0 %424, %v362
  %v426 = vpop.permute.xlu0 %425
  %429 = vset.pattern.permute.xlu0 0
  %430 = vperm.xlu0 %429, %v363
  %v431 = vpop.permute.xlu0 %430
  %v433 = vmul.f32 %v399, %v416
  %v434 = vmul.f32 %v402, %v421
  %v435 = vmul.f32 %v407, %v426
  %v436 = vmul.f32 %v410, %v431
  %437 = vst.msk [vmem:[#allocation2] sm:$0xff] %vm278, %v433
  %438 = vst.msk [vmem:[#allocation2 + $0x8] sm:$0xff] %vm278, %v434
  %439 = vst.msk [vmem:[#allocation2 + $0x10] sm:$0xff] %vm278, %v435
  %440 = vst.msk [vmem:[#allocation2 + $0x18] sm:$0xff] %vm278, %v436
  %441 = vset.pattern.permute.xlu0 1
  %442 = vperm.xlu0 %441, %v180
  %v443 = vpop.permute.xlu0 %442
  %445 = vset.pattern.permute.xlu0 1
  %446 = vperm.xlu0 %445, %v183
  %v447 = vpop.permute.xlu0 %446
  %449 = vset.pattern.permute.xlu0 1
  %450 = vperm.xlu0 %449, %v188
  %v451 = vpop.permute.xlu0 %450
  %453 = vset.pattern.permute.xlu0 1
  %454 = vperm.xlu0 %453, %v191
  %v455 = vpop.permute.xlu0 %454
  %v457 = vlaneseq
  %v458 = vshrl.u32 %v457, 7
  %v459 = vsub.s32 1, %v458
  %v460 = vrot.slane %v233, %v459
  %v461 = vadd.f32 %v443, %v460
  %v462 = vadd.f32 %v447, %v460
  %v463 = vadd.f32 %v451, %v460
  %v464 = vadd.f32 %v455, %v460
  %v465 = vmul.f32 %v461, 0.2
  %v466 = vmul.f32 %v462, 0.2
  %v467 = vmul.f32 %v463, 0.2
  %v468 = vmul.f32 %v464, 0.2
  %v469 = vmax.f32 %v461, %v465
  %v470 = vmax.f32 %v462, %v466
  %v471 = vmax.f32 %v463, %v467
  %v472 = vmax.f32 %v464, %v468
  %v473 = vadd.f32 %v469, %v61
  %v474 = vadd.f32 %v470, %v62
  %v475 = vadd.f32 %v471, %v63
  %v476 = vadd.f32 %v472, %v64
  %v477 = vsel %vm278, %v473, -inf
  %478 = vmax.xlane.f32.xlu0 %v477
  %v479 = vpop.xlane.xlu0 %478
  %v480 = vsel %vm278, %v474, -inf
  %481 = vmax.xlane.f32.xlu0 %v480
  %v482 = vpop.xlane.xlu0 %481
  %v483 = vsel %vm278, %v475, -inf
  %484 = vmax.xlane.f32.xlu0 %v483
  %v485 = vpop.xlane.xlu0 %484
  %v486 = vsel %vm278, %v476, -inf
  %487 = vmax.xlane.f32.xlu0 %v486
  %v488 = vpop.xlane.xlu0 %487
  %v489 = vsub.f32 %v473, %v479
  %v490 = vsub.f32 %v474, %v482
  %v491 = vsub.f32 %v475, %v485
  %v492 = vsub.f32 %v476, %v488
  %v493 = vmul.f32 %v489, 1.442695
  %v494 = vpow.pop %v493
  %v495 = vmul.f32 %v490, 1.442695
  %v496 = vpow.pop %v495
  %v497 = vmul.f32 %v491, 1.442695
  %v498 = vpow.pop %v497
  %v499 = vmul.f32 %v492, 1.442695
  %v500 = vpow.pop %v499
  %v501 = vpack.c.bf16 %v496, %v494
  %v502 = vpack.c.bf16 %v500, %v498
  %v504 = vsel %vm278, %v501, 0
  %v507 = vsel %vm278, %v502, 0
  %509 = vmatprep.subr.bf16.mxu0 0
  %510 = vmatpush1.bf16.msra.mxu0 0
  %511 = vmatprep.subr.bf16.mxu0 0
  %512 = vmatpush1.bf16.msra.mxu0 0
  %513 = vmatprep.subr.bf16.mxu0 0
  %514 = vmatpush1.bf16.msra.mxu0 0
  %515 = vmatprep.subr.bf16.mxu0 0
  %516 = vmatpush1.bf16.msra.mxu0 0
  %517 = vmatprep.subr.bf16.mxu0 0
  %518 = vmatpush1.bf16.msra.mxu0 0
  %519 = vmatprep.subr.bf16.mxu0 0
  %520 = vmatpush1.bf16.msra.mxu0 0
  %521 = vmatprep.subr.bf16.mxu0 0
  %522 = vmatpush1.bf16.msra.mxu0 1065369472
  %523 = vmatprep.subr.bf16.mxu0 0
  %524 = vmatpush1.bf16.msra.mxu0 1065369472
  %525 = vmatprep.subr.bf16.mxu0 0
  %526 = vmatpush2.bf16.msra.mxu0 0
  %527 = vmatprep.subr.bf16.mxu0 0
  %528 = vmatpush2.bf16.msra.mxu0 0
  %529 = vmatprep.subr.bf16.mxu0 0
  %530 = vmatpush2.bf16.msra.mxu0 0
  %531 = vmatprep.subr.bf16.mxu0 0
  %532 = vmatpush2.bf16.msra.mxu0 0
  %533 = vmatprep.subr.bf16.mxu0 0
  %534 = vmatpush2.bf16.msra.mxu0 0
  %535 = vmatprep.subr.bf16.mxu0 0
  %536 = vmatpush2.bf16.msra.mxu0 0
  %537 = vmatprep.subr.bf16.mxu0 0
  %538 = vmatpush2.bf16.msra.mxu0 0
  %539 = vmatprep.subr.bf16.mxu0 0
  %540 = vmatpush2.bf16.msra.mxu0 0
  %541 = vmatprep.mubr.bf16.mxu0 0
  %542 = vmatmul.mubr.bf16.gmra.mxu0 %v504
  %v543 = vpop.f32.mrf.mxu0
  %v544 = vadd.f32 0.0, %v543
  %v545 = vpop.f32.mrf.mxu0
  %v546 = vpop.f32.mrf.mxu0
  %v547 = vadd.f32 0.0, %v546
  %v548 = vpop.f32.mrf.mxu0
  %549 = vmatprep.mubr.bf16.mxu0 0
  %550 = vmatmul.mubr.bf16.gmra.mxu0 %v507
  %v551 = vpop.f32.mrf.mxu0
  %v552 = vadd.f32 0.0, %v551
  %v553 = vpop.f32.mrf.mxu0
  %v554 = vpop.f32.mrf.mxu0
  %v555 = vadd.f32 0.0, %v554
  %v556 = vpop.f32.mrf.mxu0
  %557 = vdwg.mxu0
  %v558 = vrcp.pop %v544
  %v559 = vrcp.pop %v547
  %v560 = vrcp.pop %v552
  %v561 = vrcp.pop %v555
  %564 = vrot.lane.b32.xlu0 %v135, 96
  %v565 = vpop.permute.xlu0 %564
  %566 = vrot.lane.b32.xlu0 %v136, 96
  %v567 = vpop.permute.xlu0 %566
  %570 = vmatprep.subr.bf16.mxu0 0
  %571 = vmatpush1.bf16.msra.mxu0 0
  %572 = vmatprep.subr.bf16.mxu0 0
  %573 = vmatpush1.bf16.msra.mxu0 0
  %574 = vmatprep.subr.bf16.mxu0 0
  %575 = vmatpush1.bf16.msra.mxu0 0
  %576 = vmatprep.subr.bf16.mxu0 0
  %577 = vmatpush1.bf16.msra.mxu0 0
  %578 = vmatprep.subr.bf16.mxu0 0
  %579 = vmatpush1.bf16.msra.mxu0 0
  %580 = vmatprep.subr.bf16.mxu0 0
  %581 = vmatpush1.bf16.msra.mxu0 0
  %582 = vmatprep.subr.bf16.mxu0 0
  %583 = vmatpush1.bf16.msra.mxu0 %v567
  %584 = vmatprep.subr.bf16.mxu0 0
  %585 = vmatpush1.bf16.msra.mxu0 %v565
  %586 = vmatprep.subr.bf16.mxu0 0
  %587 = vmatpush2.bf16.msra.mxu0 0
  %588 = vmatprep.subr.bf16.mxu0 0
  %589 = vmatpush2.bf16.msra.mxu0 0
  %590 = vmatprep.subr.bf16.mxu0 0
  %591 = vmatpush2.bf16.msra.mxu0 0
  %592 = vmatprep.subr.bf16.mxu0 0
  %593 = vmatpush2.bf16.msra.mxu0 0
  %594 = vmatprep.subr.bf16.mxu0 0
  %595 = vmatpush2.bf16.msra.mxu0 0
  %596 = vmatprep.subr.bf16.mxu0 0
  %597 = vmatpush2.bf16.msra.mxu0 0
  %598 = vmatprep.subr.bf16.mxu0 0
  %599 = vmatpush2.bf16.msra.mxu0 0
  %600 = vmatprep.subr.bf16.mxu0 0
  %601 = vmatpush2.bf16.msra.mxu0 0
  %602 = vmatprep.mubr.bf16.mxu0 0
  %603 = vmatmul.mubr.bf16.gmra.mxu0 %v504
  %v604 = vpop.f32.mrf.mxu0
  %v605 = vadd.f32 0.0, %v604
  %v606 = vpop.f32.mrf.mxu0
  %v607 = vpop.f32.mrf.mxu0
  %v608 = vadd.f32 0.0, %v607
  %v609 = vpop.f32.mrf.mxu0
  %610 = vmatprep.mubr.bf16.mxu0 0
  %611 = vmatmul.mubr.bf16.gmra.mxu0 %v507
  %v612 = vpop.f32.mrf.mxu0
  %v613 = vadd.f32 0.0, %v612
  %v614 = vpop.f32.mrf.mxu0
  %v615 = vpop.f32.mrf.mxu0
  %v616 = vadd.f32 0.0, %v615
  %v617 = vpop.f32.mrf.mxu0
  %618 = vdwg.mxu0
  %620 = vset.pattern.permute.xlu0 0
  %621 = vperm.xlu0 %620, %v558
  %v622 = vpop.permute.xlu0 %621
  %625 = vset.pattern.permute.xlu0 0
  %626 = vperm.xlu0 %625, %v559
  %v627 = vpop.permute.xlu0 %626
  %630 = vset.pattern.permute.xlu0 0
  %631 = vperm.xlu0 %630, %v560
  %v632 = vpop.permute.xlu0 %631
  %635 = vset.pattern.permute.xlu0 0
  %636 = vperm.xlu0 %635, %v561
  %v637 = vpop.permute.xlu0 %636
  %v639 = vmul.f32 %v605, %v622
  %v640 = vmul.f32 %v608, %v627
  %v641 = vmul.f32 %v613, %v632
  %v642 = vmul.f32 %v616, %v637
  %647 = vrot.lane.b32.xlu0 %v639, 32
  %v648 = vpop.permute.xlu0 %647
  %649 = vrot.lane.b32.xlu0 %v640, 32
  %v650 = vpop.permute.xlu0 %649
  %651 = vrot.lane.b32.xlu0 %v641, 32
  %v652 = vpop.permute.xlu0 %651
  %653 = vrot.lane.b32.xlu0 %v642, 32
  %v654 = vpop.permute.xlu0 %653
  %vm659 = vcmask 523520
  %660 = vst.msk [vmem:[#allocation2] sm:$0xff] %vm659, %v648
  %661 = vst.msk [vmem:[#allocation2 + $0x8] sm:$0xff] %vm659, %v650
  %662 = vst.msk [vmem:[#allocation2 + $0x10] sm:$0xff] %vm659, %v652
  %663 = vst.msk [vmem:[#allocation2 + $0x18] sm:$0xff] %vm659, %v654
  %664 = vset.pattern.permute.xlu0 2
  %665 = vperm.xlu0 %664, %v180
  %v666 = vpop.permute.xlu0 %665
  %668 = vset.pattern.permute.xlu0 2
  %669 = vperm.xlu0 %668, %v183
  %v670 = vpop.permute.xlu0 %669
  %672 = vset.pattern.permute.xlu0 2
  %673 = vperm.xlu0 %672, %v188
  %v674 = vpop.permute.xlu0 %673
  %676 = vset.pattern.permute.xlu0 2
  %677 = vperm.xlu0 %676, %v191
  %v678 = vpop.permute.xlu0 %677
  %v680 = vlaneseq
  %v681 = vshrl.u32 %v680, 7
  %v682 = vsub.s32 2, %v681
  %v683 = vrot.slane %v233, %v682
  %v684 = vadd.f32 %v666, %v683
  %v685 = vadd.f32 %v670, %v683
  %v686 = vadd.f32 %v674, %v683
  %v687 = vadd.f32 %v678, %v683
  %v688 = vmul.f32 %v684, 0.2
  %v689 = vmul.f32 %v685, 0.2
  %v690 = vmul.f32 %v686, 0.2
  %v691 = vmul.f32 %v687, 0.2
  %v692 = vmax.f32 %v684, %v688
  %v693 = vmax.f32 %v685, %v689
  %v694 = vmax.f32 %v686, %v690
  %v695 = vmax.f32 %v687, %v691
  %v696 = vadd.f32 %v692, %v61
  %v697 = vadd.f32 %v693, %v62
  %v698 = vadd.f32 %v694, %v63
  %v699 = vadd.f32 %v695, %v64
  %v700 = vsel %vm278, %v696, -inf
  %701 = vmax.xlane.f32.xlu0 %v700
  %v702 = vpop.xlane.xlu0 %701
  %v703 = vsel %vm278, %v697, -inf
  %704 = vmax.xlane.f32.xlu0 %v703
  %v705 = vpop.xlane.xlu0 %704
  %v706 = vsel %vm278, %v698, -inf
  %707 = vmax.xlane.f32.xlu0 %v706
  %v708 = vpop.xlane.xlu0 %707
  %v709 = vsel %vm278, %v699, -inf
  %710 = vmax.xlane.f32.xlu0 %v709
  %v711 = vpop.xlane.xlu0 %710
  %v712 = vsub.f32 %v696, %v702
  %v713 = vsub.f32 %v697, %v705
  %v714 = vsub.f32 %v698, %v708
  %v715 = vsub.f32 %v699, %v711
  %v716 = vmul.f32 %v712, 1.442695
  %v717 = vpow.pop %v716
  %v718 = vmul.f32 %v713, 1.442695
  %v719 = vpow.pop %v718
  %v720 = vmul.f32 %v714, 1.442695
  %v721 = vpow.pop %v720
  %v722 = vmul.f32 %v715, 1.442695
  %v723 = vpow.pop %v722
  %v724 = vpack.c.bf16 %v719, %v717
  %v725 = vpack.c.bf16 %v723, %v721
  %v727 = vsel %vm278, %v724, 0
  %v730 = vsel %vm278, %v725, 0
  %732 = vmatprep.subr.bf16.mxu0 0
  %733 = vmatpush1.bf16.msra.mxu0 0
  %734 = vmatprep.subr.bf16.mxu0 0
  %735 = vmatpush1.bf16.msra.mxu0 0
  %736 = vmatprep.subr.bf16.mxu0 0
  %737 = vmatpush1.bf16.msra.mxu0 0
  %738 = vmatprep.subr.bf16.mxu0 0
  %739 = vmatpush1.bf16.msra.mxu0 0
  %740 = vmatprep.subr.bf16.mxu0 0
  %741 = vmatpush1.bf16.msra.mxu0 0
  %742 = vmatprep.subr.bf16.mxu0 0
  %743 = vmatpush1.bf16.msra.mxu0 0
  %744 = vmatprep.subr.bf16.mxu0 0
  %745 = vmatpush1.bf16.msra.mxu0 1065369472
  %746 = vmatprep.subr.bf16.mxu0 0
  %747 = vmatpush1.bf16.msra.mxu0 1065369472
  %748 = vmatprep.subr.bf16.mxu0 0
  %749 = vmatpush2.bf16.msra.mxu0 0
  %750 = vmatprep.subr.bf16.mxu0 0
  %751 = vmatpush2.bf16.msra.mxu0 0
  %752 = vmatprep.subr.bf16.mxu0 0
  %753 = vmatpush2.bf16.msra.mxu0 0
  %754 = vmatprep.subr.bf16.mxu0 0
  %755 = vmatpush2.bf16.msra.mxu0 0
  %756 = vmatprep.subr.bf16.mxu0 0
  %757 = vmatpush2.bf16.msra.mxu0 0
  %758 = vmatprep.subr.bf16.mxu0 0
  %759 = vmatpush2.bf16.msra.mxu0 0
  %760 = vmatprep.subr.bf16.mxu0 0
  %761 = vmatpush2.bf16.msra.mxu0 0
  %762 = vmatprep.subr.bf16.mxu0 0
  %763 = vmatpush2.bf16.msra.mxu0 0
  %764 = vmatprep.mubr.bf16.mxu0 0
  %765 = vmatmul.mubr.bf16.gmra.mxu0 %v727
  %v766 = vpop.f32.mrf.mxu0
  %v767 = vadd.f32 0.0, %v766
  %v768 = vpop.f32.mrf.mxu0
  %v769 = vpop.f32.mrf.mxu0
  %v770 = vadd.f32 0.0, %v769
  %v771 = vpop.f32.mrf.mxu0
  %772 = vmatprep.mubr.bf16.mxu0 0
  %773 = vmatmul.mubr.bf16.gmra.mxu0 %v730
  %v774 = vpop.f32.mrf.mxu0
  %v775 = vadd.f32 0.0, %v774
  %v776 = vpop.f32.mrf.mxu0
  %v777 = vpop.f32.mrf.mxu0
  %v778 = vadd.f32 0.0, %v777
  %v779 = vpop.f32.mrf.mxu0
  %780 = vdwg.mxu0
  %v781 = vrcp.pop %v767
  %v782 = vrcp.pop %v770
  %v783 = vrcp.pop %v775
  %v784 = vrcp.pop %v778
  %785 = vrot.lane.b32.xlu0 %v135, 64
  %v786 = vpop.permute.xlu0 %785
  %787 = vrot.lane.b32.xlu0 %v136, 64
  %v788 = vpop.permute.xlu0 %787
  %791 = vmatprep.subr.bf16.mxu0 0
  %792 = vmatpush1.bf16.msra.mxu0 0
  %793 = vmatprep.subr.bf16.mxu0 0
  %794 = vmatpush1.bf16.msra.mxu0 0
  %795 = vmatprep.subr.bf16.mxu0 0
  %796 = vmatpush1.bf16.msra.mxu0 0
  %797 = vmatprep.subr.bf16.mxu0 0
  %798 = vmatpush1.bf16.msra.mxu0 0
  %799 = vmatprep.subr.bf16.mxu0 0
  %800 = vmatpush1.bf16.msra.mxu0 0
  %801 = vmatprep.subr.bf16.mxu0 0
  %802 = vmatpush1.bf16.msra.mxu0 0
  %803 = vmatprep.subr.bf16.mxu0 0
  %804 = vmatpush1.bf16.msra.mxu0 %v788
  %805 = vmatprep.subr.bf16.mxu0 0
  %806 = vmatpush1.bf16.msra.mxu0 %v786
  %807 = vmatprep.subr.bf16.mxu0 0
  %808 = vmatpush2.bf16.msra.mxu0 0
  %809 = vmatprep.subr.bf16.mxu0 0
  %810 = vmatpush2.bf16.msra.mxu0 0
  %811 = vmatprep.subr.bf16.mxu0 0
  %812 = vmatpush2.bf16.msra.mxu0 0
  %813 = vmatprep.subr.bf16.mxu0 0
  %814 = vmatpush2.bf16.msra.mxu0 0
  %815 = vmatprep.subr.bf16.mxu0 0
  %816 = vmatpush2.bf16.msra.mxu0 0
  %817 = vmatprep.subr.bf16.mxu0 0
  %818 = vmatpush2.bf16.msra.mxu0 0
  %819 = vmatprep.subr.bf16.mxu0 0
  %820 = vmatpush2.bf16.msra.mxu0 0
  %821 = vmatprep.subr.bf16.mxu0 0
  %822 = vmatpush2.bf16.msra.mxu0 0
  %823 = vmatprep.mubr.bf16.mxu0 0
  %824 = vmatmul.mubr.bf16.gmra.mxu0 %v727
  %v825 = vpop.f32.mrf.mxu0
  %v826 = vadd.f32 0.0, %v825
  %v827 = vpop.f32.mrf.mxu0
  %v828 = vpop.f32.mrf.mxu0
  %v829 = vadd.f32 0.0, %v828
  %v830 = vpop.f32.mrf.mxu0
  %831 = vmatprep.mubr.bf16.mxu0 0
  %832 = vmatmul.mubr.bf16.gmra.mxu0 %v730
  %v833 = vpop.f32.mrf.mxu0
  %v834 = vadd.f32 0.0, %v833
  %v835 = vpop.f32.mrf.mxu0
  %v836 = vpop.f32.mrf.mxu0
  %v837 = vadd.f32 0.0, %v836
  %v838 = vpop.f32.mrf.mxu0
  %839 = vdwg.mxu0
  %841 = vset.pattern.permute.xlu0 0
  %842 = vperm.xlu0 %841, %v781
  %v843 = vpop.permute.xlu0 %842
  %846 = vset.pattern.permute.xlu0 0
  %847 = vperm.xlu0 %846, %v782
  %v848 = vpop.permute.xlu0 %847
  %851 = vset.pattern.permute.xlu0 0
  %852 = vperm.xlu0 %851, %v783
  %v853 = vpop.permute.xlu0 %852
  %856 = vset.pattern.permute.xlu0 0
  %857 = vperm.xlu0 %856, %v784
  %v858 = vpop.permute.xlu0 %857
  %v860 = vmul.f32 %v826, %v843
  %v861 = vmul.f32 %v829, %v848
  %v862 = vmul.f32 %v834, %v853
  %v863 = vmul.f32 %v837, %v858
  %868 = vrot.lane.b32.xlu0 %v860, 64
  %v869 = vpop.permute.xlu0 %868
  %870 = vrot.lane.b32.xlu0 %v861, 64
  %v871 = vpop.permute.xlu0 %870
  %872 = vrot.lane.b32.xlu0 %v862, 64
  %v873 = vpop.permute.xlu0 %872
  %874 = vrot.lane.b32.xlu0 %v863, 64
  %v875 = vpop.permute.xlu0 %874
  %vm880 = vcmask 785920
  %881 = vst.msk [vmem:[#allocation2] sm:$0xff] %vm880, %v869
  %882 = vst.msk [vmem:[#allocation2 + $0x8] sm:$0xff] %vm880, %v871
  %883 = vst.msk [vmem:[#allocation2 + $0x10] sm:$0xff] %vm880, %v873
  %884 = vst.msk [vmem:[#allocation2 + $0x18] sm:$0xff] %vm880, %v875
  %885 = vset.pattern.permute.xlu0 3
  %886 = vperm.xlu0 %885, %v180
  %v887 = vpop.permute.xlu0 %886
  %889 = vset.pattern.permute.xlu0 3
  %890 = vperm.xlu0 %889, %v183
  %v891 = vpop.permute.xlu0 %890
  %893 = vset.pattern.permute.xlu0 3
  %894 = vperm.xlu0 %893, %v188
  %v895 = vpop.permute.xlu0 %894
  %897 = vset.pattern.permute.xlu0 3
  %898 = vperm.xlu0 %897, %v191
  %v899 = vpop.permute.xlu0 %898
  %v901 = vlaneseq
  %v902 = vshrl.u32 %v901, 7
  %v903 = vsub.s32 3, %v902
  %v904 = vrot.slane %v233, %v903
  %v905 = vadd.f32 %v887, %v904
  %v906 = vadd.f32 %v891, %v904
  %v907 = vadd.f32 %v895, %v904
  %v908 = vadd.f32 %v899, %v904
  %v909 = vmul.f32 %v905, 0.2
  %v910 = vmul.f32 %v906, 0.2
  %v911 = vmul.f32 %v907, 0.2
  %v912 = vmul.f32 %v908, 0.2
  %v913 = vmax.f32 %v905, %v909
  %v914 = vmax.f32 %v906, %v910
  %v915 = vmax.f32 %v907, %v911
  %v916 = vmax.f32 %v908, %v912
  %v917 = vadd.f32 %v913, %v61
  %v918 = vadd.f32 %v914, %v62
  %v919 = vadd.f32 %v915, %v63
  %v920 = vadd.f32 %v916, %v64
  %v921 = vsel %vm278, %v917, -inf
  %922 = vmax.xlane.f32.xlu0 %v921
  %v923 = vpop.xlane.xlu0 %922
  %v924 = vsel %vm278, %v918, -inf
  %925 = vmax.xlane.f32.xlu0 %v924
  %v926 = vpop.xlane.xlu0 %925
  %v927 = vsel %vm278, %v919, -inf
  %928 = vmax.xlane.f32.xlu0 %v927
  %v929 = vpop.xlane.xlu0 %928
  %v930 = vsel %vm278, %v920, -inf
  %931 = vmax.xlane.f32.xlu0 %v930
  %v932 = vpop.xlane.xlu0 %931
  %v933 = vsub.f32 %v917, %v923
  %v934 = vsub.f32 %v918, %v926
  %v935 = vsub.f32 %v919, %v929
  %v936 = vsub.f32 %v920, %v932
  %v937 = vmul.f32 %v933, 1.442695
  %v938 = vpow.pop %v937
  %v939 = vmul.f32 %v934, 1.442695
  %v940 = vpow.pop %v939
  %v941 = vmul.f32 %v935, 1.442695
  %v942 = vpow.pop %v941
  %v943 = vmul.f32 %v936, 1.442695
  %v944 = vpow.pop %v943
  %v945 = vpack.c.bf16 %v940, %v938
  %v946 = vpack.c.bf16 %v944, %v942
  %v948 = vsel %vm278, %v945, 0
  %v951 = vsel %vm278, %v946, 0
  %953 = vmatprep.subr.bf16.mxu0 0
  %954 = vmatpush1.bf16.msra.mxu0 0
  %955 = vmatprep.subr.bf16.mxu0 0
  %956 = vmatpush1.bf16.msra.mxu0 0
  %957 = vmatprep.subr.bf16.mxu0 0
  %958 = vmatpush1.bf16.msra.mxu0 0
  %959 = vmatprep.subr.bf16.mxu0 0
  %960 = vmatpush1.bf16.msra.mxu0 0
  %961 = vmatprep.subr.bf16.mxu0 0
  %962 = vmatpush1.bf16.msra.mxu0 0
  %963 = vmatprep.subr.bf16.mxu0 0
  %964 = vmatpush1.bf16.msra.mxu0 0
  %965 = vmatprep.subr.bf16.mxu0 0
  %966 = vmatpush1.bf16.msra.mxu0 1065369472
  %967 = vmatprep.subr.bf16.mxu0 0
  %968 = vmatpush1.bf16.msra.mxu0 1065369472
  %969 = vmatprep.subr.bf16.mxu0 0
  %970 = vmatpush2.bf16.msra.mxu0 0
  %971 = vmatprep.subr.bf16.mxu0 0
  %972 = vmatpush2.bf16.msra.mxu0 0
  %973 = vmatprep.subr.bf16.mxu0 0
  %974 = vmatpush2.bf16.msra.mxu0 0
  %975 = vmatprep.subr.bf16.mxu0 0
  %976 = vmatpush2.bf16.msra.mxu0 0
  %977 = vmatprep.subr.bf16.mxu0 0
  %978 = vmatpush2.bf16.msra.mxu0 0
  %979 = vmatprep.subr.bf16.mxu0 0
  %980 = vmatpush2.bf16.msra.mxu0 0
  %981 = vmatprep.subr.bf16.mxu0 0
  %982 = vmatpush2.bf16.msra.mxu0 0
  %983 = vmatprep.subr.bf16.mxu0 0
  %984 = vmatpush2.bf16.msra.mxu0 0
  %985 = vmatprep.mubr.bf16.mxu0 0
  %986 = vmatmul.mubr.bf16.gmra.mxu0 %v948
  %v987 = vpop.f32.mrf.mxu0
  %v988 = vadd.f32 0.0, %v987
  %v989 = vpop.f32.mrf.mxu0
  %v990 = vpop.f32.mrf.mxu0
  %v991 = vadd.f32 0.0, %v990
  %v992 = vpop.f32.mrf.mxu0
  %993 = vmatprep.mubr.bf16.mxu0 0
  %994 = vmatmul.mubr.bf16.gmra.mxu0 %v951
  %v995 = vpop.f32.mrf.mxu0
  %v996 = vadd.f32 0.0, %v995
  %v997 = vpop.f32.mrf.mxu0
  %v998 = vpop.f32.mrf.mxu0
  %v999 = vadd.f32 0.0, %v998
  %v1000 = vpop.f32.mrf.mxu0
  %1001 = vdwg.mxu0
  %v1002 = vrcp.pop %v988
  %v1003 = vrcp.pop %v991
  %v1004 = vrcp.pop %v996
  %v1005 = vrcp.pop %v999
  %1006 = vrot.lane.b32.xlu0 %v135, 32
  %v1007 = vpop.permute.xlu0 %1006
  %1008 = vrot.lane.b32.xlu0 %v136, 32
  %v1009 = vpop.permute.xlu0 %1008
  %1012 = vmatprep.subr.bf16.mxu0 0
  %1013 = vmatpush1.bf16.msra.mxu0 0
  %1014 = vmatprep.subr.bf16.mxu0 0
  %1015 = vmatpush1.bf16.msra.mxu0 0
  %1016 = vmatprep.subr.bf16.mxu0 0
  %1017 = vmatpush1.bf16.msra.mxu0 0
  %1018 = vmatprep.subr.bf16.mxu0 0
  %1019 = vmatpush1.bf16.msra.mxu0 0
  %1020 = vmatprep.subr.bf16.mxu0 0
  %1021 = vmatpush1.bf16.msra.mxu0 0
  %1022 = vmatprep.subr.bf16.mxu0 0
  %1023 = vmatpush1.bf16.msra.mxu0 0
  %1024 = vmatprep.subr.bf16.mxu0 0
  %1025 = vmatpush1.bf16.msra.mxu0 %v1009
  %1026 = vmatprep.subr.bf16.mxu0 0
  %1027 = vmatpush1.bf16.msra.mxu0 %v1007
  %1028 = vmatprep.subr.bf16.mxu0 0
  %1029 = vmatpush2.bf16.msra.mxu0 0
  %1030 = vmatprep.subr.bf16.mxu0 0
  %1031 = vmatpush2.bf16.msra.mxu0 0
  %1032 = vmatprep.subr.bf16.mxu0 0
  %1033 = vmatpush2.bf16.msra.mxu0 0
  %1034 = vmatprep.subr.bf16.mxu0 0
  %1035 = vmatpush2.bf16.msra.mxu0 0
  %1036 = vmatprep.subr.bf16.mxu0 0
  %1037 = vmatpush2.bf16.msra.mxu0 0
  %1038 = vmatprep.subr.bf16.mxu0 0
  %1039 = vmatpush2.bf16.msra.mxu0 0
  %1040 = vmatprep.subr.bf16.mxu0 0
  %1041 = vmatpush2.bf16.msra.mxu0 0
  %1042 = vmatprep.subr.bf16.mxu0 0
  %1043 = vmatpush2.bf16.msra.mxu0 0
  %1044 = vmatprep.mubr.bf16.mxu0 0
  %1045 = vmatmul.mubr.bf16.gmra.mxu0 %v948
  %v1046 = vpop.f32.mrf.mxu0
  %v1047 = vadd.f32 0.0, %v1046
  %v1048 = vpop.f32.mrf.mxu0
  %v1049 = vpop.f32.mrf.mxu0
  %v1050 = vadd.f32 0.0, %v1049
  %v1051 = vpop.f32.mrf.mxu0
  %1052 = vmatprep.mubr.bf16.mxu0 0
  %1053 = vmatmul.mubr.bf16.gmra.mxu0 %v951
  %v1054 = vpop.f32.mrf.mxu0
  %v1055 = vadd.f32 0.0, %v1054
  %v1056 = vpop.f32.mrf.mxu0
  %v1057 = vpop.f32.mrf.mxu0
  %v1058 = vadd.f32 0.0, %v1057
  %v1059 = vpop.f32.mrf.mxu0
  %1060 = vdwg.mxu0
  %1062 = vset.pattern.permute.xlu0 0
  %1063 = vperm.xlu0 %1062, %v1002
  %v1064 = vpop.permute.xlu0 %1063
  %1067 = vset.pattern.permute.xlu0 0
  %1068 = vperm.xlu0 %1067, %v1003
  %v1069 = vpop.permute.xlu0 %1068
  %1072 = vset.pattern.permute.xlu0 0
  %1073 = vperm.xlu0 %1072, %v1004
  %v1074 = vpop.permute.xlu0 %1073
  %1077 = vset.pattern.permute.xlu0 0
  %1078 = vperm.xlu0 %1077, %v1005
  %v1079 = vpop.permute.xlu0 %1078
  %v1081 = vmul.f32 %v1047, %v1064
  %v1082 = vmul.f32 %v1050, %v1069
  %v1083 = vmul.f32 %v1055, %v1074
  %v1084 = vmul.f32 %v1058, %v1079
  %1089 = vrot.lane.b32.xlu0 %v1081, 96
  %v1090 = vpop.permute.xlu0 %1089
  %1091 = vrot.lane.b32.xlu0 %v1082, 96
  %v1092 = vpop.permute.xlu0 %1091
  %1093 = vrot.lane.b32.xlu0 %v1083, 96
  %v1094 = vpop.permute.xlu0 %1093
  %1095 = vrot.lane.b32.xlu0 %v1084, 96
  %v1096 = vpop.permute.xlu0 %1095
  %vm1101 = vcmask 1048320
  %1102 = vst.msk [vmem:[#allocation2] sm:$0xff] %vm1101, %v1090
  %1103 = vst.msk [vmem:[#allocation2 + $0x8] sm:$0xff] %vm1101, %v1092
  %1104 = vst.msk [vmem:[#allocation2 + $0x10] sm:$0xff] %vm1101, %v1094
  %1105 = vst.msk [vmem:[#allocation2 + $0x18] sm:$0xff] %vm1101, %v1096
  %v1106 = vld [vmem:[#allocation2] sm:$0xff]
  %v1107 = vld [vmem:[#allocation2 + $0x8] sm:$0xff]
  %v1108 = vld [vmem:[#allocation2 + $0x10] sm:$0xff]
  %v1109 = vld [vmem:[#allocation2 + $0x18] sm:$0xff]
  %v1110 = vld [vmem:[%s5] sm:$0x1]
  %v1112 = vlaneseq
  %v1113 = vshrl.u32 %v1112, 7
  %v1114 = vsub.s32 0, %v1113
  %v1115 = vrot.slane %v1110, %v1114
  %v1117 = vadd.f32 %v1106, %v1115
  %v1118 = vadd.f32 %v1107, %v1115
  %v1119 = vadd.f32 %v1108, %v1115
  %v1120 = vadd.f32 %v1109, %v1115
  %vm1121 = vcmp.gt.f32.partialorder %v1117, 0.0
  %vm1122 = vcmp.gt.f32.partialorder %v1118, 0.0
  %vm1123 = vcmp.gt.f32.partialorder %v1119, 0.0
  %vm1124 = vcmp.gt.f32.partialorder %v1120, 0.0
  %v1125 = vmin.f32 %v1117, 0.0
  %v1126 = vmin.f32 %v1118, 0.0
  %v1127 = vmin.f32 %v1119, 0.0
  %v1128 = vmin.f32 %v1120, 0.0
  %v1129 = vmul.f32 %v1125, 1.442695
  %v1130 = vpow.pop %v1129
  %v1131 = vmul.f32 %v1126, 1.442695
  %v1132 = vpow.pop %v1131
  %v1133 = vmul.f32 %v1127, 1.442695
  %v1134 = vpow.pop %v1133
  %v1135 = vmul.f32 %v1128, 1.442695
  %v1136 = vpow.pop %v1135
  %v1137 = vsub.f32 %v1130, 1.0
  %v1138 = vsub.f32 %v1132, 1.0
  %v1139 = vsub.f32 %v1134, 1.0
  %v1140 = vsub.f32 %v1136, 1.0
  %v1141 = vsel %vm1121, %v1117, %v1137
  %v1142 = vsel %vm1122, %v1118, %v1138
  %v1143 = vsel %vm1123, %v1119, %v1139
  %v1144 = vsel %vm1124, %v1120, %v1140
  %v1145 = vpack.c.bf16 %v1142, %v1141
  %v1146 = vpack.c.bf16 %v1144, %v1143
  %v1147 = vld [vmem:[%s6] sm:$0xf]
  %v1148 = vld [vmem:[%s6 + $0x4] sm:$0xf]
  %v1149 = vld [vmem:[%s6 + $0x8] sm:$0xf]
  %v1150 = vld [vmem:[%s6 + $0xc] sm:$0xf]
  %v1151 = vld [vmem:[%s6 + $0x10] sm:$0xf]
  %v1152 = vld [vmem:[%s6 + $0x14] sm:$0xf]
  %v1153 = vld [vmem:[%s6 + $0x18] sm:$0xf]
  %v1154 = vld [vmem:[%s6 + $0x1c] sm:$0xf]
  %v1155 = vld [vmem:[%s6 + $0x20] sm:$0xf]
  %v1156 = vld [vmem:[%s6 + $0x24] sm:$0xf]
  %v1157 = vld [vmem:[%s6 + $0x28] sm:$0xf]
  %v1158 = vld [vmem:[%s6 + $0x2c] sm:$0xf]
  %v1159 = vld [vmem:[%s6 + $0x30] sm:$0xf]
  %v1160 = vld [vmem:[%s6 + $0x34] sm:$0xf]
  %v1161 = vld [vmem:[%s6 + $0x38] sm:$0xf]
  %v1162 = vld [vmem:[%s6 + $0x3c] sm:$0xf]
  %v1179 = vunpack.c.l.b16 %v1147
  %v1180 = vunpack.c.l.b16 %v1148
  %v1181 = vunpack.c.l.b16 %v1149
  %v1182 = vunpack.c.l.b16 %v1150
  %v1183 = vunpack.c.l.b16 %v1151
  %v1184 = vunpack.c.l.b16 %v1152
  %v1185 = vunpack.c.l.b16 %v1153
  %v1186 = vunpack.c.l.b16 %v1154
  %v1187 = vunpack.c.l.b16 %v1155
  %v1188 = vunpack.c.l.b16 %v1156
  %v1189 = vunpack.c.l.b16 %v1157
  %v1190 = vunpack.c.l.b16 %v1158
  %v1191 = vunpack.c.l.b16 %v1159
  %v1192 = vunpack.c.l.b16 %v1160
  %v1193 = vunpack.c.l.b16 %v1161
  %v1194 = vunpack.c.l.b16 %v1162
  %v1195 = vpack.c.b16 %v1180, %v1179
  %v1196 = vpack.c.b16 %v1182, %v1181
  %v1197 = vpack.c.b16 %v1184, %v1183
  %v1198 = vpack.c.b16 %v1186, %v1185
  %v1199 = vpack.c.b16 %v1188, %v1187
  %v1200 = vpack.c.b16 %v1190, %v1189
  %v1201 = vpack.c.b16 %v1192, %v1191
  %v1202 = vpack.c.b16 %v1194, %v1193
  %1211 = vmatprep.subr.bf16.mxu0 0
  %1212 = vmatpush1.bf16.msra.mxu0 %v1202
  %1213 = vmatprep.subr.bf16.mxu0 0
  %1214 = vmatpush1.bf16.msra.mxu0 %v1201
  %1215 = vmatprep.subr.bf16.mxu0 0
  %1216 = vmatpush1.bf16.msra.mxu0 %v1200
  %1217 = vmatprep.subr.bf16.mxu0 0
  %1218 = vmatpush1.bf16.msra.mxu0 %v1199
  %1219 = vmatprep.subr.bf16.mxu0 0
  %1220 = vmatpush1.bf16.msra.mxu0 %v1198
  %1221 = vmatprep.subr.bf16.mxu0 0
  %1222 = vmatpush1.bf16.msra.mxu0 %v1197
  %1223 = vmatprep.subr.bf16.mxu0 0
  %1224 = vmatpush1.bf16.msra.mxu0 %v1196
  %1225 = vmatprep.subr.bf16.mxu0 0
  %1226 = vmatpush1.bf16.msra.mxu0 %v1195
  %1227 = vmatprep.subr.bf16.mxu0 0
  %1228 = vmatpush2.bf16.msra.mxu0 0
  %1229 = vmatprep.subr.bf16.mxu0 0
  %1230 = vmatpush2.bf16.msra.mxu0 0
  %1231 = vmatprep.subr.bf16.mxu0 0
  %1232 = vmatpush2.bf16.msra.mxu0 0
  %1233 = vmatprep.subr.bf16.mxu0 0
  %1234 = vmatpush2.bf16.msra.mxu0 0
  %1235 = vmatprep.subr.bf16.mxu0 0
  %1236 = vmatpush2.bf16.msra.mxu0 0
  %1237 = vmatprep.subr.bf16.mxu0 0
  %1238 = vmatpush2.bf16.msra.mxu0 0
  %1239 = vmatprep.subr.bf16.mxu0 0
  %1240 = vmatpush2.bf16.msra.mxu0 0
  %1241 = vmatprep.subr.bf16.mxu0 0
  %1242 = vmatpush2.bf16.msra.mxu0 0
  %1243 = vmatprep.mubr.bf16.mxu0 0
  %1244 = vmatmul.mubr.bf16.gmra.mxu0 %v1145
  %v1245 = vpop.f32.mrf.mxu0
  %v1246 = vadd.f32 0.0, %v1245
  %v1247 = vpop.f32.mrf.mxu0
  %v1248 = vpop.f32.mrf.mxu0
  %v1249 = vadd.f32 0.0, %v1248
  %v1250 = vpop.f32.mrf.mxu0
  %1251 = vmatprep.mubr.bf16.mxu0 0
  %1252 = vmatmul.mubr.bf16.gmra.mxu0 %v1146
  %v1253 = vpop.f32.mrf.mxu0
  %v1254 = vadd.f32 0.0, %v1253
  %v1255 = vpop.f32.mrf.mxu0
  %v1256 = vpop.f32.mrf.mxu0
  %v1257 = vadd.f32 0.0, %v1256
  %v1258 = vpop.f32.mrf.mxu0
  %1259 = vdwg.mxu0
  %v1260 = vpack.c.bf16 %v1249, %v1246
  %v1261 = vpack.c.bf16 %v1257, %v1254
  %v1262 = vld [vmem:[%s8] sm:$0xf]
  %v1263 = vld [vmem:[%s8 + $0x4] sm:$0xf]
  %v1264 = vld [vmem:[%s8 + $0x8] sm:$0xf]
  %v1265 = vld [vmem:[%s8 + $0xc] sm:$0xf]
  %v1266 = vld [vmem:[%s8 + $0x10] sm:$0xf]
  %v1267 = vld [vmem:[%s8 + $0x14] sm:$0xf]
  %v1268 = vld [vmem:[%s8 + $0x18] sm:$0xf]
  %v1269 = vld [vmem:[%s8 + $0x1c] sm:$0xf]
  %v1270 = vld [vmem:[%s8 + $0x20] sm:$0xf]
  %v1271 = vld [vmem:[%s8 + $0x24] sm:$0xf]
  %v1272 = vld [vmem:[%s8 + $0x28] sm:$0xf]
  %v1273 = vld [vmem:[%s8 + $0x2c] sm:$0xf]
  %v1274 = vld [vmem:[%s8 + $0x30] sm:$0xf]
  %v1275 = vld [vmem:[%s8 + $0x34] sm:$0xf]
  %v1276 = vld [vmem:[%s8 + $0x38] sm:$0xf]
  %v1277 = vld [vmem:[%s8 + $0x3c] sm:$0xf]
  %v1294 = vunpack.c.l.b16 %v1262
  %v1295 = vunpack.c.l.b16 %v1263
  %v1296 = vunpack.c.l.b16 %v1264
  %v1297 = vunpack.c.l.b16 %v1265
  %v1298 = vunpack.c.l.b16 %v1266
  %v1299 = vunpack.c.l.b16 %v1267
  %v1300 = vunpack.c.l.b16 %v1268
  %v1301 = vunpack.c.l.b16 %v1269
  %v1302 = vunpack.c.l.b16 %v1270
  %v1303 = vunpack.c.l.b16 %v1271
  %v1304 = vunpack.c.l.b16 %v1272
  %v1305 = vunpack.c.l.b16 %v1273
  %v1306 = vunpack.c.l.b16 %v1274
  %v1307 = vunpack.c.l.b16 %v1275
  %v1308 = vunpack.c.l.b16 %v1276
  %v1309 = vunpack.c.l.b16 %v1277
  %v1310 = vpack.c.b16 %v1295, %v1294
  %v1311 = vpack.c.b16 %v1297, %v1296
  %v1312 = vpack.c.b16 %v1299, %v1298
  %v1313 = vpack.c.b16 %v1301, %v1300
  %v1314 = vpack.c.b16 %v1303, %v1302
  %v1315 = vpack.c.b16 %v1305, %v1304
  %v1316 = vpack.c.b16 %v1307, %v1306
  %v1317 = vpack.c.b16 %v1309, %v1308
  %1326 = vmatprep.subr.bf16.mxu0 0
  %1327 = vmatpush1.bf16.msra.mxu0 %v1317
  %1328 = vmatprep.subr.bf16.mxu0 0
  %1329 = vmatpush1.bf16.msra.mxu0 %v1316
  %1330 = vmatprep.subr.bf16.mxu0 0
  %1331 = vmatpush1.bf16.msra.mxu0 %v1315
  %1332 = vmatprep.subr.bf16.mxu0 0
  %1333 = vmatpush1.bf16.msra.mxu0 %v1314
  %1334 = vmatprep.subr.bf16.mxu0 0
  %1335 = vmatpush1.bf16.msra.mxu0 %v1313
  %1336 = vmatprep.subr.bf16.mxu0 0
  %1337 = vmatpush1.bf16.msra.mxu0 %v1312
  %1338 = vmatprep.subr.bf16.mxu0 0
  %1339 = vmatpush1.bf16.msra.mxu0 %v1311
  %1340 = vmatprep.subr.bf16.mxu0 0
  %1341 = vmatpush1.bf16.msra.mxu0 %v1310
  %1342 = vmatprep.subr.bf16.mxu0 0
  %1343 = vmatpush2.bf16.msra.mxu0 0
  %1344 = vmatprep.subr.bf16.mxu0 0
  %1345 = vmatpush2.bf16.msra.mxu0 0
  %1346 = vmatprep.subr.bf16.mxu0 0
  %1347 = vmatpush2.bf16.msra.mxu0 0
  %1348 = vmatprep.subr.bf16.mxu0 0
  %1349 = vmatpush2.bf16.msra.mxu0 0
  %1350 = vmatprep.subr.bf16.mxu0 0
  %1351 = vmatpush2.bf16.msra.mxu0 0
  %1352 = vmatprep.subr.bf16.mxu0 0
  %1353 = vmatpush2.bf16.msra.mxu0 0
  %1354 = vmatprep.subr.bf16.mxu0 0
  %1355 = vmatpush2.bf16.msra.mxu0 0
  %1356 = vmatprep.subr.bf16.mxu0 0
  %1357 = vmatpush2.bf16.msra.mxu0 0
  %1358 = vmatprep.mubr.bf16.mxu0 0
  %1359 = vmatmul.mubr.bf16.gmra.mxu0 %v1145
  %v1360 = vpop.f32.mrf.mxu0
  %v1361 = vadd.f32 0.0, %v1360
  %v1362 = vpop.f32.mrf.mxu0
  %v1363 = vpop.f32.mrf.mxu0
  %v1364 = vadd.f32 0.0, %v1363
  %v1365 = vpop.f32.mrf.mxu0
  %1366 = vmatprep.mubr.bf16.mxu0 0
  %1367 = vmatmul.mubr.bf16.gmra.mxu0 %v1146
  %v1368 = vpop.f32.mrf.mxu0
  %v1369 = vadd.f32 0.0, %v1368
  %v1370 = vpop.f32.mrf.mxu0
  %v1371 = vpop.f32.mrf.mxu0
  %v1372 = vadd.f32 0.0, %v1371
  %v1373 = vpop.f32.mrf.mxu0
  %1374 = vdwg.mxu0
  %v1375 = vld [vmem:[%s7] sm:$0x3]
  %1376 = vmatprep.subr.bf16.mxu0 0
  %1377 = vmatpush1.bf16.xpose.msra.mxu0 0
  %1378 = vmatprep.subr.bf16.mxu0 0
  %1379 = vmatpush1.bf16.xpose.msra.mxu0 0
  %1380 = vmatprep.subr.bf16.mxu0 0
  %1381 = vmatpush1.bf16.xpose.msra.mxu0 0
  %1382 = vmatprep.subr.bf16.mxu0 0
  %1383 = vmatpush1.bf16.xpose.msra.mxu0 0
  %1384 = vmatprep.subr.bf16.mxu0 0
  %1385 = vmatpush1.bf16.xpose.msra.mxu0 0
  %1386 = vmatprep.subr.bf16.mxu0 0
  %1387 = vmatpush1.bf16.xpose.msra.mxu0 0
  %1388 = vmatprep.subr.bf16.mxu0 0
  %1389 = vmatpush1.bf16.xpose.msra.mxu0 %v1146
  %1390 = vmatprep.subr.bf16.mxu0 0
  %1391 = vmatpush1.bf16.xpose.msra.mxu0 %v1145
  %1392 = vmatprep.subr.bf16.mxu0 0
  %1393 = vmatpush2.bf16.xpose.msra.mxu0 0
  %1394 = vmatprep.subr.bf16.mxu0 0
  %1395 = vmatpush2.bf16.xpose.msra.mxu0 0
  %1396 = vmatprep.subr.bf16.mxu0 0
  %1397 = vmatpush2.bf16.xpose.msra.mxu0 0
  %1398 = vmatprep.subr.bf16.mxu0 0
  %1399 = vmatpush2.bf16.xpose.msra.mxu0 0
  %1400 = vmatprep.subr.bf16.mxu0 0
  %1401 = vmatpush2.bf16.xpose.msra.mxu0 0
  %1402 = vmatprep.subr.bf16.mxu0 0
  %1403 = vmatpush2.bf16.xpose.msra.mxu0 0
  %1404 = vmatprep.subr.bf16.mxu0 0
  %1405 = vmatpush2.bf16.xpose.msra.mxu0 0
  %1406 = vmatprep.subr.bf16.mxu0 0
  %1407 = vmatpush2.bf16.xpose.msra.mxu0 0
  %1408 = vmatprep.mubr.bf16.mxu0 0
  %1409 = vmatmul.mubr.bf16.gmra.mxu0 %v1375
  %v1410 = vpop.f32.mrf.mxu0
  %v1411 = vadd.f32 0.0, %v1410
  %v1412 = vpop.f32.mrf.mxu0
  %v1413 = vpop.f32.mrf.mxu0
  %v1414 = vpop.f32.mrf.mxu0
  %1415 = vdwg.mxu0
  %1417 = vset.pattern.permute.xlu0 0
  %1418 = vperm.xlu0 %1417, %v1361
  %v1419 = vpop.permute.xlu0 %1418
  %1422 = vset.pattern.permute.xlu0 0
  %1423 = vperm.xlu0 %1422, %v1364
  %v1424 = vpop.permute.xlu0 %1423
  %1427 = vset.pattern.permute.xlu0 0
  %1428 = vperm.xlu0 %1427, %v1369
  %v1429 = vpop.permute.xlu0 %1428
  %1432 = vset.pattern.permute.xlu0 0
  %1433 = vperm.xlu0 %1432, %v1372
  %v1434 = vpop.permute.xlu0 %1433
  %v1436 = vlaneseq
  %v1437 = vshrl.u32 %v1436, 7
  %v1438 = vsub.s32 0, %v1437
  %v1439 = vrot.slane %v1411, %v1438
  %v1440 = vadd.f32 %v1419, %v1439
  %v1441 = vadd.f32 %v1424, %v1439
  %v1442 = vadd.f32 %v1429, %v1439
  %v1443 = vadd.f32 %v1434, %v1439
  %v1444 = vmul.f32 %v1440, 0.2
  %v1445 = vmul.f32 %v1441, 0.2
  %v1446 = vmul.f32 %v1442, 0.2
  %v1447 = vmul.f32 %v1443, 0.2
  %v1448 = vmax.f32 %v1440, %v1444
  %v1449 = vmax.f32 %v1441, %v1445
  %v1450 = vmax.f32 %v1442, %v1446
  %v1451 = vmax.f32 %v1443, %v1447
  %v1452 = vadd.f32 %v1448, %v61
  %v1453 = vadd.f32 %v1449, %v62
  %v1454 = vadd.f32 %v1450, %v63
  %v1455 = vadd.f32 %v1451, %v64
  %v1456 = vsel %vm278, %v1452, -inf
  %1457 = vmax.xlane.f32.xlu0 %v1456
  %v1458 = vpop.xlane.xlu0 %1457
  %v1459 = vsel %vm278, %v1453, -inf
  %1460 = vmax.xlane.f32.xlu0 %v1459
  %v1461 = vpop.xlane.xlu0 %1460
  %v1462 = vsel %vm278, %v1454, -inf
  %1463 = vmax.xlane.f32.xlu0 %v1462
  %v1464 = vpop.xlane.xlu0 %1463
  %v1465 = vsel %vm278, %v1455, -inf
  %1466 = vmax.xlane.f32.xlu0 %v1465
  %v1467 = vpop.xlane.xlu0 %1466
  %v1468 = vsub.f32 %v1452, %v1458
  %v1469 = vsub.f32 %v1453, %v1461
  %v1470 = vsub.f32 %v1454, %v1464
  %v1471 = vsub.f32 %v1455, %v1467
  %v1472 = vmul.f32 %v1468, 1.442695
  %v1473 = vpow.pop %v1472
  %v1474 = vmul.f32 %v1469, 1.442695
  %v1475 = vpow.pop %v1474
  %v1476 = vmul.f32 %v1470, 1.442695
  %v1477 = vpow.pop %v1476
  %v1478 = vmul.f32 %v1471, 1.442695
  %v1479 = vpow.pop %v1478
  %v1480 = vpack.c.bf16 %v1475, %v1473
  %v1481 = vpack.c.bf16 %v1479, %v1477
  %v1483 = vsel %vm278, %v1480, 0
  %v1486 = vsel %vm278, %v1481, 0
  %1488 = vmatprep.subr.bf16.mxu0 0
  %1489 = vmatpush1.bf16.msra.mxu0 0
  %1490 = vmatprep.subr.bf16.mxu0 0
  %1491 = vmatpush1.bf16.msra.mxu0 0
  %1492 = vmatprep.subr.bf16.mxu0 0
  %1493 = vmatpush1.bf16.msra.mxu0 0
  %1494 = vmatprep.subr.bf16.mxu0 0
  %1495 = vmatpush1.bf16.msra.mxu0 0
  %1496 = vmatprep.subr.bf16.mxu0 0
  %1497 = vmatpush1.bf16.msra.mxu0 0
  %1498 = vmatprep.subr.bf16.mxu0 0
  %1499 = vmatpush1.bf16.msra.mxu0 0
  %1500 = vmatprep.subr.bf16.mxu0 0
  %1501 = vmatpush1.bf16.msra.mxu0 1065369472
  %1502 = vmatprep.subr.bf16.mxu0 0
  %1503 = vmatpush1.bf16.msra.mxu0 1065369472
  %1504 = vmatprep.subr.bf16.mxu0 0
  %1505 = vmatpush2.bf16.msra.mxu0 0
  %1506 = vmatprep.subr.bf16.mxu0 0
  %1507 = vmatpush2.bf16.msra.mxu0 0
  %1508 = vmatprep.subr.bf16.mxu0 0
  %1509 = vmatpush2.bf16.msra.mxu0 0
  %1510 = vmatprep.subr.bf16.mxu0 0
  %1511 = vmatpush2.bf16.msra.mxu0 0
  %1512 = vmatprep.subr.bf16.mxu0 0
  %1513 = vmatpush2.bf16.msra.mxu0 0
  %1514 = vmatprep.subr.bf16.mxu0 0
  %1515 = vmatpush2.bf16.msra.mxu0 0
  %1516 = vmatprep.subr.bf16.mxu0 0
  %1517 = vmatpush2.bf16.msra.mxu0 0
  %1518 = vmatprep.subr.bf16.mxu0 0
  %1519 = vmatpush2.bf16.msra.mxu0 0
  %1520 = vmatprep.mubr.bf16.mxu0 0
  %1521 = vmatmul.mubr.bf16.gmra.mxu0 %v1483
  %v1522 = vpop.f32.mrf.mxu0
  %v1523 = vadd.f32 0.0, %v1522
  %v1524 = vpop.f32.mrf.mxu0
  %v1525 = vpop.f32.mrf.mxu0
  %v1526 = vadd.f32 0.0, %v1525
  %v1527 = vpop.f32.mrf.mxu0
  %1528 = vmatprep.mubr.bf16.mxu0 0
  %1529 = vmatmul.mubr.bf16.gmra.mxu0 %v1486
  %v1530 = vpop.f32.mrf.mxu0
  %v1531 = vadd.f32 0.0, %v1530
  %v1532 = vpop.f32.mrf.mxu0
  %v1533 = vpop.f32.mrf.mxu0
  %v1534 = vadd.f32 0.0, %v1533
  %v1535 = vpop.f32.mrf.mxu0
  %1536 = vdwg.mxu0
  %v1537 = vrcp.pop %v1523
  %v1538 = vrcp.pop %v1526
  %v1539 = vrcp.pop %v1531
  %v1540 = vrcp.pop %v1534
  %1541 = vmatprep.subr.bf16.mxu0 0
  %1542 = vmatpush1.bf16.msra.mxu0 0
  %1543 = vmatprep.subr.bf16.mxu0 0
  %1544 = vmatpush1.bf16.msra.mxu0 0
  %1545 = vmatprep.subr.bf16.mxu0 0
  %1546 = vmatpush1.bf16.msra.mxu0 0
  %1547 = vmatprep.subr.bf16.mxu0 0
  %1548 = vmatpush1.bf16.msra.mxu0 0
  %1549 = vmatprep.subr.bf16.mxu0 0
  %1550 = vmatpush1.bf16.msra.mxu0 0
  %1551 = vmatprep.subr.bf16.mxu0 0
  %1552 = vmatpush1.bf16.msra.mxu0 0
  %1553 = vmatprep.subr.bf16.mxu0 0
  %1554 = vmatpush1.bf16.msra.mxu0 %v1261
  %1555 = vmatprep.subr.bf16.mxu0 0
  %1556 = vmatpush1.bf16.msra.mxu0 %v1260
  %1557 = vmatprep.subr.bf16.mxu0 0
  %1558 = vmatpush2.bf16.msra.mxu0 0
  %1559 = vmatprep.subr.bf16.mxu0 0
  %1560 = vmatpush2.bf16.msra.mxu0 0
  %1561 = vmatprep.subr.bf16.mxu0 0
  %1562 = vmatpush2.bf16.msra.mxu0 0
  %1563 = vmatprep.subr.bf16.mxu0 0
  %1564 = vmatpush2.bf16.msra.mxu0 0
  %1565 = vmatprep.subr.bf16.mxu0 0
  %1566 = vmatpush2.bf16.msra.mxu0 0
  %1567 = vmatprep.subr.bf16.mxu0 0
  %1568 = vmatpush2.bf16.msra.mxu0 0
  %1569 = vmatprep.subr.bf16.mxu0 0
  %1570 = vmatpush2.bf16.msra.mxu0 0
  %1571 = vmatprep.subr.bf16.mxu0 0
  %1572 = vmatpush2.bf16.msra.mxu0 0
  %1573 = vmatprep.mubr.bf16.mxu0 0
  %1574 = vmatmul.mubr.bf16.gmra.mxu0 %v1483
  %v1575 = vpop.f32.mrf.mxu0
  %v1576 = vadd.f32 0.0, %v1575
  %v1577 = vpop.f32.mrf.mxu0
  %v1578 = vpop.f32.mrf.mxu0
  %v1579 = vadd.f32 0.0, %v1578
  %v1580 = vpop.f32.mrf.mxu0
  %1581 = vmatprep.mubr.bf16.mxu0 0
  %1582 = vmatmul.mubr.bf16.gmra.mxu0 %v1486
  %v1583 = vpop.f32.mrf.mxu0
  %v1584 = vadd.f32 0.0, %v1583
  %v1585 = vpop.f32.mrf.mxu0
  %v1586 = vpop.f32.mrf.mxu0
  %v1587 = vadd.f32 0.0, %v1586
  %v1588 = vpop.f32.mrf.mxu0
  %1589 = vdwg.mxu0
  %1591 = vset.pattern.permute.xlu0 0
  %1592 = vperm.xlu0 %1591, %v1537
  %v1593 = vpop.permute.xlu0 %1592
  %1596 = vset.pattern.permute.xlu0 0
  %1597 = vperm.xlu0 %1596, %v1538
  %v1598 = vpop.permute.xlu0 %1597
  %1601 = vset.pattern.permute.xlu0 0
  %1602 = vperm.xlu0 %1601, %v1539
  %v1603 = vpop.permute.xlu0 %1602
  %1606 = vset.pattern.permute.xlu0 0
  %1607 = vperm.xlu0 %1606, %v1540
  %v1608 = vpop.permute.xlu0 %1607
  %v1610 = vmul.f32 %v1576, %v1593
  %v1611 = vmul.f32 %v1579, %v1598
  %v1612 = vmul.f32 %v1584, %v1603
  %v1613 = vmul.f32 %v1587, %v1608
  %1614 = vst.msk [vmem:[#allocation2] sm:$0xff] %vm278, %v1610
  %1615 = vst.msk [vmem:[#allocation2 + $0x8] sm:$0xff] %vm278, %v1611
  %1616 = vst.msk [vmem:[#allocation2 + $0x10] sm:$0xff] %vm278, %v1612
  %1617 = vst.msk [vmem:[#allocation2 + $0x18] sm:$0xff] %vm278, %v1613
  %1618 = vset.pattern.permute.xlu0 1
  %1619 = vperm.xlu0 %1618, %v1361
  %v1620 = vpop.permute.xlu0 %1619
  %1622 = vset.pattern.permute.xlu0 1
  %1623 = vperm.xlu0 %1622, %v1364
  %v1624 = vpop.permute.xlu0 %1623
  %1626 = vset.pattern.permute.xlu0 1
  %1627 = vperm.xlu0 %1626, %v1369
  %v1628 = vpop.permute.xlu0 %1627
  %1630 = vset.pattern.permute.xlu0 1
  %1631 = vperm.xlu0 %1630, %v1372
  %v1632 = vpop.permute.xlu0 %1631
  %v1634 = vlaneseq
  %v1635 = vshrl.u32 %v1634, 7
  %v1636 = vsub.s32 1, %v1635
  %v1637 = vrot.slane %v1411, %v1636
  %v1638 = vadd.f32 %v1620, %v1637
  %v1639 = vadd.f32 %v1624, %v1637
  %v1640 = vadd.f32 %v1628, %v1637
  %v1641 = vadd.f32 %v1632, %v1637
  %v1642 = vmul.f32 %v1638, 0.2
  %v1643 = vmul.f32 %v1639, 0.2
  %v1644 = vmul.f32 %v1640, 0.2
  %v1645 = vmul.f32 %v1641, 0.2
  %v1646 = vmax.f32 %v1638, %v1642
  %v1647 = vmax.f32 %v1639, %v1643
  %v1648 = vmax.f32 %v1640, %v1644
  %v1649 = vmax.f32 %v1641, %v1645
  %v1650 = vadd.f32 %v1646, %v61
  %v1651 = vadd.f32 %v1647, %v62
  %v1652 = vadd.f32 %v1648, %v63
  %v1653 = vadd.f32 %v1649, %v64
  %v1654 = vsel %vm278, %v1650, -inf
  %1655 = vmax.xlane.f32.xlu0 %v1654
  %v1656 = vpop.xlane.xlu0 %1655
  %v1657 = vsel %vm278, %v1651, -inf
  %1658 = vmax.xlane.f32.xlu0 %v1657
  %v1659 = vpop.xlane.xlu0 %1658
  %v1660 = vsel %vm278, %v1652, -inf
  %1661 = vmax.xlane.f32.xlu0 %v1660
  %v1662 = vpop.xlane.xlu0 %1661
  %v1663 = vsel %vm278, %v1653, -inf
  %1664 = vmax.xlane.f32.xlu0 %v1663
  %v1665 = vpop.xlane.xlu0 %1664
  %v1666 = vsub.f32 %v1650, %v1656
  %v1667 = vsub.f32 %v1651, %v1659
  %v1668 = vsub.f32 %v1652, %v1662
  %v1669 = vsub.f32 %v1653, %v1665
  %v1670 = vmul.f32 %v1666, 1.442695
  %v1671 = vpow.pop %v1670
  %v1672 = vmul.f32 %v1667, 1.442695
  %v1673 = vpow.pop %v1672
  %v1674 = vmul.f32 %v1668, 1.442695
  %v1675 = vpow.pop %v1674
  %v1676 = vmul.f32 %v1669, 1.442695
  %v1677 = vpow.pop %v1676
  %v1678 = vpack.c.bf16 %v1673, %v1671
  %v1679 = vpack.c.bf16 %v1677, %v1675
  %v1681 = vsel %vm278, %v1678, 0
  %v1684 = vsel %vm278, %v1679, 0
  %1686 = vmatprep.subr.bf16.mxu0 0
  %1687 = vmatpush1.bf16.msra.mxu0 0
  %1688 = vmatprep.subr.bf16.mxu0 0
  %1689 = vmatpush1.bf16.msra.mxu0 0
  %1690 = vmatprep.subr.bf16.mxu0 0
  %1691 = vmatpush1.bf16.msra.mxu0 0
  %1692 = vmatprep.subr.bf16.mxu0 0
  %1693 = vmatpush1.bf16.msra.mxu0 0
  %1694 = vmatprep.subr.bf16.mxu0 0
  %1695 = vmatpush1.bf16.msra.mxu0 0
  %1696 = vmatprep.subr.bf16.mxu0 0
  %1697 = vmatpush1.bf16.msra.mxu0 0
  %1698 = vmatprep.subr.bf16.mxu0 0
  %1699 = vmatpush1.bf16.msra.mxu0 1065369472
  %1700 = vmatprep.subr.bf16.mxu0 0
  %1701 = vmatpush1.bf16.msra.mxu0 1065369472
  %1702 = vmatprep.subr.bf16.mxu0 0
  %1703 = vmatpush2.bf16.msra.mxu0 0
  %1704 = vmatprep.subr.bf16.mxu0 0
  %1705 = vmatpush2.bf16.msra.mxu0 0
  %1706 = vmatprep.subr.bf16.mxu0 0
  %1707 = vmatpush2.bf16.msra.mxu0 0
  %1708 = vmatprep.subr.bf16.mxu0 0
  %1709 = vmatpush2.bf16.msra.mxu0 0
  %1710 = vmatprep.subr.bf16.mxu0 0
  %1711 = vmatpush2.bf16.msra.mxu0 0
  %1712 = vmatprep.subr.bf16.mxu0 0
  %1713 = vmatpush2.bf16.msra.mxu0 0
  %1714 = vmatprep.subr.bf16.mxu0 0
  %1715 = vmatpush2.bf16.msra.mxu0 0
  %1716 = vmatprep.subr.bf16.mxu0 0
  %1717 = vmatpush2.bf16.msra.mxu0 0
  %1718 = vmatprep.mubr.bf16.mxu0 0
  %1719 = vmatmul.mubr.bf16.gmra.mxu0 %v1681
  %v1720 = vpop.f32.mrf.mxu0
  %v1721 = vadd.f32 0.0, %v1720
  %v1722 = vpop.f32.mrf.mxu0
  %v1723 = vpop.f32.mrf.mxu0
  %v1724 = vadd.f32 0.0, %v1723
  %v1725 = vpop.f32.mrf.mxu0
  %1726 = vmatprep.mubr.bf16.mxu0 0
  %1727 = vmatmul.mubr.bf16.gmra.mxu0 %v1684
  %v1728 = vpop.f32.mrf.mxu0
  %v1729 = vadd.f32 0.0, %v1728
  %v1730 = vpop.f32.mrf.mxu0
  %v1731 = vpop.f32.mrf.mxu0
  %v1732 = vadd.f32 0.0, %v1731
  %v1733 = vpop.f32.mrf.mxu0
  %1734 = vdwg.mxu0
  %v1735 = vrcp.pop %v1721
  %v1736 = vrcp.pop %v1724
  %v1737 = vrcp.pop %v1729
  %v1738 = vrcp.pop %v1732
  %1741 = vrot.lane.b32.xlu0 %v1260, 96
  %v1742 = vpop.permute.xlu0 %1741
  %1743 = vrot.lane.b32.xlu0 %v1261, 96
  %v1744 = vpop.permute.xlu0 %1743
  %1747 = vmatprep.subr.bf16.mxu0 0
  %1748 = vmatpush1.bf16.msra.mxu0 0
  %1749 = vmatprep.subr.bf16.mxu0 0
  %1750 = vmatpush1.bf16.msra.mxu0 0
  %1751 = vmatprep.subr.bf16.mxu0 0
  %1752 = vmatpush1.bf16.msra.mxu0 0
  %1753 = vmatprep.subr.bf16.mxu0 0
  %1754 = vmatpush1.bf16.msra.mxu0 0
  %1755 = vmatprep.subr.bf16.mxu0 0
  %1756 = vmatpush1.bf16.msra.mxu0 0
  %1757 = vmatprep.subr.bf16.mxu0 0
  %1758 = vmatpush1.bf16.msra.mxu0 0
  %1759 = vmatprep.subr.bf16.mxu0 0
  %1760 = vmatpush1.bf16.msra.mxu0 %v1744
  %1761 = vmatprep.subr.bf16.mxu0 0
  %1762 = vmatpush1.bf16.msra.mxu0 %v1742
  %1763 = vmatprep.subr.bf16.mxu0 0
  %1764 = vmatpush2.bf16.msra.mxu0 0
  %1765 = vmatprep.subr.bf16.mxu0 0
  %1766 = vmatpush2.bf16.msra.mxu0 0
  %1767 = vmatprep.subr.bf16.mxu0 0
  %1768 = vmatpush2.bf16.msra.mxu0 0
  %1769 = vmatprep.subr.bf16.mxu0 0
  %1770 = vmatpush2.bf16.msra.mxu0 0
  %1771 = vmatprep.subr.bf16.mxu0 0
  %1772 = vmatpush2.bf16.msra.mxu0 0
  %1773 = vmatprep.subr.bf16.mxu0 0
  %1774 = vmatpush2.bf16.msra.mxu0 0
  %1775 = vmatprep.subr.bf16.mxu0 0
  %1776 = vmatpush2.bf16.msra.mxu0 0
  %1777 = vmatprep.subr.bf16.mxu0 0
  %1778 = vmatpush2.bf16.msra.mxu0 0
  %1779 = vmatprep.mubr.bf16.mxu0 0
  %1780 = vmatmul.mubr.bf16.gmra.mxu0 %v1681
  %v1781 = vpop.f32.mrf.mxu0
  %v1782 = vadd.f32 0.0, %v1781
  %v1783 = vpop.f32.mrf.mxu0
  %v1784 = vpop.f32.mrf.mxu0
  %v1785 = vadd.f32 0.0, %v1784
  %v1786 = vpop.f32.mrf.mxu0
  %1787 = vmatprep.mubr.bf16.mxu0 0
  %1788 = vmatmul.mubr.bf16.gmra.mxu0 %v1684
  %v1789 = vpop.f32.mrf.mxu0
  %v1790 = vadd.f32 0.0, %v1789
  %v1791 = vpop.f32.mrf.mxu0
  %v1792 = vpop.f32.mrf.mxu0
  %v1793 = vadd.f32 0.0, %v1792
  %v1794 = vpop.f32.mrf.mxu0
  %1795 = vdwg.mxu0
  %1797 = vset.pattern.permute.xlu0 0
  %1798 = vperm.xlu0 %1797, %v1735
  %v1799 = vpop.permute.xlu0 %1798
  %1802 = vset.pattern.permute.xlu0 0
  %1803 = vperm.xlu0 %1802, %v1736
  %v1804 = vpop.permute.xlu0 %1803
  %1807 = vset.pattern.permute.xlu0 0
  %1808 = vperm.xlu0 %1807, %v1737
  %v1809 = vpop.permute.xlu0 %1808
  %1812 = vset.pattern.permute.xlu0 0
  %1813 = vperm.xlu0 %1812, %v1738
  %v1814 = vpop.permute.xlu0 %1813
  %v1816 = vmul.f32 %v1782, %v1799
  %v1817 = vmul.f32 %v1785, %v1804
  %v1818 = vmul.f32 %v1790, %v1809
  %v1819 = vmul.f32 %v1793, %v1814
  %1824 = vrot.lane.b32.xlu0 %v1816, 32
  %v1825 = vpop.permute.xlu0 %1824
  %1826 = vrot.lane.b32.xlu0 %v1817, 32
  %v1827 = vpop.permute.xlu0 %1826
  %1828 = vrot.lane.b32.xlu0 %v1818, 32
  %v1829 = vpop.permute.xlu0 %1828
  %1830 = vrot.lane.b32.xlu0 %v1819, 32
  %v1831 = vpop.permute.xlu0 %1830
  %1836 = vst.msk [vmem:[#allocation2] sm:$0xff] %vm659, %v1825
  %1837 = vst.msk [vmem:[#allocation2 + $0x8] sm:$0xff] %vm659, %v1827
  %1838 = vst.msk [vmem:[#allocation2 + $0x10] sm:$0xff] %vm659, %v1829
  %1839 = vst.msk [vmem:[#allocation2 + $0x18] sm:$0xff] %vm659, %v1831
  %1840 = vset.pattern.permute.xlu0 2
  %1841 = vperm.xlu0 %1840, %v1361
  %v1842 = vpop.permute.xlu0 %1841
  %1844 = vset.pattern.permute.xlu0 2
  %1845 = vperm.xlu0 %1844, %v1364
  %v1846 = vpop.permute.xlu0 %1845
  %1848 = vset.pattern.permute.xlu0 2
  %1849 = vperm.xlu0 %1848, %v1369
  %v1850 = vpop.permute.xlu0 %1849
  %1852 = vset.pattern.permute.xlu0 2
  %1853 = vperm.xlu0 %1852, %v1372
  %v1854 = vpop.permute.xlu0 %1853
  %v1856 = vlaneseq
  %v1857 = vshrl.u32 %v1856, 7
  %v1858 = vsub.s32 2, %v1857
  %v1859 = vrot.slane %v1411, %v1858
  %v1860 = vadd.f32 %v1842, %v1859
  %v1861 = vadd.f32 %v1846, %v1859
  %v1862 = vadd.f32 %v1850, %v1859
  %v1863 = vadd.f32 %v1854, %v1859
  %v1864 = vmul.f32 %v1860, 0.2
  %v1865 = vmul.f32 %v1861, 0.2
  %v1866 = vmul.f32 %v1862, 0.2
  %v1867 = vmul.f32 %v1863, 0.2
  %v1868 = vmax.f32 %v1860, %v1864
  %v1869 = vmax.f32 %v1861, %v1865
  %v1870 = vmax.f32 %v1862, %v1866
  %v1871 = vmax.f32 %v1863, %v1867
  %v1872 = vadd.f32 %v1868, %v61
  %v1873 = vadd.f32 %v1869, %v62
  %v1874 = vadd.f32 %v1870, %v63
  %v1875 = vadd.f32 %v1871, %v64
  %v1876 = vsel %vm278, %v1872, -inf
  %1877 = vmax.xlane.f32.xlu0 %v1876
  %v1878 = vpop.xlane.xlu0 %1877
  %v1879 = vsel %vm278, %v1873, -inf
  %1880 = vmax.xlane.f32.xlu0 %v1879
  %v1881 = vpop.xlane.xlu0 %1880
  %v1882 = vsel %vm278, %v1874, -inf
  %1883 = vmax.xlane.f32.xlu0 %v1882
  %v1884 = vpop.xlane.xlu0 %1883
  %v1885 = vsel %vm278, %v1875, -inf
  %1886 = vmax.xlane.f32.xlu0 %v1885
  %v1887 = vpop.xlane.xlu0 %1886
  %v1888 = vsub.f32 %v1872, %v1878
  %v1889 = vsub.f32 %v1873, %v1881
  %v1890 = vsub.f32 %v1874, %v1884
  %v1891 = vsub.f32 %v1875, %v1887
  %v1892 = vmul.f32 %v1888, 1.442695
  %v1893 = vpow.pop %v1892
  %v1894 = vmul.f32 %v1889, 1.442695
  %v1895 = vpow.pop %v1894
  %v1896 = vmul.f32 %v1890, 1.442695
  %v1897 = vpow.pop %v1896
  %v1898 = vmul.f32 %v1891, 1.442695
  %v1899 = vpow.pop %v1898
  %v1900 = vpack.c.bf16 %v1895, %v1893
  %v1901 = vpack.c.bf16 %v1899, %v1897
  %v1903 = vsel %vm278, %v1900, 0
  %v1906 = vsel %vm278, %v1901, 0
  %1908 = vmatprep.subr.bf16.mxu0 0
  %1909 = vmatpush1.bf16.msra.mxu0 0
  %1910 = vmatprep.subr.bf16.mxu0 0
  %1911 = vmatpush1.bf16.msra.mxu0 0
  %1912 = vmatprep.subr.bf16.mxu0 0
  %1913 = vmatpush1.bf16.msra.mxu0 0
  %1914 = vmatprep.subr.bf16.mxu0 0
  %1915 = vmatpush1.bf16.msra.mxu0 0
  %1916 = vmatprep.subr.bf16.mxu0 0
  %1917 = vmatpush1.bf16.msra.mxu0 0
  %1918 = vmatprep.subr.bf16.mxu0 0
  %1919 = vmatpush1.bf16.msra.mxu0 0
  %1920 = vmatprep.subr.bf16.mxu0 0
  %1921 = vmatpush1.bf16.msra.mxu0 1065369472
  %1922 = vmatprep.subr.bf16.mxu0 0
  %1923 = vmatpush1.bf16.msra.mxu0 1065369472
  %1924 = vmatprep.subr.bf16.mxu0 0
  %1925 = vmatpush2.bf16.msra.mxu0 0
  %1926 = vmatprep.subr.bf16.mxu0 0
  %1927 = vmatpush2.bf16.msra.mxu0 0
  %1928 = vmatprep.subr.bf16.mxu0 0
  %1929 = vmatpush2.bf16.msra.mxu0 0
  %1930 = vmatprep.subr.bf16.mxu0 0
  %1931 = vmatpush2.bf16.msra.mxu0 0
  %1932 = vmatprep.subr.bf16.mxu0 0
  %1933 = vmatpush2.bf16.msra.mxu0 0
  %1934 = vmatprep.subr.bf16.mxu0 0
  %1935 = vmatpush2.bf16.msra.mxu0 0
  %1936 = vmatprep.subr.bf16.mxu0 0
  %1937 = vmatpush2.bf16.msra.mxu0 0
  %1938 = vmatprep.subr.bf16.mxu0 0
  %1939 = vmatpush2.bf16.msra.mxu0 0
  %1940 = vmatprep.mubr.bf16.mxu0 0
  %1941 = vmatmul.mubr.bf16.gmra.mxu0 %v1903
  %v1942 = vpop.f32.mrf.mxu0
  %v1943 = vadd.f32 0.0, %v1942
  %v1944 = vpop.f32.mrf.mxu0
  %v1945 = vpop.f32.mrf.mxu0
  %v1946 = vadd.f32 0.0, %v1945
  %v1947 = vpop.f32.mrf.mxu0
  %1948 = vmatprep.mubr.bf16.mxu0 0
  %1949 = vmatmul.mubr.bf16.gmra.mxu0 %v1906
  %v1950 = vpop.f32.mrf.mxu0
  %v1951 = vadd.f32 0.0, %v1950
  %v1952 = vpop.f32.mrf.mxu0
  %v1953 = vpop.f32.mrf.mxu0
  %v1954 = vadd.f32 0.0, %v1953
  %v1955 = vpop.f32.mrf.mxu0
  %1956 = vdwg.mxu0
  %v1957 = vrcp.pop %v1943
  %v1958 = vrcp.pop %v1946
  %v1959 = vrcp.pop %v1951
  %v1960 = vrcp.pop %v1954
  %1961 = vrot.lane.b32.xlu0 %v1260, 64
  %v1962 = vpop.permute.xlu0 %1961
  %1963 = vrot.lane.b32.xlu0 %v1261, 64
  %v1964 = vpop.permute.xlu0 %1963
  %1967 = vmatprep.subr.bf16.mxu0 0
  %1968 = vmatpush1.bf16.msra.mxu0 0
  %1969 = vmatprep.subr.bf16.mxu0 0
  %1970 = vmatpush1.bf16.msra.mxu0 0
  %1971 = vmatprep.subr.bf16.mxu0 0
  %1972 = vmatpush1.bf16.msra.mxu0 0
  %1973 = vmatprep.subr.bf16.mxu0 0
  %1974 = vmatpush1.bf16.msra.mxu0 0
  %1975 = vmatprep.subr.bf16.mxu0 0
  %1976 = vmatpush1.bf16.msra.mxu0 0
  %1977 = vmatprep.subr.bf16.mxu0 0
  %1978 = vmatpush1.bf16.msra.mxu0 0
  %1979 = vmatprep.subr.bf16.mxu0 0
  %1980 = vmatpush1.bf16.msra.mxu0 %v1964
  %1981 = vmatprep.subr.bf16.mxu0 0
  %1982 = vmatpush1.bf16.msra.mxu0 %v1962
  %1983 = vmatprep.subr.bf16.mxu0 0
  %1984 = vmatpush2.bf16.msra.mxu0 0
  %1985 = vmatprep.subr.bf16.mxu0 0
  %1986 = vmatpush2.bf16.msra.mxu0 0
  %1987 = vmatprep.subr.bf16.mxu0 0
  %1988 = vmatpush2.bf16.msra.mxu0 0
  %1989 = vmatprep.subr.bf16.mxu0 0
  %1990 = vmatpush2.bf16.msra.mxu0 0
  %1991 = vmatprep.subr.bf16.mxu0 0
  %1992 = vmatpush2.bf16.msra.mxu0 0
  %1993 = vmatprep.subr.bf16.mxu0 0
  %1994 = vmatpush2.bf16.msra.mxu0 0
  %1995 = vmatprep.subr.bf16.mxu0 0
  %1996 = vmatpush2.bf16.msra.mxu0 0
  %1997 = vmatprep.subr.bf16.mxu0 0
  %1998 = vmatpush2.bf16.msra.mxu0 0
  %1999 = vmatprep.mubr.bf16.mxu0 0
  %2000 = vmatmul.mubr.bf16.gmra.mxu0 %v1903
  %v2001 = vpop.f32.mrf.mxu0
  %v2002 = vadd.f32 0.0, %v2001
  %v2003 = vpop.f32.mrf.mxu0
  %v2004 = vpop.f32.mrf.mxu0
  %v2005 = vadd.f32 0.0, %v2004
  %v2006 = vpop.f32.mrf.mxu0
  %2007 = vmatprep.mubr.bf16.mxu0 0
  %2008 = vmatmul.mubr.bf16.gmra.mxu0 %v1906
  %v2009 = vpop.f32.mrf.mxu0
  %v2010 = vadd.f32 0.0, %v2009
  %v2011 = vpop.f32.mrf.mxu0
  %v2012 = vpop.f32.mrf.mxu0
  %v2013 = vadd.f32 0.0, %v2012
  %v2014 = vpop.f32.mrf.mxu0
  %2015 = vdwg.mxu0
  %2017 = vset.pattern.permute.xlu0 0
  %2018 = vperm.xlu0 %2017, %v1957
  %v2019 = vpop.permute.xlu0 %2018
  %2022 = vset.pattern.permute.xlu0 0
  %2023 = vperm.xlu0 %2022, %v1958
  %v2024 = vpop.permute.xlu0 %2023
  %2027 = vset.pattern.permute.xlu0 0
  %2028 = vperm.xlu0 %2027, %v1959
  %v2029 = vpop.permute.xlu0 %2028
  %2032 = vset.pattern.permute.xlu0 0
  %2033 = vperm.xlu0 %2032, %v1960
  %v2034 = vpop.permute.xlu0 %2033
  %v2036 = vmul.f32 %v2002, %v2019
  %v2037 = vmul.f32 %v2005, %v2024
  %v2038 = vmul.f32 %v2010, %v2029
  %v2039 = vmul.f32 %v2013, %v2034
  %2044 = vrot.lane.b32.xlu0 %v2036, 64
  %v2045 = vpop.permute.xlu0 %2044
  %2046 = vrot.lane.b32.xlu0 %v2037, 64
  %v2047 = vpop.permute.xlu0 %2046
  %2048 = vrot.lane.b32.xlu0 %v2038, 64
  %v2049 = vpop.permute.xlu0 %2048
  %2050 = vrot.lane.b32.xlu0 %v2039, 64
  %v2051 = vpop.permute.xlu0 %2050
  %2056 = vst.msk [vmem:[#allocation2] sm:$0xff] %vm880, %v2045
  %2057 = vst.msk [vmem:[#allocation2 + $0x8] sm:$0xff] %vm880, %v2047
  %2058 = vst.msk [vmem:[#allocation2 + $0x10] sm:$0xff] %vm880, %v2049
  %2059 = vst.msk [vmem:[#allocation2 + $0x18] sm:$0xff] %vm880, %v2051
  %2060 = vset.pattern.permute.xlu0 3
  %2061 = vperm.xlu0 %2060, %v1361
  %v2062 = vpop.permute.xlu0 %2061
  %2064 = vset.pattern.permute.xlu0 3
  %2065 = vperm.xlu0 %2064, %v1364
  %v2066 = vpop.permute.xlu0 %2065
  %2068 = vset.pattern.permute.xlu0 3
  %2069 = vperm.xlu0 %2068, %v1369
  %v2070 = vpop.permute.xlu0 %2069
  %2072 = vset.pattern.permute.xlu0 3
  %2073 = vperm.xlu0 %2072, %v1372
  %v2074 = vpop.permute.xlu0 %2073
  %v2076 = vlaneseq
  %v2077 = vshrl.u32 %v2076, 7
  %v2078 = vsub.s32 3, %v2077
  %v2079 = vrot.slane %v1411, %v2078
  %v2080 = vadd.f32 %v2062, %v2079
  %v2081 = vadd.f32 %v2066, %v2079
  %v2082 = vadd.f32 %v2070, %v2079
  %v2083 = vadd.f32 %v2074, %v2079
  %v2084 = vmul.f32 %v2080, 0.2
  %v2085 = vmul.f32 %v2081, 0.2
  %v2086 = vmul.f32 %v2082, 0.2
  %v2087 = vmul.f32 %v2083, 0.2
  %v2088 = vmax.f32 %v2080, %v2084
  %v2089 = vmax.f32 %v2081, %v2085
  %v2090 = vmax.f32 %v2082, %v2086
  %v2091 = vmax.f32 %v2083, %v2087
  %v2092 = vadd.f32 %v2088, %v61
  %v2093 = vadd.f32 %v2089, %v62
  %v2094 = vadd.f32 %v2090, %v63
  %v2095 = vadd.f32 %v2091, %v64
  %v2096 = vsel %vm278, %v2092, -inf
  %2097 = vmax.xlane.f32.xlu0 %v2096
  %v2098 = vpop.xlane.xlu0 %2097
  %v2099 = vsel %vm278, %v2093, -inf
  %2100 = vmax.xlane.f32.xlu0 %v2099
  %v2101 = vpop.xlane.xlu0 %2100
  %v2102 = vsel %vm278, %v2094, -inf
  %2103 = vmax.xlane.f32.xlu0 %v2102
  %v2104 = vpop.xlane.xlu0 %2103
  %v2105 = vsel %vm278, %v2095, -inf
  %2106 = vmax.xlane.f32.xlu0 %v2105
  %v2107 = vpop.xlane.xlu0 %2106
  %v2108 = vsub.f32 %v2092, %v2098
  %v2109 = vsub.f32 %v2093, %v2101
  %v2110 = vsub.f32 %v2094, %v2104
  %v2111 = vsub.f32 %v2095, %v2107
  %v2112 = vmul.f32 %v2108, 1.442695
  %v2113 = vpow.pop %v2112
  %v2114 = vmul.f32 %v2109, 1.442695
  %v2115 = vpow.pop %v2114
  %v2116 = vmul.f32 %v2110, 1.442695
  %v2117 = vpow.pop %v2116
  %v2118 = vmul.f32 %v2111, 1.442695
  %v2119 = vpow.pop %v2118
  %v2120 = vpack.c.bf16 %v2115, %v2113
  %v2121 = vpack.c.bf16 %v2119, %v2117
  %v2123 = vsel %vm278, %v2120, 0
  %v2126 = vsel %vm278, %v2121, 0
  %2128 = vmatprep.subr.bf16.mxu0 0
  %2129 = vmatpush1.bf16.msra.mxu0 0
  %2130 = vmatprep.subr.bf16.mxu0 0
  %2131 = vmatpush1.bf16.msra.mxu0 0
  %2132 = vmatprep.subr.bf16.mxu0 0
  %2133 = vmatpush1.bf16.msra.mxu0 0
  %2134 = vmatprep.subr.bf16.mxu0 0
  %2135 = vmatpush1.bf16.msra.mxu0 0
  %2136 = vmatprep.subr.bf16.mxu0 0
  %2137 = vmatpush1.bf16.msra.mxu0 0
  %2138 = vmatprep.subr.bf16.mxu0 0
  %2139 = vmatpush1.bf16.msra.mxu0 0
  %2140 = vmatprep.subr.bf16.mxu0 0
  %2141 = vmatpush1.bf16.msra.mxu0 1065369472
  %2142 = vmatprep.subr.bf16.mxu0 0
  %2143 = vmatpush1.bf16.msra.mxu0 1065369472
  %2144 = vmatprep.subr.bf16.mxu0 0
  %2145 = vmatpush2.bf16.msra.mxu0 0
  %2146 = vmatprep.subr.bf16.mxu0 0
  %2147 = vmatpush2.bf16.msra.mxu0 0
  %2148 = vmatprep.subr.bf16.mxu0 0
  %2149 = vmatpush2.bf16.msra.mxu0 0
  %2150 = vmatprep.subr.bf16.mxu0 0
  %2151 = vmatpush2.bf16.msra.mxu0 0
  %2152 = vmatprep.subr.bf16.mxu0 0
  %2153 = vmatpush2.bf16.msra.mxu0 0
  %2154 = vmatprep.subr.bf16.mxu0 0
  %2155 = vmatpush2.bf16.msra.mxu0 0
  %2156 = vmatprep.subr.bf16.mxu0 0
  %2157 = vmatpush2.bf16.msra.mxu0 0
  %2158 = vmatprep.subr.bf16.mxu0 0
  %2159 = vmatpush2.bf16.msra.mxu0 0
  %2160 = vmatprep.mubr.bf16.mxu0 0
  %2161 = vmatmul.mubr.bf16.gmra.mxu0 %v2123
  %v2162 = vpop.f32.mrf.mxu0
  %v2163 = vadd.f32 0.0, %v2162
  %v2164 = vpop.f32.mrf.mxu0
  %v2165 = vpop.f32.mrf.mxu0
  %v2166 = vadd.f32 0.0, %v2165
  %v2167 = vpop.f32.mrf.mxu0
  %2168 = vmatprep.mubr.bf16.mxu0 0
  %2169 = vmatmul.mubr.bf16.gmra.mxu0 %v2126
  %v2170 = vpop.f32.mrf.mxu0
  %v2171 = vadd.f32 0.0, %v2170
  %v2172 = vpop.f32.mrf.mxu0
  %v2173 = vpop.f32.mrf.mxu0
  %v2174 = vadd.f32 0.0, %v2173
  %v2175 = vpop.f32.mrf.mxu0
  %2176 = vdwg.mxu0
  %v2177 = vrcp.pop %v2163
  %v2178 = vrcp.pop %v2166
  %v2179 = vrcp.pop %v2171
  %v2180 = vrcp.pop %v2174
  %2181 = vrot.lane.b32.xlu0 %v1260, 32
  %v2182 = vpop.permute.xlu0 %2181
  %2183 = vrot.lane.b32.xlu0 %v1261, 32
  %v2184 = vpop.permute.xlu0 %2183
  %2187 = vmatprep.subr.bf16.mxu0 0
  %2188 = vmatpush1.bf16.msra.mxu0 0
  %2189 = vmatprep.subr.bf16.mxu0 0
  %2190 = vmatpush1.bf16.msra.mxu0 0
  %2191 = vmatprep.subr.bf16.mxu0 0
  %2192 = vmatpush1.bf16.msra.mxu0 0
  %2193 = vmatprep.subr.bf16.mxu0 0
  %2194 = vmatpush1.bf16.msra.mxu0 0
  %2195 = vmatprep.subr.bf16.mxu0 0
  %2196 = vmatpush1.bf16.msra.mxu0 0
  %2197 = vmatprep.subr.bf16.mxu0 0
  %2198 = vmatpush1.bf16.msra.mxu0 0
  %2199 = vmatprep.subr.bf16.mxu0 0
  %2200 = vmatpush1.bf16.msra.mxu0 %v2184
  %2201 = vmatprep.subr.bf16.mxu0 0
  %2202 = vmatpush1.bf16.msra.mxu0 %v2182
  %2203 = vmatprep.subr.bf16.mxu0 0
  %2204 = vmatpush2.bf16.msra.mxu0 0
  %2205 = vmatprep.subr.bf16.mxu0 0
  %2206 = vmatpush2.bf16.msra.mxu0 0
  %2207 = vmatprep.subr.bf16.mxu0 0
  %2208 = vmatpush2.bf16.msra.mxu0 0
  %2209 = vmatprep.subr.bf16.mxu0 0
  %2210 = vmatpush2.bf16.msra.mxu0 0
  %2211 = vmatprep.subr.bf16.mxu0 0
  %2212 = vmatpush2.bf16.msra.mxu0 0
  %2213 = vmatprep.subr.bf16.mxu0 0
  %2214 = vmatpush2.bf16.msra.mxu0 0
  %2215 = vmatprep.subr.bf16.mxu0 0
  %2216 = vmatpush2.bf16.msra.mxu0 0
  %2217 = vmatprep.subr.bf16.mxu0 0
  %2218 = vmatpush2.bf16.msra.mxu0 0
  %2219 = vmatprep.mubr.bf16.mxu0 0
  %2220 = vmatmul.mubr.bf16.gmra.mxu0 %v2123
  %v2221 = vpop.f32.mrf.mxu0
  %v2222 = vadd.f32 0.0, %v2221
  %v2223 = vpop.f32.mrf.mxu0
  %v2224 = vpop.f32.mrf.mxu0
  %v2225 = vadd.f32 0.0, %v2224
  %v2226 = vpop.f32.mrf.mxu0
  %2227 = vmatprep.mubr.bf16.mxu0 0
  %2228 = vmatmul.mubr.bf16.gmra.mxu0 %v2126
  %v2229 = vpop.f32.mrf.mxu0
  %v2230 = vadd.f32 0.0, %v2229
  %v2231 = vpop.f32.mrf.mxu0
  %v2232 = vpop.f32.mrf.mxu0
  %v2233 = vadd.f32 0.0, %v2232
  %v2234 = vpop.f32.mrf.mxu0
  %2235 = vdwg.mxu0
  %2237 = vset.pattern.permute.xlu0 0
  %2238 = vperm.xlu0 %2237, %v2177
  %v2239 = vpop.permute.xlu0 %2238
  %2242 = vset.pattern.permute.xlu0 0
  %2243 = vperm.xlu0 %2242, %v2178
  %v2244 = vpop.permute.xlu0 %2243
  %2247 = vset.pattern.permute.xlu0 0
  %2248 = vperm.xlu0 %2247, %v2179
  %v2249 = vpop.permute.xlu0 %2248
  %2252 = vset.pattern.permute.xlu0 0
  %2253 = vperm.xlu0 %2252, %v2180
  %v2254 = vpop.permute.xlu0 %2253
  %v2256 = vmul.f32 %v2222, %v2239
  %v2257 = vmul.f32 %v2225, %v2244
  %v2258 = vmul.f32 %v2230, %v2249
  %v2259 = vmul.f32 %v2233, %v2254
  %2264 = vrot.lane.b32.xlu0 %v2256, 96
  %v2265 = vpop.permute.xlu0 %2264
  %2266 = vrot.lane.b32.xlu0 %v2257, 96
  %v2267 = vpop.permute.xlu0 %2266
  %2268 = vrot.lane.b32.xlu0 %v2258, 96
  %v2269 = vpop.permute.xlu0 %2268
  %2270 = vrot.lane.b32.xlu0 %v2259, 96
  %v2271 = vpop.permute.xlu0 %2270
  %2276 = vst.msk [vmem:[#allocation2] sm:$0xff] %vm1101, %v2265
  %2277 = vst.msk [vmem:[#allocation2 + $0x8] sm:$0xff] %vm1101, %v2267
  %2278 = vst.msk [vmem:[#allocation2 + $0x10] sm:$0xff] %vm1101, %v2269
  %2279 = vst.msk [vmem:[#allocation2 + $0x18] sm:$0xff] %vm1101, %v2271
  %v2280 = vld [vmem:[#allocation2] sm:$0xff]
  %v2281 = vld [vmem:[#allocation2 + $0x8] sm:$0xff]
  %v2282 = vld [vmem:[#allocation2 + $0x10] sm:$0xff]
  %v2283 = vld [vmem:[#allocation2 + $0x18] sm:$0xff]
  %v2284 = vld [vmem:[%s9] sm:$0x1]
  %v2286 = vlaneseq
  %v2287 = vshrl.u32 %v2286, 7
  %v2288 = vsub.s32 0, %v2287
  %v2289 = vrot.slane %v2284, %v2288
  %v2291 = vadd.f32 %v2280, %v2289
  %v2292 = vadd.f32 %v2281, %v2289
  %v2293 = vadd.f32 %v2282, %v2289
  %v2294 = vadd.f32 %v2283, %v2289
  %vm2295 = vcmp.gt.f32.partialorder %v2291, 0.0
  %vm2296 = vcmp.gt.f32.partialorder %v2292, 0.0
  %vm2297 = vcmp.gt.f32.partialorder %v2293, 0.0
  %vm2298 = vcmp.gt.f32.partialorder %v2294, 0.0
  %v2299 = vmin.f32 %v2291, 0.0
  %v2300 = vmin.f32 %v2292, 0.0
  %v2301 = vmin.f32 %v2293, 0.0
  %v2302 = vmin.f32 %v2294, 0.0
  %v2303 = vmul.f32 %v2299, 1.442695
  %v2304 = vpow.pop %v2303
  %v2305 = vmul.f32 %v2300, 1.442695
  %v2306 = vpow.pop %v2305
  %v2307 = vmul.f32 %v2301, 1.442695
  %v2308 = vpow.pop %v2307
  %v2309 = vmul.f32 %v2302, 1.442695
  %v2310 = vpow.pop %v2309
  %v2311 = vsub.f32 %v2304, 1.0
  %v2312 = vsub.f32 %v2306, 1.0
  %v2313 = vsub.f32 %v2308, 1.0
  %v2314 = vsub.f32 %v2310, 1.0
  %v2315 = vsel %vm2295, %v2291, %v2311
  %v2316 = vsel %vm2296, %v2292, %v2312
  %v2317 = vsel %vm2297, %v2293, %v2313
  %v2318 = vsel %vm2298, %v2294, %v2314
  %v2319 = vpack.c.bf16 %v2316, %v2315
  %v2320 = vpack.c.bf16 %v2318, %v2317
  %v2321 = vld [vmem:[%s10] sm:$0xf]
  %v2322 = vld [vmem:[%s10 + $0x4] sm:$0xf]
  %v2323 = vld [vmem:[%s10 + $0x8] sm:$0xf]
  %v2324 = vld [vmem:[%s10 + $0xc] sm:$0xf]
  %v2325 = vld [vmem:[%s10 + $0x10] sm:$0xf]
  %v2326 = vld [vmem:[%s10 + $0x14] sm:$0xf]
  %v2327 = vld [vmem:[%s10 + $0x18] sm:$0xf]
  %v2328 = vld [vmem:[%s10 + $0x1c] sm:$0xf]
  %v2329 = vld [vmem:[%s10 + $0x20] sm:$0xf]
  %v2330 = vld [vmem:[%s10 + $0x24] sm:$0xf]
  %v2331 = vld [vmem:[%s10 + $0x28] sm:$0xf]
  %v2332 = vld [vmem:[%s10 + $0x2c] sm:$0xf]
  %v2333 = vld [vmem:[%s10 + $0x30] sm:$0xf]
  %v2334 = vld [vmem:[%s10 + $0x34] sm:$0xf]
  %v2335 = vld [vmem:[%s10 + $0x38] sm:$0xf]
  %v2336 = vld [vmem:[%s10 + $0x3c] sm:$0xf]
  %v2353 = vunpack.c.l.b16 %v2321
  %v2354 = vunpack.c.l.b16 %v2322
  %v2355 = vunpack.c.l.b16 %v2323
  %v2356 = vunpack.c.l.b16 %v2324
  %v2357 = vunpack.c.l.b16 %v2325
  %v2358 = vunpack.c.l.b16 %v2326
  %v2359 = vunpack.c.l.b16 %v2327
  %v2360 = vunpack.c.l.b16 %v2328
  %v2361 = vunpack.c.l.b16 %v2329
  %v2362 = vunpack.c.l.b16 %v2330
  %v2363 = vunpack.c.l.b16 %v2331
  %v2364 = vunpack.c.l.b16 %v2332
  %v2365 = vunpack.c.l.b16 %v2333
  %v2366 = vunpack.c.l.b16 %v2334
  %v2367 = vunpack.c.l.b16 %v2335
  %v2368 = vunpack.c.l.b16 %v2336
  %v2369 = vpack.c.b16 %v2354, %v2353
  %v2370 = vpack.c.b16 %v2356, %v2355
  %v2371 = vpack.c.b16 %v2358, %v2357
  %v2372 = vpack.c.b16 %v2360, %v2359
  %v2373 = vpack.c.b16 %v2362, %v2361
  %v2374 = vpack.c.b16 %v2364, %v2363
  %v2375 = vpack.c.b16 %v2366, %v2365
  %v2376 = vpack.c.b16 %v2368, %v2367
  %2385 = vmatprep.subr.bf16.mxu0 0
  %2386 = vmatpush1.bf16.msra.mxu0 %v2376
  %2387 = vmatprep.subr.bf16.mxu0 0
  %2388 = vmatpush1.bf16.msra.mxu0 %v2375
  %2389 = vmatprep.subr.bf16.mxu0 0
  %2390 = vmatpush1.bf16.msra.mxu0 %v2374
  %2391 = vmatprep.subr.bf16.mxu0 0
  %2392 = vmatpush1.bf16.msra.mxu0 %v2373
  %2393 = vmatprep.subr.bf16.mxu0 0
  %2394 = vmatpush1.bf16.msra.mxu0 %v2372
  %2395 = vmatprep.subr.bf16.mxu0 0
  %2396 = vmatpush1.bf16.msra.mxu0 %v2371
  %2397 = vmatprep.subr.bf16.mxu0 0
  %2398 = vmatpush1.bf16.msra.mxu0 %v2370
  %2399 = vmatprep.subr.bf16.mxu0 0
  %2400 = vmatpush1.bf16.msra.mxu0 %v2369
  %2401 = vmatprep.subr.bf16.mxu0 0
  %2402 = vmatpush2.bf16.msra.mxu0 0
  %2403 = vmatprep.subr.bf16.mxu0 0
  %2404 = vmatpush2.bf16.msra.mxu0 0
  %2405 = vmatprep.subr.bf16.mxu0 0
  %2406 = vmatpush2.bf16.msra.mxu0 0
  %2407 = vmatprep.subr.bf16.mxu0 0
  %2408 = vmatpush2.bf16.msra.mxu0 0
  %2409 = vmatprep.subr.bf16.mxu0 0
  %2410 = vmatpush2.bf16.msra.mxu0 0
  %2411 = vmatprep.subr.bf16.mxu0 0
  %2412 = vmatpush2.bf16.msra.mxu0 0
  %2413 = vmatprep.subr.bf16.mxu0 0
  %2414 = vmatpush2.bf16.msra.mxu0 0
  %2415 = vmatprep.subr.bf16.mxu0 0
  %2416 = vmatpush2.bf16.msra.mxu0 0
  %2417 = vmatprep.mubr.bf16.mxu0 0
  %2418 = vmatmul.mubr.bf16.gmra.mxu0 %v2319
  %v2419 = vpop.f32.mrf.mxu0
  %v2420 = vadd.f32 0.0, %v2419
  %v2421 = vpop.f32.mrf.mxu0
  %v2422 = vpop.f32.mrf.mxu0
  %v2423 = vadd.f32 0.0, %v2422
  %v2424 = vpop.f32.mrf.mxu0
  %2425 = vmatprep.mubr.bf16.mxu0 0
  %2426 = vmatmul.mubr.bf16.gmra.mxu0 %v2320
  %v2427 = vpop.f32.mrf.mxu0
  %v2428 = vadd.f32 0.0, %v2427
  %v2429 = vpop.f32.mrf.mxu0
  %v2430 = vpop.f32.mrf.mxu0
  %v2431 = vadd.f32 0.0, %v2430
  %v2432 = vpop.f32.mrf.mxu0
  %2433 = vdwg.mxu0
  %v2434 = vpack.c.bf16 %v2423, %v2420
  %v2435 = vpack.c.bf16 %v2431, %v2428
  %v2436 = vld [vmem:[%s12] sm:$0xf]
  %v2437 = vld [vmem:[%s12 + $0x4] sm:$0xf]
  %v2438 = vld [vmem:[%s12 + $0x8] sm:$0xf]
  %v2439 = vld [vmem:[%s12 + $0xc] sm:$0xf]
  %v2440 = vld [vmem:[%s12 + $0x10] sm:$0xf]
  %v2441 = vld [vmem:[%s12 + $0x14] sm:$0xf]
  %v2442 = vld [vmem:[%s12 + $0x18] sm:$0xf]
  %v2443 = vld [vmem:[%s12 + $0x1c] sm:$0xf]
  %v2444 = vld [vmem:[%s12 + $0x20] sm:$0xf]
  %v2445 = vld [vmem:[%s12 + $0x24] sm:$0xf]
  %v2446 = vld [vmem:[%s12 + $0x28] sm:$0xf]
  %v2447 = vld [vmem:[%s12 + $0x2c] sm:$0xf]
  %v2448 = vld [vmem:[%s12 + $0x30] sm:$0xf]
  %v2449 = vld [vmem:[%s12 + $0x34] sm:$0xf]
  %v2450 = vld [vmem:[%s12 + $0x38] sm:$0xf]
  %v2451 = vld [vmem:[%s12 + $0x3c] sm:$0xf]
  %v2468 = vunpack.c.l.b16 %v2436
  %v2469 = vunpack.c.l.b16 %v2437
  %v2470 = vunpack.c.l.b16 %v2438
  %v2471 = vunpack.c.l.b16 %v2439
  %v2472 = vunpack.c.l.b16 %v2440
  %v2473 = vunpack.c.l.b16 %v2441
  %v2474 = vunpack.c.l.b16 %v2442
  %v2475 = vunpack.c.l.b16 %v2443
  %v2476 = vunpack.c.l.b16 %v2444
  %v2477 = vunpack.c.l.b16 %v2445
  %v2478 = vunpack.c.l.b16 %v2446
  %v2479 = vunpack.c.l.b16 %v2447
  %v2480 = vunpack.c.l.b16 %v2448
  %v2481 = vunpack.c.l.b16 %v2449
  %v2482 = vunpack.c.l.b16 %v2450
  %v2483 = vunpack.c.l.b16 %v2451
  %v2484 = vpack.c.b16 %v2469, %v2468
  %v2485 = vpack.c.b16 %v2471, %v2470
  %v2486 = vpack.c.b16 %v2473, %v2472
  %v2487 = vpack.c.b16 %v2475, %v2474
  %v2488 = vpack.c.b16 %v2477, %v2476
  %v2489 = vpack.c.b16 %v2479, %v2478
  %v2490 = vpack.c.b16 %v2481, %v2480
  %v2491 = vpack.c.b16 %v2483, %v2482
  %2500 = vmatprep.subr.bf16.mxu0 0
  %2501 = vmatpush1.bf16.msra.mxu0 %v2491
  %2502 = vmatprep.subr.bf16.mxu0 0
  %2503 = vmatpush1.bf16.msra.mxu0 %v2490
  %2504 = vmatprep.subr.bf16.mxu0 0
  %2505 = vmatpush1.bf16.msra.mxu0 %v2489
  %2506 = vmatprep.subr.bf16.mxu0 0
  %2507 = vmatpush1.bf16.msra.mxu0 %v2488
  %2508 = vmatprep.subr.bf16.mxu0 0
  %2509 = vmatpush1.bf16.msra.mxu0 %v2487
  %2510 = vmatprep.subr.bf16.mxu0 0
  %2511 = vmatpush1.bf16.msra.mxu0 %v2486
  %2512 = vmatprep.subr.bf16.mxu0 0
  %2513 = vmatpush1.bf16.msra.mxu0 %v2485
  %2514 = vmatprep.subr.bf16.mxu0 0
  %2515 = vmatpush1.bf16.msra.mxu0 %v2484
  %2516 = vmatprep.subr.bf16.mxu0 0
  %2517 = vmatpush2.bf16.msra.mxu0 0
  %2518 = vmatprep.subr.bf16.mxu0 0
  %2519 = vmatpush2.bf16.msra.mxu0 0
  %2520 = vmatprep.subr.bf16.mxu0 0
  %2521 = vmatpush2.bf16.msra.mxu0 0
  %2522 = vmatprep.subr.bf16.mxu0 0
  %2523 = vmatpush2.bf16.msra.mxu0 0
  %2524 = vmatprep.subr.bf16.mxu0 0
  %2525 = vmatpush2.bf16.msra.mxu0 0
  %2526 = vmatprep.subr.bf16.mxu0 0
  %2527 = vmatpush2.bf16.msra.mxu0 0
  %2528 = vmatprep.subr.bf16.mxu0 0
  %2529 = vmatpush2.bf16.msra.mxu0 0
  %2530 = vmatprep.subr.bf16.mxu0 0
  %2531 = vmatpush2.bf16.msra.mxu0 0
  %2532 = vmatprep.mubr.bf16.mxu0 0
  %2533 = vmatmul.mubr.bf16.gmra.mxu0 %v2319
  %v2534 = vpop.f32.mrf.mxu0
  %v2535 = vadd.f32 0.0, %v2534
  %v2536 = vpop.f32.mrf.mxu0
  %v2537 = vpop.f32.mrf.mxu0
  %v2538 = vadd.f32 0.0, %v2537
  %v2539 = vpop.f32.mrf.mxu0
  %2540 = vmatprep.mubr.bf16.mxu0 0
  %2541 = vmatmul.mubr.bf16.gmra.mxu0 %v2320
  %v2542 = vpop.f32.mrf.mxu0
  %v2543 = vadd.f32 0.0, %v2542
  %v2544 = vpop.f32.mrf.mxu0
  %v2545 = vpop.f32.mrf.mxu0
  %v2546 = vadd.f32 0.0, %v2545
  %v2547 = vpop.f32.mrf.mxu0
  %2548 = vdwg.mxu0
  %v2549 = vld [vmem:[%s11] sm:$0x1]
  %2550 = vmatprep.subr.bf16.mxu0 0
  %2551 = vmatpush1.bf16.xpose.msra.mxu0 0
  %2552 = vmatprep.subr.bf16.mxu0 0
  %2553 = vmatpush1.bf16.xpose.msra.mxu0 0
  %2554 = vmatprep.subr.bf16.mxu0 0
  %2555 = vmatpush1.bf16.xpose.msra.mxu0 0
  %2556 = vmatprep.subr.bf16.mxu0 0
  %2557 = vmatpush1.bf16.xpose.msra.mxu0 0
  %2558 = vmatprep.subr.bf16.mxu0 0
  %2559 = vmatpush1.bf16.xpose.msra.mxu0 0
  %2560 = vmatprep.subr.bf16.mxu0 0
  %2561 = vmatpush1.bf16.xpose.msra.mxu0 0
  %2562 = vmatprep.subr.bf16.mxu0 0
  %2563 = vmatpush1.bf16.xpose.msra.mxu0 %v2320
  %2564 = vmatprep.subr.bf16.mxu0 0
  %2565 = vmatpush1.bf16.xpose.msra.mxu0 %v2319
  %2566 = vmatprep.subr.bf16.mxu0 0
  %2567 = vmatpush2.bf16.xpose.msra.mxu0 0
  %2568 = vmatprep.subr.bf16.mxu0 0
  %2569 = vmatpush2.bf16.xpose.msra.mxu0 0
  %2570 = vmatprep.subr.bf16.mxu0 0
  %2571 = vmatpush2.bf16.xpose.msra.mxu0 0
  %2572 = vmatprep.subr.bf16.mxu0 0
  %2573 = vmatpush2.bf16.xpose.msra.mxu0 0
  %2574 = vmatprep.subr.bf16.mxu0 0
  %2575 = vmatpush2.bf16.xpose.msra.mxu0 0
  %2576 = vmatprep.subr.bf16.mxu0 0
  %2577 = vmatpush2.bf16.xpose.msra.mxu0 0
  %2578 = vmatprep.subr.bf16.mxu0 0
  %2579 = vmatpush2.bf16.xpose.msra.mxu0 0
  %2580 = vmatprep.subr.bf16.mxu0 0
  %2581 = vmatpush2.bf16.xpose.msra.mxu0 0
  %2582 = vmatprep.mubr.bf16.mxu0 0
  %2583 = vmatmul.mubr.bf16.gmra.mxu0 %v2549
  %v2584 = vpop.f32.mrf.mxu0
  %v2585 = vadd.f32 0.0, %v2584
  %v2586 = vpop.f32.mrf.mxu0
  %v2587 = vpop.f32.mrf.mxu0
  %v2588 = vpop.f32.mrf.mxu0
  %2589 = vdwg.mxu0
  %2591 = vset.pattern.permute.xlu0 0
  %2592 = vperm.xlu0 %2591, %v2535
  %v2593 = vpop.permute.xlu0 %2592
  %2596 = vset.pattern.permute.xlu0 0
  %2597 = vperm.xlu0 %2596, %v2538
  %v2598 = vpop.permute.xlu0 %2597
  %2601 = vset.pattern.permute.xlu0 0
  %2602 = vperm.xlu0 %2601, %v2543
  %v2603 = vpop.permute.xlu0 %2602
  %2606 = vset.pattern.permute.xlu0 0
  %2607 = vperm.xlu0 %2606, %v2546
  %v2608 = vpop.permute.xlu0 %2607
  %v2610 = vlaneseq
  %v2611 = vshrl.u32 %v2610, 7
  %v2612 = vsub.s32 0, %v2611
  %v2613 = vrot.slane %v2585, %v2612
  %v2614 = vadd.f32 %v2593, %v2613
  %v2615 = vadd.f32 %v2598, %v2613
  %v2616 = vadd.f32 %v2603, %v2613
  %v2617 = vadd.f32 %v2608, %v2613
  %v2618 = vmul.f32 %v2614, 0.2
  %v2619 = vmul.f32 %v2615, 0.2
  %v2620 = vmul.f32 %v2616, 0.2
  %v2621 = vmul.f32 %v2617, 0.2
  %v2622 = vmax.f32 %v2614, %v2618
  %v2623 = vmax.f32 %v2615, %v2619
  %v2624 = vmax.f32 %v2616, %v2620
  %v2625 = vmax.f32 %v2617, %v2621
  %v2626 = vadd.f32 %v2622, %v61
  %v2627 = vadd.f32 %v2623, %v62
  %v2628 = vadd.f32 %v2624, %v63
  %v2629 = vadd.f32 %v2625, %v64
  %v2630 = vsel %vm278, %v2626, -inf
  %2631 = vmax.xlane.f32.xlu0 %v2630
  %v2632 = vpop.xlane.xlu0 %2631
  %v2633 = vsel %vm278, %v2627, -inf
  %2634 = vmax.xlane.f32.xlu0 %v2633
  %v2635 = vpop.xlane.xlu0 %2634
  %v2636 = vsel %vm278, %v2628, -inf
  %2637 = vmax.xlane.f32.xlu0 %v2636
  %v2638 = vpop.xlane.xlu0 %2637
  %v2639 = vsel %vm278, %v2629, -inf
  %2640 = vmax.xlane.f32.xlu0 %v2639
  %v2641 = vpop.xlane.xlu0 %2640
  %v2642 = vsub.f32 %v2626, %v2632
  %v2643 = vsub.f32 %v2627, %v2635
  %v2644 = vsub.f32 %v2628, %v2638
  %v2645 = vsub.f32 %v2629, %v2641
  %v2646 = vmul.f32 %v2642, 1.442695
  %v2647 = vpow.pop %v2646
  %v2648 = vmul.f32 %v2643, 1.442695
  %v2649 = vpow.pop %v2648
  %v2650 = vmul.f32 %v2644, 1.442695
  %v2651 = vpow.pop %v2650
  %v2652 = vmul.f32 %v2645, 1.442695
  %v2653 = vpow.pop %v2652
  %v2654 = vpack.c.bf16 %v2649, %v2647
  %v2655 = vpack.c.bf16 %v2653, %v2651
  %v2657 = vsel %vm278, %v2654, 0
  %v2660 = vsel %vm278, %v2655, 0
  %2662 = vmatprep.subr.bf16.mxu0 0
  %2663 = vmatpush1.bf16.msra.mxu0 0
  %2664 = vmatprep.subr.bf16.mxu0 0
  %2665 = vmatpush1.bf16.msra.mxu0 0
  %2666 = vmatprep.subr.bf16.mxu0 0
  %2667 = vmatpush1.bf16.msra.mxu0 0
  %2668 = vmatprep.subr.bf16.mxu0 0
  %2669 = vmatpush1.bf16.msra.mxu0 0
  %2670 = vmatprep.subr.bf16.mxu0 0
  %2671 = vmatpush1.bf16.msra.mxu0 0
  %2672 = vmatprep.subr.bf16.mxu0 0
  %2673 = vmatpush1.bf16.msra.mxu0 0
  %2674 = vmatprep.subr.bf16.mxu0 0
  %2675 = vmatpush1.bf16.msra.mxu0 1065369472
  %2676 = vmatprep.subr.bf16.mxu0 0
  %2677 = vmatpush1.bf16.msra.mxu0 1065369472
  %2678 = vmatprep.subr.bf16.mxu0 0
  %2679 = vmatpush2.bf16.msra.mxu0 0
  %2680 = vmatprep.subr.bf16.mxu0 0
  %2681 = vmatpush2.bf16.msra.mxu0 0
  %2682 = vmatprep.subr.bf16.mxu0 0
  %2683 = vmatpush2.bf16.msra.mxu0 0
  %2684 = vmatprep.subr.bf16.mxu0 0
  %2685 = vmatpush2.bf16.msra.mxu0 0
  %2686 = vmatprep.subr.bf16.mxu0 0
  %2687 = vmatpush2.bf16.msra.mxu0 0
  %2688 = vmatprep.subr.bf16.mxu0 0
  %2689 = vmatpush2.bf16.msra.mxu0 0
  %2690 = vmatprep.subr.bf16.mxu0 0
  %2691 = vmatpush2.bf16.msra.mxu0 0
  %2692 = vmatprep.subr.bf16.mxu0 0
  %2693 = vmatpush2.bf16.msra.mxu0 0
  %2694 = vmatprep.mubr.bf16.mxu0 0
  %2695 = vmatmul.mubr.bf16.gmra.mxu0 %v2657
  %v2696 = vpop.f32.mrf.mxu0
  %v2697 = vadd.f32 0.0, %v2696
  %v2698 = vpop.f32.mrf.mxu0
  %v2699 = vpop.f32.mrf.mxu0
  %v2700 = vadd.f32 0.0, %v2699
  %v2701 = vpop.f32.mrf.mxu0
  %2702 = vmatprep.mubr.bf16.mxu0 0
  %2703 = vmatmul.mubr.bf16.gmra.mxu0 %v2660
  %v2704 = vpop.f32.mrf.mxu0
  %v2705 = vadd.f32 0.0, %v2704
  %v2706 = vpop.f32.mrf.mxu0
  %v2707 = vpop.f32.mrf.mxu0
  %v2708 = vadd.f32 0.0, %v2707
  %v2709 = vpop.f32.mrf.mxu0
  %2710 = vdwg.mxu0
  %v2711 = vrcp.pop %v2697
  %v2712 = vrcp.pop %v2700
  %v2713 = vrcp.pop %v2705
  %v2714 = vrcp.pop %v2708
  %2715 = vmatprep.subr.bf16.mxu0 0
  %2716 = vmatpush1.bf16.msra.mxu0 0
  %2717 = vmatprep.subr.bf16.mxu0 0
  %2718 = vmatpush1.bf16.msra.mxu0 0
  %2719 = vmatprep.subr.bf16.mxu0 0
  %2720 = vmatpush1.bf16.msra.mxu0 0
  %2721 = vmatprep.subr.bf16.mxu0 0
  %2722 = vmatpush1.bf16.msra.mxu0 0
  %2723 = vmatprep.subr.bf16.mxu0 0
  %2724 = vmatpush1.bf16.msra.mxu0 0
  %2725 = vmatprep.subr.bf16.mxu0 0
  %2726 = vmatpush1.bf16.msra.mxu0 0
  %2727 = vmatprep.subr.bf16.mxu0 0
  %2728 = vmatpush1.bf16.msra.mxu0 %v2435
  %2729 = vmatprep.subr.bf16.mxu0 0
  %2730 = vmatpush1.bf16.msra.mxu0 %v2434
  %2731 = vmatprep.subr.bf16.mxu0 0
  %2732 = vmatpush2.bf16.msra.mxu0 0
  %2733 = vmatprep.subr.bf16.mxu0 0
  %2734 = vmatpush2.bf16.msra.mxu0 0
  %2735 = vmatprep.subr.bf16.mxu0 0
  %2736 = vmatpush2.bf16.msra.mxu0 0
  %2737 = vmatprep.subr.bf16.mxu0 0
  %2738 = vmatpush2.bf16.msra.mxu0 0
  %2739 = vmatprep.subr.bf16.mxu0 0
  %2740 = vmatpush2.bf16.msra.mxu0 0
  %2741 = vmatprep.subr.bf16.mxu0 0
  %2742 = vmatpush2.bf16.msra.mxu0 0
  %2743 = vmatprep.subr.bf16.mxu0 0
  %2744 = vmatpush2.bf16.msra.mxu0 0
  %2745 = vmatprep.subr.bf16.mxu0 0
  %2746 = vmatpush2.bf16.msra.mxu0 0
  %2747 = vmatprep.mubr.bf16.mxu0 0
  %2748 = vmatmul.mubr.bf16.gmra.mxu0 %v2657
  %v2749 = vpop.f32.mrf.mxu0
  %v2750 = vadd.f32 0.0, %v2749
  %v2751 = vpop.f32.mrf.mxu0
  %v2752 = vpop.f32.mrf.mxu0
  %v2753 = vadd.f32 0.0, %v2752
  %v2754 = vpop.f32.mrf.mxu0
  %2755 = vmatprep.mubr.bf16.mxu0 0
  %2756 = vmatmul.mubr.bf16.gmra.mxu0 %v2660
  %v2757 = vpop.f32.mrf.mxu0
  %v2758 = vadd.f32 0.0, %v2757
  %v2759 = vpop.f32.mrf.mxu0
  %v2760 = vpop.f32.mrf.mxu0
  %v2761 = vadd.f32 0.0, %v2760
  %v2762 = vpop.f32.mrf.mxu0
  %2763 = vdwg.mxu0
  %2765 = vset.pattern.permute.xlu0 0
  %2766 = vperm.xlu0 %2765, %v2711
  %v2767 = vpop.permute.xlu0 %2766
  %2770 = vset.pattern.permute.xlu0 0
  %2771 = vperm.xlu0 %2770, %v2712
  %v2772 = vpop.permute.xlu0 %2771
  %2775 = vset.pattern.permute.xlu0 0
  %2776 = vperm.xlu0 %2775, %v2713
  %v2777 = vpop.permute.xlu0 %2776
  %2780 = vset.pattern.permute.xlu0 0
  %2781 = vperm.xlu0 %2780, %v2714
  %v2782 = vpop.permute.xlu0 %2781
  %v2784 = vmul.f32 %v2750, %v2767
  %v2785 = vmul.f32 %v2753, %v2772
  %v2786 = vmul.f32 %v2758, %v2777
  %v2787 = vmul.f32 %v2761, %v2782
  %v2788 = vld [vmem:[%s13] sm:$0x1]
  %v2790 = vlaneseq
  %v2791 = vshrl.u32 %v2790, 7
  %v2792 = vsub.s32 0, %v2791
  %v2793 = vrot.slane %v2788, %v2792
  %v2795 = vadd.f32 %v2784, %v2793
  %v2796 = vadd.f32 %v2785, %v2793
  %v2797 = vadd.f32 %v2786, %v2793
  %v2798 = vadd.f32 %v2787, %v2793
  %2799 = vset.pattern.permute.xlu0 1
  %2800 = vperm.xlu0 %2799, %v2535
  %v2801 = vpop.permute.xlu0 %2800
  %2803 = vset.pattern.permute.xlu0 1
  %2804 = vperm.xlu0 %2803, %v2538
  %v2805 = vpop.permute.xlu0 %2804
  %2807 = vset.pattern.permute.xlu0 1
  %2808 = vperm.xlu0 %2807, %v2543
  %v2809 = vpop.permute.xlu0 %2808
  %2811 = vset.pattern.permute.xlu0 1
  %2812 = vperm.xlu0 %2811, %v2546
  %v2813 = vpop.permute.xlu0 %2812
  %v2815 = vlaneseq
  %v2816 = vshrl.u32 %v2815, 7
  %v2817 = vsub.s32 1, %v2816
  %v2818 = vrot.slane %v2585, %v2817
  %v2819 = vadd.f32 %v2801, %v2818
  %v2820 = vadd.f32 %v2805, %v2818
  %v2821 = vadd.f32 %v2809, %v2818
  %v2822 = vadd.f32 %v2813, %v2818
  %v2823 = vmul.f32 %v2819, 0.2
  %v2824 = vmul.f32 %v2820, 0.2
  %v2825 = vmul.f32 %v2821, 0.2
  %v2826 = vmul.f32 %v2822, 0.2
  %v2827 = vmax.f32 %v2819, %v2823
  %v2828 = vmax.f32 %v2820, %v2824
  %v2829 = vmax.f32 %v2821, %v2825
  %v2830 = vmax.f32 %v2822, %v2826
  %v2831 = vadd.f32 %v2827, %v61
  %v2832 = vadd.f32 %v2828, %v62
  %v2833 = vadd.f32 %v2829, %v63
  %v2834 = vadd.f32 %v2830, %v64
  %v2835 = vsel %vm278, %v2831, -inf
  %2836 = vmax.xlane.f32.xlu0 %v2835
  %v2837 = vpop.xlane.xlu0 %2836
  %v2838 = vsel %vm278, %v2832, -inf
  %2839 = vmax.xlane.f32.xlu0 %v2838
  %v2840 = vpop.xlane.xlu0 %2839
  %v2841 = vsel %vm278, %v2833, -inf
  %2842 = vmax.xlane.f32.xlu0 %v2841
  %v2843 = vpop.xlane.xlu0 %2842
  %v2844 = vsel %vm278, %v2834, -inf
  %2845 = vmax.xlane.f32.xlu0 %v2844
  %v2846 = vpop.xlane.xlu0 %2845
  %v2847 = vsub.f32 %v2831, %v2837
  %v2848 = vsub.f32 %v2832, %v2840
  %v2849 = vsub.f32 %v2833, %v2843
  %v2850 = vsub.f32 %v2834, %v2846
  %v2851 = vmul.f32 %v2847, 1.442695
  %v2852 = vpow.pop %v2851
  %v2853 = vmul.f32 %v2848, 1.442695
  %v2854 = vpow.pop %v2853
  %v2855 = vmul.f32 %v2849, 1.442695
  %v2856 = vpow.pop %v2855
  %v2857 = vmul.f32 %v2850, 1.442695
  %v2858 = vpow.pop %v2857
  %v2859 = vpack.c.bf16 %v2854, %v2852
  %v2860 = vpack.c.bf16 %v2858, %v2856
  %v2862 = vsel %vm278, %v2859, 0
  %v2865 = vsel %vm278, %v2860, 0
  %2867 = vmatprep.subr.bf16.mxu0 0
  %2868 = vmatpush1.bf16.msra.mxu0 0
  %2869 = vmatprep.subr.bf16.mxu0 0
  %2870 = vmatpush1.bf16.msra.mxu0 0
  %2871 = vmatprep.subr.bf16.mxu0 0
  %2872 = vmatpush1.bf16.msra.mxu0 0
  %2873 = vmatprep.subr.bf16.mxu0 0
  %2874 = vmatpush1.bf16.msra.mxu0 0
  %2875 = vmatprep.subr.bf16.mxu0 0
  %2876 = vmatpush1.bf16.msra.mxu0 0
  %2877 = vmatprep.subr.bf16.mxu0 0
  %2878 = vmatpush1.bf16.msra.mxu0 0
  %2879 = vmatprep.subr.bf16.mxu0 0
  %2880 = vmatpush1.bf16.msra.mxu0 1065369472
  %2881 = vmatprep.subr.bf16.mxu0 0
  %2882 = vmatpush1.bf16.msra.mxu0 1065369472
  %2883 = vmatprep.subr.bf16.mxu0 0
  %2884 = vmatpush2.bf16.msra.mxu0 0
  %2885 = vmatprep.subr.bf16.mxu0 0
  %2886 = vmatpush2.bf16.msra.mxu0 0
  %2887 = vmatprep.subr.bf16.mxu0 0
  %2888 = vmatpush2.bf16.msra.mxu0 0
  %2889 = vmatprep.subr.bf16.mxu0 0
  %2890 = vmatpush2.bf16.msra.mxu0 0
  %2891 = vmatprep.subr.bf16.mxu0 0
  %2892 = vmatpush2.bf16.msra.mxu0 0
  %2893 = vmatprep.subr.bf16.mxu0 0
  %2894 = vmatpush2.bf16.msra.mxu0 0
  %2895 = vmatprep.subr.bf16.mxu0 0
  %2896 = vmatpush2.bf16.msra.mxu0 0
  %2897 = vmatprep.subr.bf16.mxu0 0
  %2898 = vmatpush2.bf16.msra.mxu0 0
  %2899 = vmatprep.mubr.bf16.mxu0 0
  %2900 = vmatmul.mubr.bf16.gmra.mxu0 %v2862
  %v2901 = vpop.f32.mrf.mxu0
  %v2902 = vadd.f32 0.0, %v2901
  %v2903 = vpop.f32.mrf.mxu0
  %v2904 = vpop.f32.mrf.mxu0
  %v2905 = vadd.f32 0.0, %v2904
  %v2906 = vpop.f32.mrf.mxu0
  %2907 = vmatprep.mubr.bf16.mxu0 0
  %2908 = vmatmul.mubr.bf16.gmra.mxu0 %v2865
  %v2909 = vpop.f32.mrf.mxu0
  %v2910 = vadd.f32 0.0, %v2909
  %v2911 = vpop.f32.mrf.mxu0
  %v2912 = vpop.f32.mrf.mxu0
  %v2913 = vadd.f32 0.0, %v2912
  %v2914 = vpop.f32.mrf.mxu0
  %2915 = vdwg.mxu0
  %v2916 = vrcp.pop %v2902
  %v2917 = vrcp.pop %v2905
  %v2918 = vrcp.pop %v2910
  %v2919 = vrcp.pop %v2913
  %2922 = vrot.lane.b32.xlu0 %v2434, 120
  %v2923 = vpop.permute.xlu0 %2922
  %2924 = vrot.lane.b32.xlu0 %v2435, 120
  %v2925 = vpop.permute.xlu0 %2924
  %2928 = vmatprep.subr.bf16.mxu0 0
  %2929 = vmatpush1.bf16.msra.mxu0 0
  %2930 = vmatprep.subr.bf16.mxu0 0
  %2931 = vmatpush1.bf16.msra.mxu0 0
  %2932 = vmatprep.subr.bf16.mxu0 0
  %2933 = vmatpush1.bf16.msra.mxu0 0
  %2934 = vmatprep.subr.bf16.mxu0 0
  %2935 = vmatpush1.bf16.msra.mxu0 0
  %2936 = vmatprep.subr.bf16.mxu0 0
  %2937 = vmatpush1.bf16.msra.mxu0 0
  %2938 = vmatprep.subr.bf16.mxu0 0
  %2939 = vmatpush1.bf16.msra.mxu0 0
  %2940 = vmatprep.subr.bf16.mxu0 0
  %2941 = vmatpush1.bf16.msra.mxu0 %v2925
  %2942 = vmatprep.subr.bf16.mxu0 0
  %2943 = vmatpush1.bf16.msra.mxu0 %v2923
  %2944 = vmatprep.subr.bf16.mxu0 0
  %2945 = vmatpush2.bf16.msra.mxu0 0
  %2946 = vmatprep.subr.bf16.mxu0 0
  %2947 = vmatpush2.bf16.msra.mxu0 0
  %2948 = vmatprep.subr.bf16.mxu0 0
  %2949 = vmatpush2.bf16.msra.mxu0 0
  %2950 = vmatprep.subr.bf16.mxu0 0
  %2951 = vmatpush2.bf16.msra.mxu0 0
  %2952 = vmatprep.subr.bf16.mxu0 0
  %2953 = vmatpush2.bf16.msra.mxu0 0
  %2954 = vmatprep.subr.bf16.mxu0 0
  %2955 = vmatpush2.bf16.msra.mxu0 0
  %2956 = vmatprep.subr.bf16.mxu0 0
  %2957 = vmatpush2.bf16.msra.mxu0 0
  %2958 = vmatprep.subr.bf16.mxu0 0
  %2959 = vmatpush2.bf16.msra.mxu0 0
  %2960 = vmatprep.mubr.bf16.mxu0 0
  %2961 = vmatmul.mubr.bf16.gmra.mxu0 %v2862
  %v2962 = vpop.f32.mrf.mxu0
  %v2963 = vadd.f32 0.0, %v2962
  %v2964 = vpop.f32.mrf.mxu0
  %v2965 = vpop.f32.mrf.mxu0
  %v2966 = vadd.f32 0.0, %v2965
  %v2967 = vpop.f32.mrf.mxu0
  %2968 = vmatprep.mubr.bf16.mxu0 0
  %2969 = vmatmul.mubr.bf16.gmra.mxu0 %v2865
  %v2970 = vpop.f32.mrf.mxu0
  %v2971 = vadd.f32 0.0, %v2970
  %v2972 = vpop.f32.mrf.mxu0
  %v2973 = vpop.f32.mrf.mxu0
  %v2974 = vadd.f32 0.0, %v2973
  %v2975 = vpop.f32.mrf.mxu0
  %2976 = vdwg.mxu0
  %2978 = vset.pattern.permute.xlu0 0
  %2979 = vperm.xlu0 %2978, %v2916
  %v2980 = vpop.permute.xlu0 %2979
  %2983 = vset.pattern.permute.xlu0 0
  %2984 = vperm.xlu0 %2983, %v2917
  %v2985 = vpop.permute.xlu0 %2984
  %2988 = vset.pattern.permute.xlu0 0
  %2989 = vperm.xlu0 %2988, %v2918
  %v2990 = vpop.permute.xlu0 %2989
  %2993 = vset.pattern.permute.xlu0 0
  %2994 = vperm.xlu0 %2993, %v2919
  %v2995 = vpop.permute.xlu0 %2994
  %v2997 = vmul.f32 %v2963, %v2980
  %v2998 = vmul.f32 %v2966, %v2985
  %v2999 = vmul.f32 %v2971, %v2990
  %v3000 = vmul.f32 %v2974, %v2995
  %3001 = vrot.lane.b32.xlu0 %v2793, 120
  %v3002 = vpop.permute.xlu0 %3001
  %v3004 = vadd.f32 %v2997, %v3002
  %v3005 = vadd.f32 %v2998, %v3002
  %v3006 = vadd.f32 %v2999, %v3002
  %v3007 = vadd.f32 %v3000, %v3002
  %v3008 = vadd.f32 %v2795, %v3004
  %v3009 = vadd.f32 %v2796, %v3005
  %v3010 = vadd.f32 %v2797, %v3006
  %v3011 = vadd.f32 %v2798, %v3007
  %v3012 = vmul.f32 %v3008, 0.5
  %v3013 = vmul.f32 %v3009, 0.5
  %v3014 = vmul.f32 %v3010, 0.5
  %v3015 = vmul.f32 %v3011, 0.5
  %vm3016 = vcmask 64512
  %3017 = vst.msk [vmem:[%s14] sm:$0xff] %vm3016, %v3012
  %3018 = vst.msk [vmem:[%s14 + $0x8] sm:$0xff] %vm3016, %v3013
  %3019 = vst.msk [vmem:[%s14 + $0x10] sm:$0xff] %vm3016, %v3014
  %3020 = vst.msk [vmem:[%s14 + $0x18] sm:$0xff] %vm3016, %v3015
  // Predicated region
  $region58: #{tpu_custom_call.1} parent=0 // pred_check
    _
  $region59: #{tpu_custom_call.1} parent=0 // pred_check_branch
    %3022 = sbr.rel (0) target = $region61
  $region60: #{tpu_custom_call.1} parent=0 // pred_region
    _
  $region61: #{tpu_custom_call.1} parent=0 // pred_fallthru
    _
  // Predicated region
  $region62: #{tpu_custom_call.1} parent=0 // pred_check
    _
  $region63: #{tpu_custom_call.1} parent=0 // pred_check_branch
    %3024 = sbr.rel (0) target = $region65
  $region64: #{tpu_custom_call.1} parent=0 // pred_region
    _
  $region65: #{tpu_custom_call.1} parent=0 // pred_fallthru
    _

</llo_original>
